<compile_context>
chip_gen: v7x
topology: tpu7x:2x2x1
jax: 0.10.0
libtpu: 0.0.40
codegen_flags: <defaults>
</compile_context>

<pallas_src>
import math

import jax
import jax.numpy as jnp
from jax.experimental import pallas as pl
from jax.experimental.pallas import tpu as pltpu

# ----------------------- model config (small, synthetic) ---------------------
BATCH = 2
SEQ = 64
HIDDEN = 128
NUM_HEADS = 4
HEAD_DIM = HIDDEN // NUM_HEADS            # 32
NUM_KV_HEADS = 2
KV_GROUPS = NUM_HEADS // NUM_KV_HEADS     # 2
INTERMEDIATE = 256
ROPE_THETA = 10000.0
RMS_EPS = 1e-6

Q_SIZE = NUM_HEADS * HEAD_DIM             # 128
KV_SIZE = NUM_KV_HEADS * HEAD_DIM         # 64
QKV_SIZE = Q_SIZE + 2 * KV_SIZE           # 256
GU_SIZE = 2 * INTERMEDIATE                # 512

ROWS = BATCH * SEQ                        # 128  (batch folded into rows)

# column layout of the extended qkv projection: [ q | q_rot | k | k_rot | v ]
_Q0 = 0
_QR0 = Q_SIZE                             # 128
_K0 = 2 * Q_SIZE                          # 256
_KR0 = 2 * Q_SIZE + KV_SIZE               # 320
_V0 = 2 * Q_SIZE + 2 * KV_SIZE            # 384
EXT_SIZE = 2 * Q_SIZE + 3 * KV_SIZE       # 448


# --------------------------------- kernel ------------------------------------
def decoder_layer_kernel(
    x_ref,      # (ROWS, H)               f32   hidden states, batch folded
    cs_ref,     # (2, SEQ, HEAD_DIM)      f32   [cos ; sin] per-position table
    g12_ref,    # (2, H)                  f32   [input_ln ; post_attn_ln]
    wqkv_ref,   # (H, EXT_SIZE)           bf16  [q | q_rot | k | k_rot | v]
    wo_ref,     # (Q_SIZE, H)             bf16
    wgu_hbm,    # (H, GU_SIZE)            bf16  raw HBM ref (pl.ANY)
    wd_hbm,     # (INTERMEDIATE, H)       bf16  raw HBM ref (pl.ANY)
    out_ref,    # (ROWS, H)
    wgu_vmem,   # scratch VMEM (H, GU_SIZE)        bf16
    wd_vmem,    # scratch VMEM (INTERMEDIATE, H)   bf16
    dma_sem,    # scratch DMA semaphores (2,)
):
    f32 = jnp.float32
    bf16 = jnp.bfloat16

    # ---- kick off MLP weight DMAs; they hide behind the attention section ----
    wgu_cp = pltpu.make_async_copy(wgu_hbm, wgu_vmem, dma_sem.at[0])
    wd_cp = pltpu.make_async_copy(wd_hbm, wd_vmem, dma_sem.at[1])
    wgu_cp.start()
    wd_cp.start()

    x = x_ref[...].astype(f32)

    # ---- input RMSNorm -------------------------------------------------------
    var1 = jnp.mean(x * x, axis=-1, keepdims=True)
    h_norm = (x * jax.lax.rsqrt(var1 + RMS_EPS)) * g12_ref[0:1, :]

    # ---- fused QKV (+ pre-rotated q/k copies): one M=128 MXU matmul ----------
    qkv = jnp.dot(h_norm.astype(bf16), wqkv_ref[...],
                  preferred_element_type=f32)                    # (ROWS, EXT)

    # ---- rotary tables: compact (SEQ, D) -> row/head width, in-kernel --------
    cos_pos = cs_ref[0]                                          # (SEQ, D)
    sin_pos = cs_ref[1]
    cos_rows = jnp.tile(cos_pos, (BATCH, 1))                     # (ROWS, D)
    sin_rows = jnp.tile(sin_pos, (BATCH, 1))
    cos_k = jnp.tile(cos_rows, (1, NUM_KV_HEADS))                # (ROWS, KV)
    sin_k = jnp.tile(sin_rows, (1, NUM_KV_HEADS))
    cos_q = jnp.tile(cos_rows, (1, NUM_HEADS))                   # (ROWS, Q)
    sin_q = jnp.tile(sin_rows, (1, NUM_HEADS))

    # ---- RoPE, pure elementwise (rotate_half baked into wqkv columns) --------
    # K / V first so the big f32 qkv value dies as early as possible.
    k = qkv[:, _K0:_K0 + KV_SIZE]
    k_rot = qkv[:, _KR0:_KR0 + KV_SIZE]
    k_rope = (k * cos_k + k_rot * sin_k).astype(bf16)            # (ROWS, 64)
    v = qkv[:, _V0:_V0 + KV_SIZE].astype(bf16)                   # (ROWS, 64)

    q = qkv[:, _Q0:_Q0 + Q_SIZE]
    q_rot = qkv[:, _QR0:_QR0 + Q_SIZE]
    q_rope = (q * cos_q + q_rot * sin_q).astype(bf16)            # (ROWS, 128)

    # ---- causal mask generated in-kernel (no DMA) -----------------------------
    q_pos = jax.lax.broadcasted_iota(jnp.int32, (SEQ, SEQ), 0)
    k_pos = jax.lax.broadcasted_iota(jnp.int32, (SEQ, SEQ), 1)
    neg_mask = jnp.where(q_pos >= k_pos, 0.0, -1e9).astype(f32)  # (SEQ, SEQ)
    neg_mask = jnp.tile(neg_mask, (KV_GROUPS, 1))                # (G*SEQ, SEQ)

    inv_sqrt_d = 1.0 / math.sqrt(HEAD_DIM)
    nt_dims = (((1,), (1,)), ((), ()))     # contract last dims (q @ k.T)

    # ---- grouped GQA attention, split per batch element -----------------------
    # Per KV head and per batch element: the KV_GROUPS query heads of the group
    # are stacked along sublanes -> one (G*SEQ, D)@(D, SEQ) scores matmul and
    # one (G*SEQ, SEQ)@(SEQ, D) PV matmul.  No fully-masked cross-batch work.
    head_outs = [[None] * NUM_HEADS for _ in range(BATCH)]
    for g in range(NUM_KV_HEADS):
        h0 = g * KV_GROUPS
        for b in range(BATCH):
            r0 = b * SEQ
            q_stack = jnp.concatenate(
                [q_rope[r0:r0 + SEQ, (h0 + r) * HEAD_DIM:(h0 + r + 1) * HEAD_DIM]
                 for r in range(KV_GROUPS)], axis=0)             # (G*SEQ, D)
            k_gb = k_rope[r0:r0 + SEQ, g * HEAD_DIM:(g + 1) * HEAD_DIM]
            v_gb = v[r0:r0 + SEQ, g * HEAD_DIM:(g + 1) * HEAD_DIM]

            scores = jax.lax.dot_general(
                q_stack, k_gb, nt_dims,
                preferred_element_type=f32) * inv_sqrt_d         # (G*SEQ, SEQ)
            scores = scores + neg_mask
            scores = scores - jnp.max(scores, axis=-1, keepdims=True)
            probs = jnp.exp(scores)
            probs = probs * pl.reciprocal(
                jnp.sum(probs, axis=-1, keepdims=True), approx=True)

            o_stack = jnp.dot(probs.astype(bf16), v_gb,
                              preferred_element_type=f32)        # (G*SEQ, D)
            for r in range(KV_GROUPS):
                head_outs[b][h0 + r] = o_stack[r * SEQ:(r + 1) * SEQ, :]

    # ---- lane-pack head outputs -> single o_proj matmul -----------------------
    attn_packed = jnp.concatenate(
        [jnp.concatenate(head_outs[b], axis=1) for b in range(BATCH)],
        axis=0)                                                  # (ROWS, Q_SIZE)
    attn_out = jnp.dot(attn_packed.astype(bf16), wo_ref[...],
                       preferred_element_type=f32)               # (ROWS, H)

    # ---- residual + post-attention RMSNorm -----------------------------------
    h1 = x + attn_out
    var2 = jnp.mean(h1 * h1, axis=-1, keepdims=True)
    h1_norm = (h1 * jax.lax.rsqrt(var2 + RMS_EPS)) * g12_ref[1:2, :]

    # ---- MLP: silu(gate) * up -> down  (weights DMA'd during attention) -------
    wgu_cp.wait()
    gate_up = jnp.dot(h1_norm.astype(bf16), wgu_vmem[...],
                      preferred_element_type=f32)                # (ROWS, 2I)
    gate = gate_up[:, :INTERMEDIATE]
    up = gate_up[:, INTERMEDIATE:]
    act = gate * jax.nn.sigmoid(gate) * up                       # SiLU(gate)*up

    wd_cp.wait()
    mlp_out = jnp.dot(act.astype(bf16), wd_vmem[...],
                      preferred_element_type=f32)

    out_ref[...] = (h1 + mlp_out).astype(out_ref.dtype)


# ------------------------------ one-time prep ---------------------------------
def rotate_half_columns(w):
    """Weight columns such that x @ out == rotate_half(x @ w), per head."""
    n = w.shape[1] // HEAD_DIM
    half = HEAD_DIM // 2
    blocks = []
    for h in range(n):
        blk = w[:, h * HEAD_DIM:(h + 1) * HEAD_DIM]
        blocks.append(jnp.concatenate([-blk[:, half:], blk[:, :half]], axis=1))
    return jnp.concatenate(blocks, axis=1)


def prepare_kernel_inputs(cos, sin, g1, g2, wqkv, wo, wgu, wd):
    """Amortized prep (done once per model, not per token): compact rotary
    table, merged norm gains, pre-rotated q/k columns appended to the fused QKV
    weight, and all matmul weights cast to bf16."""
    # cos/sin are position-only (batch-invariant): keep one (SEQ, D) copy each.
    cs = jnp.stack([cos[0], sin[0]], axis=0).astype(jnp.float32)  # (2, S, D)
    g12 = jnp.concatenate([g1, g2], axis=0).astype(jnp.float32)   # (2, H)

    wq = wqkv[:, :Q_SIZE]
    wk = wqkv[:, Q_SIZE:Q_SIZE + KV_SIZE]
    wv = wqkv[:, Q_SIZE + KV_SIZE:]
    wqkv_ext = jnp.concatenate(
        [wq, rotate_half_columns(wq), wk, rotate_half_columns(wk), wv],
        axis=1).astype(jnp.bfloat16)                              # (H, EXT)

    return (cs, g12, wqkv_ext, wo.astype(jnp.bfloat16),
            wgu.astype(jnp.bfloat16), wd.astype(jnp.bfloat16))


# --------------------------------- wrapper -----------------------------------
@jax.jit
def llama_decoder_layer(x, cs, g12, wqkv_ext, wo, wgu, wd):
    B, S, H = x.shape
    assert B * S == ROWS and H == HIDDEN
    x2 = x.reshape(B * S, H)

    def full(shape):
        return pl.BlockSpec(shape, lambda i, _s=shape: (0,) * len(_s))

    out2 = pl.pallas_call(
        decoder_layer_kernel,
        out_shape=jax.ShapeDtypeStruct((B * S, H), x.dtype),
        grid=(1,),
        in_specs=[
            full((ROWS, HIDDEN)),                 # x
            full((2, SEQ, HEAD_DIM)),             # cos/sin table
            full((2, HIDDEN)),                    # g1 ; g2
            full((HIDDEN, EXT_SIZE)),             # wqkv (+rot)
            full((Q_SIZE, HIDDEN)),               # wo
            pl.BlockSpec(memory_space=pl.ANY),    # wgu (HBM, manual DMA)
            pl.BlockSpec(memory_space=pl.ANY),    # wd  (HBM, manual DMA)
        ],
        out_specs=full((ROWS, HIDDEN)),
        scratch_shapes=[
            pltpu.VMEM((HIDDEN, GU_SIZE), jnp.bfloat16),
            pltpu.VMEM((INTERMEDIATE, HIDDEN), jnp.bfloat16),
            pltpu.SemaphoreType.DMA((2,)),
        ],
        compiler_params=pltpu.CompilerParams(
            dimension_semantics=("arbitrary",)),
    )(x2, cs, g12, wqkv_ext, wo, wgu, wd)
    return out2.reshape(B, S, H)


# ----------------------------- pure-JAX reference ----------------------------
def reference(x, cos, sin, mask, g1, wqkv, wo, g2, wgu, wd):
    f32 = jnp.float32
    B, S, H = x.shape

    def rms(h, g):
        h = h.astype(f32)
        var = jnp.mean(h * h, axis=-1, keepdims=True)
        return g[0] * (h * jax.lax.rsqrt(var + RMS_EPS))

    def rotate_half(t):
        t1 = t[..., : HEAD_DIM // 2]
        t2 = t[..., HEAD_DIM // 2:]
        return jnp.concatenate([-t2, t1], axis=-1)

    residual = x.astype(f32)
    h = rms(x, g1)
    qkv = h @ wqkv
    q = qkv[..., :Q_SIZE].reshape(B, S, NUM_HEADS, HEAD_DIM).transpose(0, 2, 1, 3)
    k = qkv[..., Q_SIZE:Q_SIZE + KV_SIZE].reshape(
        B, S, NUM_KV_HEADS, HEAD_DIM).transpose(0, 2, 1, 3)
    v = qkv[..., Q_SIZE + KV_SIZE:].reshape(
        B, S, NUM_KV_HEADS, HEAD_DIM).transpose(0, 2, 1, 3)

    c = cos[:, None, :, :]
    s = sin[:, None, :, :]
    q = q * c + rotate_half(q) * s
    k = k * c + rotate_half(k) * s

    k = jnp.repeat(k, KV_GROUPS, axis=1)
    v = jnp.repeat(v, KV_GROUPS, axis=1)

    scores = jnp.einsum("bhqd,bhkd->bhqk", q, k) / math.sqrt(HEAD_DIM)
    scores = scores + mask
    probs = jax.nn.softmax(scores, axis=-1)
    attn = jnp.einsum("bhqk,bhkd->bhqd", probs, v)
    attn = attn.transpose(0, 2, 1, 3).reshape(B, S, Q_SIZE)
    attn = attn @ wo

    h = residual + attn
    residual = h
    hn = rms(h, g2)
    gu = hn @ wgu
    gate, up = gu[..., :INTERMEDIATE], gu[..., INTERMEDIATE:]
    mlp = (jax.nn.silu(gate) * up) @ wd
    return residual + mlp


# ----------------------------------- main ------------------------------------
if __name__ == "__main__":
    key = jax.random.PRNGKey(0)
    ks = jax.random.split(key, 8)

    x = jax.random.normal(ks[0], (BATCH, SEQ, HIDDEN), dtype=jnp.float32)

    # deterministic parameter init (synthetic, (in, out) layout)
    scale = 0.05
    g1 = jnp.ones((1, HIDDEN), dtype=jnp.float32)
    g2 = jnp.ones((1, HIDDEN), dtype=jnp.float32)
    wqkv = scale * jax.random.normal(ks[1], (HIDDEN, QKV_SIZE), dtype=jnp.float32)
    wo = scale * jax.random.normal(ks[2], (Q_SIZE, HIDDEN), dtype=jnp.float32)
    wgu = scale * jax.random.normal(ks[3], (HIDDEN, GU_SIZE), dtype=jnp.float32)
    wd = scale * jax.random.normal(ks[4], (INTERMEDIATE, HIDDEN), dtype=jnp.float32)

    # rotary position embeddings (HF LlamaRotaryEmbedding convention)
    inv_freq = 1.0 / (ROPE_THETA ** (jnp.arange(0, HEAD_DIM, 2, dtype=jnp.float32)
                                     / HEAD_DIM))
    pos = jnp.arange(SEQ, dtype=jnp.float32)
    freqs = jnp.einsum("s,d->sd", pos, inv_freq)                 # (S, D/2)
    emb = jnp.concatenate([freqs, freqs], axis=-1)               # (S, D)
    cos = jnp.broadcast_to(jnp.cos(emb), (BATCH, SEQ, HEAD_DIM))
    sin = jnp.broadcast_to(jnp.sin(emb), (BATCH, SEQ, HEAD_DIM))

    # causal additive mask (B, 1, S, S) — reference only; kernel builds its own
    causal = jnp.tril(jnp.ones((SEQ, SEQ), dtype=bool))
    mask = jnp.where(causal, 0.0, -1e9).astype(jnp.float32)
    mask = jnp.broadcast_to(mask[None, None], (BATCH, 1, SEQ, SEQ))

    # one-time prep: compact rope table, merged gains, rotated + bf16 weights
    (cs, g12, wqkv_ext, wo_b, wgu_b, wd_b) = prepare_kernel_inputs(
        cos, sin, g1, g2, wqkv, wo, wgu, wd)

    out = llama_decoder_layer(x, cs, g12, wqkv_ext, wo_b, wgu_b, wd_b)
    out = jax.block_until_ready(out)

    ref = reference(x, cos, sin, mask, g1, wqkv, wo, g2, wgu, wd)
    assert out.shape == (BATCH, SEQ, HIDDEN)
    max_abs = float(jnp.max(jnp.abs(out - ref)))
    rel_fro = float(jnp.linalg.norm(out - ref) / jnp.linalg.norm(ref))
    # bf16 matmul operands (f32 accumulation) -> relaxed tolerance vs f32 ref.
    assert jnp.allclose(out, ref, atol=5e-2, rtol=5e-2), (max_abs, rel_fro)
    assert rel_fro < 1.5e-2, rel_fro

    print("KERNEL_OK")
</pallas_src>

<mosaic_0001>
module attributes {stable_mosaic.version = 11 : i64} {
  func.func @decoder_layer_kernel(%arg0: i32, %arg1: memref<128x128xf32, #tpu.memory_space<vmem>>, %arg2: memref<2x64x32xf32, #tpu.memory_space<vmem>>, %arg3: memref<2x128xf32, #tpu.memory_space<vmem>>, %arg4: memref<128x448xbf16, #tpu.memory_space<vmem>>, %arg5: memref<128x128xbf16, #tpu.memory_space<vmem>>, %arg6: memref<128x512xbf16, #tpu.memory_space<any>>, %arg7: memref<256x128xbf16, #tpu.memory_space<any>>, %arg8: memref<128x128xf32, #tpu.memory_space<vmem>>, %arg9: memref<128x512xbf16, #tpu.memory_space<vmem>>, %arg10: memref<256x128xbf16, #tpu.memory_space<vmem>>, %arg11: memref<2x!tpu.dma_semaphore, #tpu.memory_space<semaphore_mem>>) attributes {dimension_semantics = [#tpu.dimension_semantics<arbitrary>], iteration_bounds = array<i64: 1>, scalar_prefetch = 0 : i64, scratch_operands = 3 : i64, tpu.core_type = #tpu.core_type<tc>, window_params = [{pipeline_mode = #tpu.pipeline_mode<synchronous>, transform_indices = @transform_0, window_bounds = array<i64: 128, 128>}, {pipeline_mode = #tpu.pipeline_mode<synchronous>, transform_indices = @transform_1, window_bounds = array<i64: 2, 64, 32>}, {pipeline_mode = #tpu.pipeline_mode<synchronous>, transform_indices = @transform_2, window_bounds = array<i64: 2, 128>}, {pipeline_mode = #tpu.pipeline_mode<synchronous>, transform_indices = @transform_3, window_bounds = array<i64: 128, 448>}, {pipeline_mode = #tpu.pipeline_mode<synchronous>, transform_indices = @transform_4, window_bounds = array<i64: 128, 128>}, {}, {}, {pipeline_mode = #tpu.pipeline_mode<synchronous>, transform_indices = @transform_7, window_bounds = array<i64: 128, 128>}]} {
    %c0_i32 = arith.constant 0 : i32
    %0 = tpu.memref_slice %arg11[%c0_i32] : memref<2x!tpu.dma_semaphore, #tpu.memory_space<semaphore_mem>> -> memref<1x!tpu.dma_semaphore, #tpu.memory_space<semaphore_mem>>
    %1 = tpu.memref_squeeze %0 : memref<1x!tpu.dma_semaphore, #tpu.memory_space<semaphore_mem>> -> memref<!tpu.dma_semaphore, #tpu.memory_space<semaphore_mem>>
    tpu.enqueue_dma source(%arg6 : memref<128x512xbf16, #tpu.memory_space<any>>) target(%arg9 : memref<128x512xbf16, #tpu.memory_space<vmem>>) target_semaphore(%1 : memref<!tpu.dma_semaphore, #tpu.memory_space<semaphore_mem>>)
    %c1_i32 = arith.constant 1 : i32
    %2 = tpu.memref_slice %arg11[%c1_i32] : memref<2x!tpu.dma_semaphore, #tpu.memory_space<semaphore_mem>> -> memref<1x!tpu.dma_semaphore, #tpu.memory_space<semaphore_mem>>
    %3 = tpu.memref_squeeze %2 : memref<1x!tpu.dma_semaphore, #tpu.memory_space<semaphore_mem>> -> memref<!tpu.dma_semaphore, #tpu.memory_space<semaphore_mem>>
    tpu.enqueue_dma source(%arg7 : memref<256x128xbf16, #tpu.memory_space<any>>) target(%arg10 : memref<256x128xbf16, #tpu.memory_space<vmem>>) target_semaphore(%3 : memref<!tpu.dma_semaphore, #tpu.memory_space<semaphore_mem>>)
    %c0 = arith.constant 0 : index
    %c0_0 = arith.constant 0 : index
    %4 = vector.load %arg1[%c0, %c0_0] : memref<128x128xf32, #tpu.memory_space<vmem>>, vector<128x128xf32>
    %5 = arith.mulf %4, %4 : vector<128x128xf32>
    %cst = arith.constant dense<0.000000e+00> : vector<128xf32>
    %6 = vector.multi_reduction <add>, %5, %cst [1] : vector<128x128xf32> to vector<128xf32>
    %7 = vector.shape_cast %6 : vector<128xf32> to vector<128x1xf32>
    %cst_1 = arith.constant 1.280000e+02 : f32
    %8 = vector.broadcast %cst_1 : f32 to vector<128x1xf32>
    %9 = arith.divf %7, %8 : vector<128x1xf32>
    %cst_2 = arith.constant 9.99999997E-7 : f32
    %10 = vector.broadcast %cst_2 : f32 to vector<128x1xf32>
    %11 = arith.addf %9, %10 : vector<128x1xf32>
    %12 = math.rsqrt %11 : vector<128x1xf32>
    %13 = vector.broadcast %12 : vector<128x1xf32> to vector<128x128xf32>
    %14 = arith.mulf %4, %13 : vector<128x128xf32>
    %c0_3 = arith.constant 0 : index
    %c0_4 = arith.constant 0 : index
    %15 = vector.load %arg3[%c0_3, %c0_4] : memref<2x128xf32, #tpu.memory_space<vmem>>, vector<1x128xf32>
    %16 = vector.broadcast %15 : vector<1x128xf32> to vector<128x128xf32>
    %17 = arith.mulf %14, %16 : vector<128x128xf32>
    %18 = arith.truncf %17 : vector<128x128xf32> to vector<128x128xbf16>
    %c0_5 = arith.constant 0 : index
    %c0_6 = arith.constant 0 : index
    %19 = vector.load %arg4[%c0_5, %c0_6] : memref<128x448xbf16, #tpu.memory_space<vmem>>, vector<128x448xbf16>
    %cst_7 = arith.constant dense<0.000000e+00> : vector<128x448xf32>
    %20 = tpu.matmul %18, %19, %cst_7 {dimension_numbers = #tpu.dot_dimension_numbers<[1], [0], [0], [1], [0, 0, 1, 1], [], []>} : vector<128x128xbf16>, vector<128x448xbf16>, vector<128x448xf32> -> vector<128x448xf32>
    %c0_8 = arith.constant 0 : index
    %c0_9 = arith.constant 0 : index
    %c0_10 = arith.constant 0 : index
    %21 = vector.load %arg2[%c0_8, %c0_9, %c0_10] : memref<2x64x32xf32, #tpu.memory_space<vmem>>, vector<1x64x32xf32>
    %22 = vector.shape_cast %21 : vector<1x64x32xf32> to vector<64x32xf32>
    %c1 = arith.constant 1 : index
    %c0_11 = arith.constant 0 : index
    %c0_12 = arith.constant 0 : index
    %23 = vector.load %arg2[%c1, %c0_11, %c0_12] : memref<2x64x32xf32, #tpu.memory_space<vmem>>, vector<1x64x32xf32>
    %24 = vector.shape_cast %23 : vector<1x64x32xf32> to vector<64x32xf32>
    %25 = tpu.concatenate %22, %22 in 0 : vector<64x32xf32>, vector<64x32xf32> -> vector<128x32xf32>
    %26 = tpu.concatenate %24, %24 in 0 : vector<64x32xf32>, vector<64x32xf32> -> vector<128x32xf32>
    %27 = tpu.concatenate %25, %25 in 1 : vector<128x32xf32>, vector<128x32xf32> -> vector<128x64xf32>
    %28 = tpu.concatenate %26, %26 in 1 : vector<128x32xf32>, vector<128x32xf32> -> vector<128x64xf32>
    %29 = tpu.concatenate %25, %25, %25, %25 in 1 : vector<128x32xf32>, vector<128x32xf32>, vector<128x32xf32>, vector<128x32xf32> -> vector<128x128xf32>
    %30 = tpu.concatenate %26, %26, %26, %26 in 1 : vector<128x32xf32>, vector<128x32xf32>, vector<128x32xf32>, vector<128x32xf32> -> vector<128x128xf32>
    %31 = vector.extract_strided_slice %20 {offsets = [0, 256], sizes = [128, 64], strides = [1, 1]} : vector<128x448xf32> to vector<128x64xf32>
    %32 = vector.extract_strided_slice %20 {offsets = [0, 320], sizes = [128, 64], strides = [1, 1]} : vector<128x448xf32> to vector<128x64xf32>
    %33 = arith.mulf %31, %27 : vector<128x64xf32>
    %34 = arith.mulf %32, %28 : vector<128x64xf32>
    %35 = arith.addf %33, %34 : vector<128x64xf32>
    %36 = arith.truncf %35 : vector<128x64xf32> to vector<128x64xbf16>
    %37 = vector.extract_strided_slice %20 {offsets = [0, 384], sizes = [128, 64], strides = [1, 1]} : vector<128x448xf32> to vector<128x64xf32>
    %38 = arith.truncf %37 : vector<128x64xf32> to vector<128x64xbf16>
    %39 = vector.extract_strided_slice %20 {offsets = [0, 0], sizes = [128, 128], strides = [1, 1]} : vector<128x448xf32> to vector<128x128xf32>
    %40 = vector.extract_strided_slice %20 {offsets = [0, 128], sizes = [128, 128], strides = [1, 1]} : vector<128x448xf32> to vector<128x128xf32>
    %41 = arith.mulf %39, %29 : vector<128x128xf32>
    %42 = arith.mulf %40, %30 : vector<128x128xf32>
    %43 = arith.addf %41, %42 : vector<128x128xf32>
    %44 = arith.truncf %43 : vector<128x128xf32> to vector<128x128xbf16>
    %45 = tpu.iota {dimensions = array<i32: 0>} : vector<64x64xi32>
    %46 = tpu.iota {dimensions = array<i32: 1>} : vector<64x64xi32>
    %47 = arith.cmpi sge, %45, %46 : vector<64x64xi32>
    %cst_13 = arith.constant 0.000000e+00 : f32
    %cst_14 = arith.constant -1.000000e+09 : f32
    %48 = vector.broadcast %cst_13 : f32 to vector<64x64xf32>
    %49 = vector.broadcast %cst_14 : f32 to vector<64x64xf32>
    %50 = arith.select %47, %48, %49 : vector<64x64xi1>, vector<64x64xf32>
    %51 = tpu.concatenate %50, %50 in 0 : vector<64x64xf32>, vector<64x64xf32> -> vector<128x64xf32>
    %52 = vector.extract_strided_slice %44 {offsets = [0, 0], sizes = [64, 32], strides = [1, 1]} : vector<128x128xbf16> to vector<64x32xbf16>
    %53 = vector.extract_strided_slice %44 {offsets = [0, 32], sizes = [64, 32], strides = [1, 1]} : vector<128x128xbf16> to vector<64x32xbf16>
    %54 = tpu.concatenate %52, %53 in 0 : vector<64x32xbf16>, vector<64x32xbf16> -> vector<128x32xbf16>
    %55 = vector.extract_strided_slice %36 {offsets = [0, 0], sizes = [64, 32], strides = [1, 1]} : vector<128x64xbf16> to vector<64x32xbf16>
    %56 = vector.extract_strided_slice %38 {offsets = [0, 0], sizes = [64, 32], strides = [1, 1]} : vector<128x64xbf16> to vector<64x32xbf16>
    %cst_15 = arith.constant dense<0.000000e+00> : vector<128x64xf32>
    %57 = tpu.matmul %54, %55, %cst_15 {dimension_numbers = #tpu.dot_dimension_numbers<[1], [1], [0], [0], [0, 0, 1, 0], [], []>} : vector<128x32xbf16>, vector<64x32xbf16>, vector<128x64xf32> -> vector<128x64xf32>
    %cst_16 = arith.constant 0.176776692 : f32
    %58 = vector.broadcast %cst_16 : f32 to vector<128x64xf32>
    %59 = arith.mulf %57, %58 : vector<128x64xf32>
    %60 = arith.addf %59, %51 : vector<128x64xf32>
    %cst_17 = arith.constant dense<0xFF800000> : vector<128xf32>
    %61 = vector.multi_reduction <maximumf>, %60, %cst_17 [1] : vector<128x64xf32> to vector<128xf32>
    %62 = vector.shape_cast %61 : vector<128xf32> to vector<128x1xf32>
    %63 = vector.broadcast %62 : vector<128x1xf32> to vector<128x64xf32>
    %64 = arith.subf %60, %63 : vector<128x64xf32>
    %65 = math.exp %64 : vector<128x64xf32>
    %cst_18 = arith.constant dense<0.000000e+00> : vector<128xf32>
    %66 = vector.multi_reduction <add>, %65, %cst_18 [1] : vector<128x64xf32> to vector<128xf32>
    %67 = vector.shape_cast %66 : vector<128xf32> to vector<128x1xf32>
    %68 = tpu.reciprocal %67 {approx = true} : vector<128x1xf32> -> vector<128x1xf32>
    %69 = vector.broadcast %68 : vector<128x1xf32> to vector<128x64xf32>
    %70 = arith.mulf %65, %69 : vector<128x64xf32>
    %71 = arith.truncf %70 : vector<128x64xf32> to vector<128x64xbf16>
    %cst_19 = arith.constant dense<0.000000e+00> : vector<128x32xf32>
    %72 = tpu.matmul %71, %56, %cst_19 {dimension_numbers = #tpu.dot_dimension_numbers<[1], [0], [0], [1], [0, 0, 1, 1], [], []>} : vector<128x64xbf16>, vector<64x32xbf16>, vector<128x32xf32> -> vector<128x32xf32>
    %73 = vector.extract_strided_slice %72 {offsets = [0, 0], sizes = [64, 32], strides = [1, 1]} : vector<128x32xf32> to vector<64x32xf32>
    %74 = vector.extract_strided_slice %72 {offsets = [64, 0], sizes = [64, 32], strides = [1, 1]} : vector<128x32xf32> to vector<64x32xf32>
    %75 = vector.extract_strided_slice %44 {offsets = [64, 0], sizes = [64, 32], strides = [1, 1]} : vector<128x128xbf16> to vector<64x32xbf16>
    %76 = vector.extract_strided_slice %44 {offsets = [64, 32], sizes = [64, 32], strides = [1, 1]} : vector<128x128xbf16> to vector<64x32xbf16>
    %77 = tpu.concatenate %75, %76 in 0 : vector<64x32xbf16>, vector<64x32xbf16> -> vector<128x32xbf16>
    %78 = vector.extract_strided_slice %36 {offsets = [64, 0], sizes = [64, 32], strides = [1, 1]} : vector<128x64xbf16> to vector<64x32xbf16>
    %79 = vector.extract_strided_slice %38 {offsets = [64, 0], sizes = [64, 32], strides = [1, 1]} : vector<128x64xbf16> to vector<64x32xbf16>
    %cst_20 = arith.constant dense<0.000000e+00> : vector<128x64xf32>
    %80 = tpu.matmul %77, %78, %cst_20 {dimension_numbers = #tpu.dot_dimension_numbers<[1], [1], [0], [0], [0, 0, 1, 0], [], []>} : vector<128x32xbf16>, vector<64x32xbf16>, vector<128x64xf32> -> vector<128x64xf32>
    %cst_21 = arith.constant 0.176776692 : f32
    %81 = vector.broadcast %cst_21 : f32 to vector<128x64xf32>
    %82 = arith.mulf %80, %81 : vector<128x64xf32>
    %83 = arith.addf %82, %51 : vector<128x64xf32>
    %cst_22 = arith.constant dense<0xFF800000> : vector<128xf32>
    %84 = vector.multi_reduction <maximumf>, %83, %cst_22 [1] : vector<128x64xf32> to vector<128xf32>
    %85 = vector.shape_cast %84 : vector<128xf32> to vector<128x1xf32>
    %86 = vector.broadcast %85 : vector<128x1xf32> to vector<128x64xf32>
    %87 = arith.subf %83, %86 : vector<128x64xf32>
    %88 = math.exp %87 : vector<128x64xf32>
    %cst_23 = arith.constant dense<0.000000e+00> : vector<128xf32>
    %89 = vector.multi_reduction <add>, %88, %cst_23 [1] : vector<128x64xf32> to vector<128xf32>
    %90 = vector.shape_cast %89 : vector<128xf32> to vector<128x1xf32>
    %91 = tpu.reciprocal %90 {approx = true} : vector<128x1xf32> -> vector<128x1xf32>
    %92 = vector.broadcast %91 : vector<128x1xf32> to vector<128x64xf32>
    %93 = arith.mulf %88, %92 : vector<128x64xf32>
    %94 = arith.truncf %93 : vector<128x64xf32> to vector<128x64xbf16>
    %cst_24 = arith.constant dense<0.000000e+00> : vector<128x32xf32>
    %95 = tpu.matmul %94, %79, %cst_24 {dimension_numbers = #tpu.dot_dimension_numbers<[1], [0], [0], [1], [0, 0, 1, 1], [], []>} : vector<128x64xbf16>, vector<64x32xbf16>, vector<128x32xf32> -> vector<128x32xf32>
    %96 = vector.extract_strided_slice %95 {offsets = [0, 0], sizes = [64, 32], strides = [1, 1]} : vector<128x32xf32> to vector<64x32xf32>
    %97 = vector.extract_strided_slice %95 {offsets = [64, 0], sizes = [64, 32], strides = [1, 1]} : vector<128x32xf32> to vector<64x32xf32>
    %98 = vector.extract_strided_slice %44 {offsets = [0, 64], sizes = [64, 32], strides = [1, 1]} : vector<128x128xbf16> to vector<64x32xbf16>
    %99 = vector.extract_strided_slice %44 {offsets = [0, 96], sizes = [64, 32], strides = [1, 1]} : vector<128x128xbf16> to vector<64x32xbf16>
    %100 = tpu.concatenate %98, %99 in 0 : vector<64x32xbf16>, vector<64x32xbf16> -> vector<128x32xbf16>
    %101 = vector.extract_strided_slice %36 {offsets = [0, 32], sizes = [64, 32], strides = [1, 1]} : vector<128x64xbf16> to vector<64x32xbf16>
    %102 = vector.extract_strided_slice %38 {offsets = [0, 32], sizes = [64, 32], strides = [1, 1]} : vector<128x64xbf16> to vector<64x32xbf16>
    %cst_25 = arith.constant dense<0.000000e+00> : vector<128x64xf32>
    %103 = tpu.matmul %100, %101, %cst_25 {dimension_numbers = #tpu.dot_dimension_numbers<[1], [1], [0], [0], [0, 0, 1, 0], [], []>} : vector<128x32xbf16>, vector<64x32xbf16>, vector<128x64xf32> -> vector<128x64xf32>
    %cst_26 = arith.constant 0.176776692 : f32
    %104 = vector.broadcast %cst_26 : f32 to vector<128x64xf32>
    %105 = arith.mulf %103, %104 : vector<128x64xf32>
    %106 = arith.addf %105, %51 : vector<128x64xf32>
    %cst_27 = arith.constant dense<0xFF800000> : vector<128xf32>
    %107 = vector.multi_reduction <maximumf>, %106, %cst_27 [1] : vector<128x64xf32> to vector<128xf32>
    %108 = vector.shape_cast %107 : vector<128xf32> to vector<128x1xf32>
    %109 = vector.broadcast %108 : vector<128x1xf32> to vector<128x64xf32>
    %110 = arith.subf %106, %109 : vector<128x64xf32>
    %111 = math.exp %110 : vector<128x64xf32>
    %cst_28 = arith.constant dense<0.000000e+00> : vector<128xf32>
    %112 = vector.multi_reduction <add>, %111, %cst_28 [1] : vector<128x64xf32> to vector<128xf32>
    %113 = vector.shape_cast %112 : vector<128xf32> to vector<128x1xf32>
    %114 = tpu.reciprocal %113 {approx = true} : vector<128x1xf32> -> vector<128x1xf32>
    %115 = vector.broadcast %114 : vector<128x1xf32> to vector<128x64xf32>
    %116 = arith.mulf %111, %115 : vector<128x64xf32>
    %117 = arith.truncf %116 : vector<128x64xf32> to vector<128x64xbf16>
    %cst_29 = arith.constant dense<0.000000e+00> : vector<128x32xf32>
    %118 = tpu.matmul %117, %102, %cst_29 {dimension_numbers = #tpu.dot_dimension_numbers<[1], [0], [0], [1], [0, 0, 1, 1], [], []>} : vector<128x64xbf16>, vector<64x32xbf16>, vector<128x32xf32> -> vector<128x32xf32>
    %119 = vector.extract_strided_slice %118 {offsets = [0, 0], sizes = [64, 32], strides = [1, 1]} : vector<128x32xf32> to vector<64x32xf32>
    %120 = vector.extract_strided_slice %118 {offsets = [64, 0], sizes = [64, 32], strides = [1, 1]} : vector<128x32xf32> to vector<64x32xf32>
    %121 = vector.extract_strided_slice %44 {offsets = [64, 64], sizes = [64, 32], strides = [1, 1]} : vector<128x128xbf16> to vector<64x32xbf16>
    %122 = vector.extract_strided_slice %44 {offsets = [64, 96], sizes = [64, 32], strides = [1, 1]} : vector<128x128xbf16> to vector<64x32xbf16>
    %123 = tpu.concatenate %121, %122 in 0 : vector<64x32xbf16>, vector<64x32xbf16> -> vector<128x32xbf16>
    %124 = vector.extract_strided_slice %36 {offsets = [64, 32], sizes = [64, 32], strides = [1, 1]} : vector<128x64xbf16> to vector<64x32xbf16>
    %125 = vector.extract_strided_slice %38 {offsets = [64, 32], sizes = [64, 32], strides = [1, 1]} : vector<128x64xbf16> to vector<64x32xbf16>
    %cst_30 = arith.constant dense<0.000000e+00> : vector<128x64xf32>
    %126 = tpu.matmul %123, %124, %cst_30 {dimension_numbers = #tpu.dot_dimension_numbers<[1], [1], [0], [0], [0, 0, 1, 0], [], []>} : vector<128x32xbf16>, vector<64x32xbf16>, vector<128x64xf32> -> vector<128x64xf32>
    %cst_31 = arith.constant 0.176776692 : f32
    %127 = vector.broadcast %cst_31 : f32 to vector<128x64xf32>
    %128 = arith.mulf %126, %127 : vector<128x64xf32>
    %129 = arith.addf %128, %51 : vector<128x64xf32>
    %cst_32 = arith.constant dense<0xFF800000> : vector<128xf32>
    %130 = vector.multi_reduction <maximumf>, %129, %cst_32 [1] : vector<128x64xf32> to vector<128xf32>
    %131 = vector.shape_cast %130 : vector<128xf32> to vector<128x1xf32>
    %132 = vector.broadcast %131 : vector<128x1xf32> to vector<128x64xf32>
    %133 = arith.subf %129, %132 : vector<128x64xf32>
    %134 = math.exp %133 : vector<128x64xf32>
    %cst_33 = arith.constant dense<0.000000e+00> : vector<128xf32>
    %135 = vector.multi_reduction <add>, %134, %cst_33 [1] : vector<128x64xf32> to vector<128xf32>
    %136 = vector.shape_cast %135 : vector<128xf32> to vector<128x1xf32>
    %137 = tpu.reciprocal %136 {approx = true} : vector<128x1xf32> -> vector<128x1xf32>
    %138 = vector.broadcast %137 : vector<128x1xf32> to vector<128x64xf32>
    %139 = arith.mulf %134, %138 : vector<128x64xf32>
    %140 = arith.truncf %139 : vector<128x64xf32> to vector<128x64xbf16>
    %cst_34 = arith.constant dense<0.000000e+00> : vector<128x32xf32>
    %141 = tpu.matmul %140, %125, %cst_34 {dimension_numbers = #tpu.dot_dimension_numbers<[1], [0], [0], [1], [0, 0, 1, 1], [], []>} : vector<128x64xbf16>, vector<64x32xbf16>, vector<128x32xf32> -> vector<128x32xf32>
    %142 = vector.extract_strided_slice %141 {offsets = [0, 0], sizes = [64, 32], strides = [1, 1]} : vector<128x32xf32> to vector<64x32xf32>
    %143 = vector.extract_strided_slice %141 {offsets = [64, 0], sizes = [64, 32], strides = [1, 1]} : vector<128x32xf32> to vector<64x32xf32>
    %144 = tpu.concatenate %73, %74, %119, %120 in 1 : vector<64x32xf32>, vector<64x32xf32>, vector<64x32xf32>, vector<64x32xf32> -> vector<64x128xf32>
    %145 = tpu.concatenate %96, %97, %142, %143 in 1 : vector<64x32xf32>, vector<64x32xf32>, vector<64x32xf32>, vector<64x32xf32> -> vector<64x128xf32>
    %146 = tpu.concatenate %144, %145 in 0 : vector<64x128xf32>, vector<64x128xf32> -> vector<128x128xf32>
    %147 = arith.truncf %146 : vector<128x128xf32> to vector<128x128xbf16>
    %c0_35 = arith.constant 0 : index
    %c0_36 = arith.constant 0 : index
    %148 = vector.load %arg5[%c0_35, %c0_36] : memref<128x128xbf16, #tpu.memory_space<vmem>>, vector<128x128xbf16>
    %cst_37 = arith.constant dense<0.000000e+00> : vector<128x128xf32>
    %149 = tpu.matmul %147, %148, %cst_37 {dimension_numbers = #tpu.dot_dimension_numbers<[1], [0], [0], [1], [0, 0, 1, 1], [], []>} : vector<128x128xbf16>, vector<128x128xbf16>, vector<128x128xf32> -> vector<128x128xf32>
    %150 = arith.addf %4, %149 : vector<128x128xf32>
    %151 = arith.mulf %150, %150 : vector<128x128xf32>
    %cst_38 = arith.constant dense<0.000000e+00> : vector<128xf32>
    %152 = vector.multi_reduction <add>, %151, %cst_38 [1] : vector<128x128xf32> to vector<128xf32>
    %153 = vector.shape_cast %152 : vector<128xf32> to vector<128x1xf32>
    %cst_39 = arith.constant 1.280000e+02 : f32
    %154 = vector.broadcast %cst_39 : f32 to vector<128x1xf32>
    %155 = arith.divf %153, %154 : vector<128x1xf32>
    %cst_40 = arith.constant 9.99999997E-7 : f32
    %156 = vector.broadcast %cst_40 : f32 to vector<128x1xf32>
    %157 = arith.addf %155, %156 : vector<128x1xf32>
    %158 = math.rsqrt %157 : vector<128x1xf32>
    %159 = vector.broadcast %158 : vector<128x1xf32> to vector<128x128xf32>
    %160 = arith.mulf %150, %159 : vector<128x128xf32>
    %c1_41 = arith.constant 1 : index
    %c0_42 = arith.constant 0 : index
    %161 = vector.load %arg3[%c1_41, %c0_42] : memref<2x128xf32, #tpu.memory_space<vmem>>, vector<1x128xf32>
    %162 = vector.broadcast %161 : vector<1x128xf32> to vector<128x128xf32>
    %163 = arith.mulf %160, %162 : vector<128x128xf32>
    %c0_i32_43 = arith.constant 0 : i32
    %164 = tpu.memref_slice %arg11[%c0_i32_43] : memref<2x!tpu.dma_semaphore, #tpu.memory_space<semaphore_mem>> -> memref<1x!tpu.dma_semaphore, #tpu.memory_space<semaphore_mem>>
    %165 = tpu.memref_squeeze %164 : memref<1x!tpu.dma_semaphore, #tpu.memory_space<semaphore_mem>> -> memref<!tpu.dma_semaphore, #tpu.memory_space<semaphore_mem>>
    tpu.wait_dma2 semaphore(%165 : memref<!tpu.dma_semaphore, #tpu.memory_space<semaphore_mem>>) src(%arg6 : memref<128x512xbf16, #tpu.memory_space<any>>) dst(%arg9 : memref<128x512xbf16, #tpu.memory_space<vmem>>)
    %166 = arith.truncf %163 : vector<128x128xf32> to vector<128x128xbf16>
    %c0_44 = arith.constant 0 : index
    %c0_45 = arith.constant 0 : index
    %167 = vector.load %arg9[%c0_44, %c0_45] : memref<128x512xbf16, #tpu.memory_space<vmem>>, vector<128x512xbf16>
    %cst_46 = arith.constant dense<0.000000e+00> : vector<128x512xf32>
    %168 = tpu.matmul %166, %167, %cst_46 {dimension_numbers = #tpu.dot_dimension_numbers<[1], [0], [0], [1], [0, 0, 1, 1], [], []>} : vector<128x128xbf16>, vector<128x512xbf16>, vector<128x512xf32> -> vector<128x512xf32>
    %169 = vector.extract_strided_slice %168 {offsets = [0, 0], sizes = [128, 256], strides = [1, 1]} : vector<128x512xf32> to vector<128x256xf32>
    %170 = vector.extract_strided_slice %168 {offsets = [0, 256], sizes = [128, 256], strides = [1, 1]} : vector<128x512xf32> to vector<128x256xf32>
    %171 = arith.negf %169 : vector<128x256xf32>
    %172 = math.exp %171 : vector<128x256xf32>
    %cst_47 = arith.constant 1.000000e+00 : f32
    %173 = vector.broadcast %cst_47 : f32 to vector<128x256xf32>
    %174 = arith.addf %173, %172 : vector<128x256xf32>
    %175 = arith.divf %173, %174 : vector<128x256xf32>
    %176 = arith.mulf %169, %175 : vector<128x256xf32>
    %177 = arith.mulf %176, %170 : vector<128x256xf32>
    %c1_i32_48 = arith.constant 1 : i32
    %178 = tpu.memref_slice %arg11[%c1_i32_48] : memref<2x!tpu.dma_semaphore, #tpu.memory_space<semaphore_mem>> -> memref<1x!tpu.dma_semaphore, #tpu.memory_space<semaphore_mem>>
    %179 = tpu.memref_squeeze %178 : memref<1x!tpu.dma_semaphore, #tpu.memory_space<semaphore_mem>> -> memref<!tpu.dma_semaphore, #tpu.memory_space<semaphore_mem>>
    tpu.wait_dma2 semaphore(%179 : memref<!tpu.dma_semaphore, #tpu.memory_space<semaphore_mem>>) src(%arg7 : memref<256x128xbf16, #tpu.memory_space<any>>) dst(%arg10 : memref<256x128xbf16, #tpu.memory_space<vmem>>)
    %180 = arith.truncf %177 : vector<128x256xf32> to vector<128x256xbf16>
    %c0_49 = arith.constant 0 : index
    %c0_50 = arith.constant 0 : index
    %181 = vector.load %arg10[%c0_49, %c0_50] : memref<256x128xbf16, #tpu.memory_space<vmem>>, vector<256x128xbf16>
    %cst_51 = arith.constant dense<0.000000e+00> : vector<128x128xf32>
    %182 = tpu.matmul %180, %181, %cst_51 {dimension_numbers = #tpu.dot_dimension_numbers<[1], [0], [0], [1], [0, 0, 1, 1], [], []>} : vector<128x256xbf16>, vector<256x128xbf16>, vector<128x128xf32> -> vector<128x128xf32>
    %183 = arith.addf %150, %182 : vector<128x128xf32>
    %c0_52 = arith.constant 0 : index
    %c0_53 = arith.constant 0 : index
    %184 = vector.load %arg8[%c0_52, %c0_53] : memref<128x128xf32, #tpu.memory_space<vmem>>, vector<128x128xf32>
    tpu.vector_store %arg8[%c0_52, %c0_53], %183 {strides = array<i32>} : memref<128x128xf32, #tpu.memory_space<vmem>>, vector<128x128xf32>,
    return
  }
  func.func @transform_0(%arg0: i32) -> (i32, i32) {
    %c0_i32 = arith.constant 0 : i32
    %c0_i32_0 = arith.constant 0 : i32
    %c0_i32_1 = arith.constant 0 : i32
    return %c0_i32, %c0_i32_0 : i32, i32
  }
  func.func @transform_1(%arg0: i32) -> (i32, i32, i32) {
    %c0_i32 = arith.constant 0 : i32
    %c0_i32_0 = arith.constant 0 : i32
    %c0_i32_1 = arith.constant 0 : i32
    %c0_i32_2 = arith.constant 0 : i32
    return %c0_i32, %c0_i32_0, %c0_i32_1 : i32, i32, i32
  }
  func.func @transform_2(%arg0: i32) -> (i32, i32) {
    %c0_i32 = arith.constant 0 : i32
    %c0_i32_0 = arith.constant 0 : i32
    %c0_i32_1 = arith.constant 0 : i32
    return %c0_i32, %c0_i32_0 : i32, i32
  }
  func.func @transform_3(%arg0: i32) -> (i32, i32) {
    %c0_i32 = arith.constant 0 : i32
    %c0_i32_0 = arith.constant 0 : i32
    %c0_i32_1 = arith.constant 0 : i32
    return %c0_i32, %c0_i32_0 : i32, i32
  }
  func.func @transform_4(%arg0: i32) -> (i32, i32) {
    %c0_i32 = arith.constant 0 : i32
    %c0_i32_0 = arith.constant 0 : i32
    %c0_i32_1 = arith.constant 0 : i32
    return %c0_i32, %c0_i32_0 : i32, i32
  }
  func.func @transform_7(%arg0: i32) -> (i32, i32) {
    %c0_i32 = arith.constant 0 : i32
    %c0_i32_0 = arith.constant 0 : i32
    %c0_i32_1 = arith.constant 0 : i32
    return %c0_i32, %c0_i32_0 : i32, i32
  }
}

</mosaic_0001>

<llo_original>
// kernel: llama_decoder_layer.1
$region0: #{llama_decoder_layer.1}
  #allocation0 [shape = 'u32[]', space=smem, size = 0x4, offset = 0x4, fixed_abs, tag = 'smem constant byte address 0x4 - core index']
  #allocation1 [shape = 'u32[144,128]{1,0:T(1,128)}', space=vmem, size = 0x12000, scoped, tag = 'internal scratch']
  #allocation2 [shape = 'bf16[128,512]{1,0:T(16,128)(2,1)}', space=vmem, size = 0x20000, scoped, tag = 'scratch operand']
  #allocation3 [shape = 'bf16[256,128]{1,0:T(16,128)(2,1)}', space=vmem, size = 0x10000, scoped, tag = 'scratch operand']
  #allocation4 [shape = 's32[2]{0}', space=sflag, size = 0x8, scoped, tag = 'scratch operand']
  #allocation7 [shape = 's32[]', space=sflag, size = 0x4, offset = 0, fixed_abs, tag = 'sflag constant byte address 0x0 - dummy sync flag']
  #allocation8 [shape = 's32[]', space=sflag, size = 0x4, offset = 0, fixed_abs, tag = 'sflag constant byte address 0x0 - dummy sync flag']
  %s0 = inlined_call_operand.vmem [shape: f32[128,128], index: 0, kind: input, shape index: {}]
  %s1 = inlined_call_operand.vmem [shape: f32[2,64,32], index: 1, kind: input, shape index: {}]
  %s2 = inlined_call_operand.vmem [shape: f32[2,128], index: 2, kind: input, shape index: {}]
  %s3 = inlined_call_operand.vmem [shape: bf16[128,448], index: 3, kind: input, shape index: {}]
  %s4 = inlined_call_operand.vmem [shape: bf16[128,128], index: 4, kind: input, shape index: {}]
  %s5 = inlined_call_operand.vmem [shape: bf16[128,512], index: 5, kind: input, shape index: {}]
  %s6 = inlined_call_operand.vmem [shape: bf16[256,128], index: 6, kind: input, shape index: {}]
  %s7 = inlined_call_operand.hbm [shape: f32[128,128], index: 7, kind: output, shape index: {}]
  %s8 = sld [smem:[#allocation0]]
  $region101: #{llama_decoder_layer.1} parent=0
    _
  %s10 = ssub.s32 1, %s8
  %s11 = scalar_select 0, %s10, %s8
  $region1: #{llama_decoder_layer.1} parent=0
    #allocation5 [shape = 'u8[65536]{0}', space=vmem, size = 0x10000, scoped, tag = 'output window, operand 0, single buffered']
    #allocation6 [shape = 's32[1]{0}', space=sflag, size = 0x4, scoped, tag = 'scoped memory for llama_decoder_layer.1']
    %12 = vsyncpa [#allocation6], 0
    // Predicated region
    $region2: #{llama_decoder_layer.1} parent=1 // pred_check
      _
    $region3: #{llama_decoder_layer.1} parent=1 // pred_check_branch
      %14 = sbr.rel (0) target = $region5
    $region4: #{llama_decoder_layer.1} parent=1 // pred_region
      _
    $region5: #{llama_decoder_layer.1} parent=1 // pred_fallthru
      _
    // Predicated region
    $region6: #{llama_decoder_layer.1} parent=1 // pred_check
      _
    $region7: #{llama_decoder_layer.1} parent=1 // pred_check_branch
      %16 = sbr.rel (0) target = $region9
    $region8: #{llama_decoder_layer.1} parent=1 // pred_region
      _
    $region9: #{llama_decoder_layer.1} parent=1 // pred_fallthru
      _
    // Predicated region
    $region10: #{llama_decoder_layer.1} parent=1 // pred_check
      _
    $region11: #{llama_decoder_layer.1} parent=1 // pred_check_branch
      %18 = sbr.rel (0) target = $region13
    $region12: #{llama_decoder_layer.1} parent=1 // pred_region
      _
    $region13: #{llama_decoder_layer.1} parent=1 // pred_fallthru
      _
    // Predicated region
    $region14: #{llama_decoder_layer.1} parent=1 // pred_check
      _
    $region15: #{llama_decoder_layer.1} parent=1 // pred_check_branch
      %20 = sbr.rel (0) target = $region17
    $region16: #{llama_decoder_layer.1} parent=1 // pred_region
      _
    $region17: #{llama_decoder_layer.1} parent=1 // pred_fallthru
      _
    // Predicated region
    $region18: #{llama_decoder_layer.1} parent=1 // pred_check
      _
    $region19: #{llama_decoder_layer.1} parent=1 // pred_check_branch
      %22 = sbr.rel (0) target = $region21
    $region20: #{llama_decoder_layer.1} parent=1 // pred_region
      _
    $region21: #{llama_decoder_layer.1} parent=1 // pred_fallthru
      _
    %p25 = scmp.lt.u32.totalorder 4, 8
    %p26 = pneg %p25
    // Predicated region
    $region22: #{llama_decoder_layer.1} parent=1 // pred_check
      _
    $region23: #{llama_decoder_layer.1} parent=1 // pred_check_branch
      %28 = sbr.rel (%p25) target = $region25
    $region24: #{llama_decoder_layer.1} parent=1 // pred_region
      %s169 = sand.u32 4, 7
      %p170 = scmp.eq.s32.totalorder %s169, 0
      %p171 = pneg %p170
      // Predicated region
      $region37: #{llama_decoder_layer.1} parent=24 // pred_check
        _
      $region38: #{llama_decoder_layer.1} parent=24 // pred_check_branch
        %173 = sbr.rel (%p170) target = $region40
      $region39: #{llama_decoder_layer.1} parent=24 // pred_region
        %s174 = sand.u32 4, 7
        %s175 = ssub.s32 4, %s174
        %s176 = scalar_lea.vmem %s5, %s175
        %s177 = ssub.s32 4, %s174
        %s178 = scalar_lea.vmem [#allocation2], %s177
        loop: start=0, step=1, limit=1
        $region41: #{llama_decoder_layer.1} parent=39 // loop_pre_header
          _
        $region42: #{llama_decoder_layer.1} parent=39 // loop_header
          %s180 = sphi 0, %s184
          %p181 = scmp.ge.s32.totalorder %s180, 1
          %s185 = sphi %s5, %s5
          %s186 = sphi [#allocation2], [#allocation2]
        $region43: #{llama_decoder_layer.1} parent=39 // loop_header_branch
          %183 = sbr.rel (%p181) target = $region47
        $region44: #{llama_decoder_layer.1} parent=39 // loop_body
          _
        $region45: #{llama_decoder_layer.1} parent=39 // loop_footer
          %s184 = sadd.s32 1, %s180
        $region46: #{llama_decoder_layer.1} parent=39 // loop_footer_branch
          %179 = sbr.rel target = $region42
        $region47: #{llama_decoder_layer.1} parent=39 // loop_exit
          _
        %s187 = sshllo.u32 0, %s174
        loop: start=0, step=1, limit=1
        $region48: #{llama_decoder_layer.1} parent=39 // loop_pre_header
          _
        $region49: #{llama_decoder_layer.1} parent=39 // loop_header
          %s189 = sphi 0, %s193
          %p190 = scmp.ge.s32.totalorder %s189, 1
          %s194 = sphi %s176, %s176
          %s195 = sphi %s178, %s178
        $region50: #{llama_decoder_layer.1} parent=39 // loop_header_branch
          %192 = sbr.rel (%p190) target = $region54
        $region51: #{llama_decoder_layer.1} parent=39 // loop_body
          %v196 = vld [vmem:[%s194] sm:%s187]
          %197 = vst [vmem:[%s195] sm:%s187] %v196
          %v198 = vld [vmem:[%s194 + $0x10] sm:%s187]
          %199 = vst [vmem:[%s195 + $0x4] sm:%s187] %v198
          %v200 = vld [vmem:[%s194 + $0x4] sm:%s187]
          %201 = vst [vmem:[%s195 + $0x8] sm:%s187] %v200
          %v202 = vld [vmem:[%s194 + $0x14] sm:%s187]
          %203 = vst [vmem:[%s195 + $0xc] sm:%s187] %v202
          %v204 = vld [vmem:[%s194 + $0x8] sm:%s187]
          %205 = vst [vmem:[%s195 + $0x10] sm:%s187] %v204
          %v206 = vld [vmem:[%s194 + $0x18] sm:%s187]
          %207 = vst [vmem:[%s195 + $0x14] sm:%s187] %v206
          %v208 = vld [vmem:[%s194 + $0xc] sm:%s187]
          %209 = vst [vmem:[%s195 + $0x18] sm:%s187] %v208
          %v210 = vld [vmem:[%s194 + $0x1c] sm:%s187]
          %211 = vst [vmem:[%s195 + $0x1c] sm:%s187] %v210
          %v212 = vld [vmem:[%s194 + $0x20] sm:%s187]
          %213 = vst [vmem:[%s195 + $0x20] sm:%s187] %v212
          %v214 = vld [vmem:[%s194 + $0x30] sm:%s187]
          %215 = vst [vmem:[%s195 + $0x24] sm:%s187] %v214
          %v216 = vld [vmem:[%s194 + $0x24] sm:%s187]
          %217 = vst [vmem:[%s195 + $0x28] sm:%s187] %v216
          %v218 = vld [vmem:[%s194 + $0x34] sm:%s187]
          %219 = vst [vmem:[%s195 + $0x2c] sm:%s187] %v218
          %v220 = vld [vmem:[%s194 + $0x28] sm:%s187]
          %221 = vst [vmem:[%s195 + $0x30] sm:%s187] %v220
          %v222 = vld [vmem:[%s194 + $0x38] sm:%s187]
          %223 = vst [vmem:[%s195 + $0x34] sm:%s187] %v222
          %v224 = vld [vmem:[%s194 + $0x2c] sm:%s187]
          %225 = vst [vmem:[%s195 + $0x38] sm:%s187] %v224
          %v226 = vld [vmem:[%s194 + $0x3c] sm:%s187]
          %227 = vst [vmem:[%s195 + $0x3c] sm:%s187] %v226
          %v228 = vld [vmem:[%s194 + $0x40] sm:%s187]
          %229 = vst [vmem:[%s195 + $0x40] sm:%s187] %v228
          %v230 = vld [vmem:[%s194 + $0x50] sm:%s187]
          %231 = vst [vmem:[%s195 + $0x44] sm:%s187] %v230
          %v232 = vld [vmem:[%s194 + $0x44] sm:%s187]
          %233 = vst [vmem:[%s195 + $0x48] sm:%s187] %v232
          %v234 = vld [vmem:[%s194 + $0x54] sm:%s187]
          %235 = vst [vmem:[%s195 + $0x4c] sm:%s187] %v234
          %v236 = vld [vmem:[%s194 + $0x48] sm:%s187]
          %237 = vst [vmem:[%s195 + $0x50] sm:%s187] %v236
          %v238 = vld [vmem:[%s194 + $0x58] sm:%s187]
          %239 = vst [vmem:[%s195 + $0x54] sm:%s187] %v238
          %v240 = vld [vmem:[%s194 + $0x4c] sm:%s187]
          %241 = vst [vmem:[%s195 + $0x58] sm:%s187] %v240
          %v242 = vld [vmem:[%s194 + $0x5c] sm:%s187]
          %243 = vst [vmem:[%s195 + $0x5c] sm:%s187] %v242
          %v244 = vld [vmem:[%s194 + $0x60] sm:%s187]
          %245 = vst [vmem:[%s195 + $0x60] sm:%s187] %v244
          %v246 = vld [vmem:[%s194 + $0x70] sm:%s187]
          %247 = vst [vmem:[%s195 + $0x64] sm:%s187] %v246
          %v248 = vld [vmem:[%s194 + $0x64] sm:%s187]
          %249 = vst [vmem:[%s195 + $0x68] sm:%s187] %v248
          %v250 = vld [vmem:[%s194 + $0x74] sm:%s187]
          %251 = vst [vmem:[%s195 + $0x6c] sm:%s187] %v250
          %v252 = vld [vmem:[%s194 + $0x68] sm:%s187]
          %253 = vst [vmem:[%s195 + $0x70] sm:%s187] %v252
          %v254 = vld [vmem:[%s194 + $0x78] sm:%s187]
          %255 = vst [vmem:[%s195 + $0x74] sm:%s187] %v254
          %v256 = vld [vmem:[%s194 + $0x6c] sm:%s187]
          %257 = vst [vmem:[%s195 + $0x78] sm:%s187] %v256
          %v258 = vld [vmem:[%s194 + $0x7c] sm:%s187]
          %259 = vst [vmem:[%s195 + $0x7c] sm:%s187] %v258
          %v260 = vld [vmem:[%s194 + $0x80] sm:%s187]
          %261 = vst [vmem:[%s195 + $0x80] sm:%s187] %v260
          %v262 = vld [vmem:[%s194 + $0x90] sm:%s187]
          %263 = vst [vmem:[%s195 + $0x84] sm:%s187] %v262
          %v264 = vld [vmem:[%s194 + $0x84] sm:%s187]
          %265 = vst [vmem:[%s195 + $0x88] sm:%s187] %v264
          %v266 = vld [vmem:[%s194 + $0x94] sm:%s187]
          %267 = vst [vmem:[%s195 + $0x8c] sm:%s187] %v266
          %v268 = vld [vmem:[%s194 + $0x88] sm:%s187]
          %269 = vst [vmem:[%s195 + $0x90] sm:%s187] %v268
          %v270 = vld [vmem:[%s194 + $0x98] sm:%s187]
          %271 = vst [vmem:[%s195 + $0x94] sm:%s187] %v270
          %v272 = vld [vmem:[%s194 + $0x8c] sm:%s187]
          %273 = vst [vmem:[%s195 + $0x98] sm:%s187] %v272
          %v274 = vld [vmem:[%s194 + $0x9c] sm:%s187]
          %275 = vst [vmem:[%s195 + $0x9c] sm:%s187] %v274
          %v276 = vld [vmem:[%s194 + $0xa0] sm:%s187]
          %277 = vst [vmem:[%s195 + $0xa0] sm:%s187] %v276
          %v278 = vld [vmem:[%s194 + $0xb0] sm:%s187]
          %279 = vst [vmem:[%s195 + $0xa4] sm:%s187] %v278
          %v280 = vld [vmem:[%s194 + $0xa4] sm:%s187]
          %281 = vst [vmem:[%s195 + $0xa8] sm:%s187] %v280
          %v282 = vld [vmem:[%s194 + $0xb4] sm:%s187]
          %283 = vst [vmem:[%s195 + $0xac] sm:%s187] %v282
          %v284 = vld [vmem:[%s194 + $0xa8] sm:%s187]
          %285 = vst [vmem:[%s195 + $0xb0] sm:%s187] %v284
          %v286 = vld [vmem:[%s194 + $0xb8] sm:%s187]
          %287 = vst [vmem:[%s195 + $0xb4] sm:%s187] %v286
          %v288 = vld [vmem:[%s194 + $0xac] sm:%s187]
          %289 = vst [vmem:[%s195 + $0xb8] sm:%s187] %v288
          %v290 = vld [vmem:[%s194 + $0xbc] sm:%s187]
          %291 = vst [vmem:[%s195 + $0xbc] sm:%s187] %v290
          %v292 = vld [vmem:[%s194 + $0xc0] sm:%s187]
          %293 = vst [vmem:[%s195 + $0xc0] sm:%s187] %v292
          %v294 = vld [vmem:[%s194 + $0xd0] sm:%s187]
          %295 = vst [vmem:[%s195 + $0xc4] sm:%s187] %v294
          %v296 = vld [vmem:[%s194 + $0xc4] sm:%s187]
          %297 = vst [vmem:[%s195 + $0xc8] sm:%s187] %v296
          %v298 = vld [vmem:[%s194 + $0xd4] sm:%s187]
          %299 = vst [vmem:[%s195 + $0xcc] sm:%s187] %v298
          %v300 = vld [vmem:[%s194 + $0xc8] sm:%s187]
          %301 = vst [vmem:[%s195 + $0xd0] sm:%s187] %v300
          %v302 = vld [vmem:[%s194 + $0xd8] sm:%s187]
          %303 = vst [vmem:[%s195 + $0xd4] sm:%s187] %v302
          %v304 = vld [vmem:[%s194 + $0xcc] sm:%s187]
          %305 = vst [vmem:[%s195 + $0xd8] sm:%s187] %v304
          %v306 = vld [vmem:[%s194 + $0xdc] sm:%s187]
          %307 = vst [vmem:[%s195 + $0xdc] sm:%s187] %v306
          %v308 = vld [vmem:[%s194 + $0xe0] sm:%s187]
          %309 = vst [vmem:[%s195 + $0xe0] sm:%s187] %v308
          %v310 = vld [vmem:[%s194 + $0xf0] sm:%s187]
          %311 = vst [vmem:[%s195 + $0xe4] sm:%s187] %v310
          %v312 = vld [vmem:[%s194 + $0xe4] sm:%s187]
          %313 = vst [vmem:[%s195 + $0xe8] sm:%s187] %v312
          %v314 = vld [vmem:[%s194 + $0xf4] sm:%s187]
          %315 = vst [vmem:[%s195 + $0xec] sm:%s187] %v314
          %v316 = vld [vmem:[%s194 + $0xe8] sm:%s187]
          %317 = vst [vmem:[%s195 + $0xf0] sm:%s187] %v316
          %v318 = vld [vmem:[%s194 + $0xf8] sm:%s187]
          %319 = vst [vmem:[%s195 + $0xf4] sm:%s187] %v318
          %v320 = vld [vmem:[%s194 + $0xec] sm:%s187]
          %321 = vst [vmem:[%s195 + $0xf8] sm:%s187] %v320
          %v322 = vld [vmem:[%s194 + $0xfc] sm:%s187]
          %323 = vst [vmem:[%s195 + $0xfc] sm:%s187] %v322
        $region52: #{llama_decoder_layer.1} parent=39 // loop_footer
          %s193 = sadd.s32 1, %s189
        $region53: #{llama_decoder_layer.1} parent=39 // loop_footer_branch
          %188 = sbr.rel target = $region49
        $region54: #{llama_decoder_layer.1} parent=39 // loop_exit
          _
      $region40: #{llama_decoder_layer.1} parent=24 // pred_fallthru
        _
    $region25: #{llama_decoder_layer.1} parent=1 // pred_fallthru
      _
    // Predicated region
    $region26: #{llama_decoder_layer.1} parent=1 // pred_check
      %p29 = pneg %p25
    $region27: #{llama_decoder_layer.1} parent=1 // pred_check_branch
      %31 = sbr.rel (%p29) target = $region29
    $region28: #{llama_decoder_layer.1} parent=1 // pred_region
      %s32 = sshllo.u32 0, 4
      loop: start=0, step=1, limit=1
      $region30: #{llama_decoder_layer.1} parent=28 // loop_pre_header
        _
      $region31: #{llama_decoder_layer.1} parent=28 // loop_header
        %s34 = sphi 0, %s38
        %p35 = scmp.ge.s32.totalorder %s34, 1
        %s39 = sphi %s5, %s5
        %s40 = sphi [#allocation2], [#allocation2]
      $region32: #{llama_decoder_layer.1} parent=28 // loop_header_branch
        %37 = sbr.rel (%p35) target = $region36
      $region33: #{llama_decoder_layer.1} parent=28 // loop_body
        %v41 = vld [vmem:[%s39] sm:%s32]
        %42 = vst [vmem:[%s40] sm:%s32] %v41
        %v43 = vld [vmem:[%s39 + $0x10] sm:%s32]
        %44 = vst [vmem:[%s40 + $0x4] sm:%s32] %v43
        %v45 = vld [vmem:[%s39 + $0x4] sm:%s32]
        %46 = vst [vmem:[%s40 + $0x8] sm:%s32] %v45
        %v47 = vld [vmem:[%s39 + $0x14] sm:%s32]
        %48 = vst [vmem:[%s40 + $0xc] sm:%s32] %v47
        %v49 = vld [vmem:[%s39 + $0x8] sm:%s32]
        %50 = vst [vmem:[%s40 + $0x10] sm:%s32] %v49
        %v51 = vld [vmem:[%s39 + $0x18] sm:%s32]
        %52 = vst [vmem:[%s40 + $0x14] sm:%s32] %v51
        %v53 = vld [vmem:[%s39 + $0xc] sm:%s32]
        %54 = vst [vmem:[%s40 + $0x18] sm:%s32] %v53
        %v55 = vld [vmem:[%s39 + $0x1c] sm:%s32]
        %56 = vst [vmem:[%s40 + $0x1c] sm:%s32] %v55
        %v57 = vld [vmem:[%s39 + $0x20] sm:%s32]
        %58 = vst [vmem:[%s40 + $0x20] sm:%s32] %v57
        %v59 = vld [vmem:[%s39 + $0x30] sm:%s32]
        %60 = vst [vmem:[%s40 + $0x24] sm:%s32] %v59
        %v61 = vld [vmem:[%s39 + $0x24] sm:%s32]
        %62 = vst [vmem:[%s40 + $0x28] sm:%s32] %v61
        %v63 = vld [vmem:[%s39 + $0x34] sm:%s32]
        %64 = vst [vmem:[%s40 + $0x2c] sm:%s32] %v63
        %v65 = vld [vmem:[%s39 + $0x28] sm:%s32]
        %66 = vst [vmem:[%s40 + $0x30] sm:%s32] %v65
        %v67 = vld [vmem:[%s39 + $0x38] sm:%s32]
        %68 = vst [vmem:[%s40 + $0x34] sm:%s32] %v67
        %v69 = vld [vmem:[%s39 + $0x2c] sm:%s32]
        %70 = vst [vmem:[%s40 + $0x38] sm:%s32] %v69
        %v71 = vld [vmem:[%s39 + $0x3c] sm:%s32]
        %72 = vst [vmem:[%s40 + $0x3c] sm:%s32] %v71
        %v73 = vld [vmem:[%s39 + $0x40] sm:%s32]
        %74 = vst [vmem:[%s40 + $0x40] sm:%s32] %v73
        %v75 = vld [vmem:[%s39 + $0x50] sm:%s32]
        %76 = vst [vmem:[%s40 + $0x44] sm:%s32] %v75
        %v77 = vld [vmem:[%s39 + $0x44] sm:%s32]
        %78 = vst [vmem:[%s40 + $0x48] sm:%s32] %v77
        %v79 = vld [vmem:[%s39 + $0x54] sm:%s32]
        %80 = vst [vmem:[%s40 + $0x4c] sm:%s32] %v79
        %v81 = vld [vmem:[%s39 + $0x48] sm:%s32]
        %82 = vst [vmem:[%s40 + $0x50] sm:%s32] %v81
        %v83 = vld [vmem:[%s39 + $0x58] sm:%s32]
        %84 = vst [vmem:[%s40 + $0x54] sm:%s32] %v83
        %v85 = vld [vmem:[%s39 + $0x4c] sm:%s32]
        %86 = vst [vmem:[%s40 + $0x58] sm:%s32] %v85
        %v87 = vld [vmem:[%s39 + $0x5c] sm:%s32]
        %88 = vst [vmem:[%s40 + $0x5c] sm:%s32] %v87
        %v89 = vld [vmem:[%s39 + $0x60] sm:%s32]
        %90 = vst [vmem:[%s40 + $0x60] sm:%s32] %v89
        %v91 = vld [vmem:[%s39 + $0x70] sm:%s32]
        %92 = vst [vmem:[%s40 + $0x64] sm:%s32] %v91
        %v93 = vld [vmem:[%s39 + $0x64] sm:%s32]
        %94 = vst [vmem:[%s40 + $0x68] sm:%s32] %v93
        %v95 = vld [vmem:[%s39 + $0x74] sm:%s32]
        %96 = vst [vmem:[%s40 + $0x6c] sm:%s32] %v95
        %v97 = vld [vmem:[%s39 + $0x68] sm:%s32]
        %98 = vst [vmem:[%s40 + $0x70] sm:%s32] %v97
        %v99 = vld [vmem:[%s39 + $0x78] sm:%s32]
        %100 = vst [vmem:[%s40 + $0x74] sm:%s32] %v99
        %v101 = vld [vmem:[%s39 + $0x6c] sm:%s32]
        %102 = vst [vmem:[%s40 + $0x78] sm:%s32] %v101
        %v103 = vld [vmem:[%s39 + $0x7c] sm:%s32]
        %104 = vst [vmem:[%s40 + $0x7c] sm:%s32] %v103
        %v105 = vld [vmem:[%s39 + $0x80] sm:%s32]
        %106 = vst [vmem:[%s40 + $0x80] sm:%s32] %v105
        %v107 = vld [vmem:[%s39 + $0x90] sm:%s32]
        %108 = vst [vmem:[%s40 + $0x84] sm:%s32] %v107
        %v109 = vld [vmem:[%s39 + $0x84] sm:%s32]
        %110 = vst [vmem:[%s40 + $0x88] sm:%s32] %v109
        %v111 = vld [vmem:[%s39 + $0x94] sm:%s32]
        %112 = vst [vmem:[%s40 + $0x8c] sm:%s32] %v111
        %v113 = vld [vmem:[%s39 + $0x88] sm:%s32]
        %114 = vst [vmem:[%s40 + $0x90] sm:%s32] %v113
        %v115 = vld [vmem:[%s39 + $0x98] sm:%s32]
        %116 = vst [vmem:[%s40 + $0x94] sm:%s32] %v115
        %v117 = vld [vmem:[%s39 + $0x8c] sm:%s32]
        %118 = vst [vmem:[%s40 + $0x98] sm:%s32] %v117
        %v119 = vld [vmem:[%s39 + $0x9c] sm:%s32]
        %120 = vst [vmem:[%s40 + $0x9c] sm:%s32] %v119
        %v121 = vld [vmem:[%s39 + $0xa0] sm:%s32]
        %122 = vst [vmem:[%s40 + $0xa0] sm:%s32] %v121
        %v123 = vld [vmem:[%s39 + $0xb0] sm:%s32]
        %124 = vst [vmem:[%s40 + $0xa4] sm:%s32] %v123
        %v125 = vld [vmem:[%s39 + $0xa4] sm:%s32]
        %126 = vst [vmem:[%s40 + $0xa8] sm:%s32] %v125
        %v127 = vld [vmem:[%s39 + $0xb4] sm:%s32]
        %128 = vst [vmem:[%s40 + $0xac] sm:%s32] %v127
        %v129 = vld [vmem:[%s39 + $0xa8] sm:%s32]
        %130 = vst [vmem:[%s40 + $0xb0] sm:%s32] %v129
        %v131 = vld [vmem:[%s39 + $0xb8] sm:%s32]
        %132 = vst [vmem:[%s40 + $0xb4] sm:%s32] %v131
        %v133 = vld [vmem:[%s39 + $0xac] sm:%s32]
        %134 = vst [vmem:[%s40 + $0xb8] sm:%s32] %v133
        %v135 = vld [vmem:[%s39 + $0xbc] sm:%s32]
        %136 = vst [vmem:[%s40 + $0xbc] sm:%s32] %v135
        %v137 = vld [vmem:[%s39 + $0xc0] sm:%s32]
        %138 = vst [vmem:[%s40 + $0xc0] sm:%s32] %v137
        %v139 = vld [vmem:[%s39 + $0xd0] sm:%s32]
        %140 = vst [vmem:[%s40 + $0xc4] sm:%s32] %v139
        %v141 = vld [vmem:[%s39 + $0xc4] sm:%s32]
        %142 = vst [vmem:[%s40 + $0xc8] sm:%s32] %v141
        %v143 = vld [vmem:[%s39 + $0xd4] sm:%s32]
        %144 = vst [vmem:[%s40 + $0xcc] sm:%s32] %v143
        %v145 = vld [vmem:[%s39 + $0xc8] sm:%s32]
        %146 = vst [vmem:[%s40 + $0xd0] sm:%s32] %v145
        %v147 = vld [vmem:[%s39 + $0xd8] sm:%s32]
        %148 = vst [vmem:[%s40 + $0xd4] sm:%s32] %v147
        %v149 = vld [vmem:[%s39 + $0xcc] sm:%s32]
        %150 = vst [vmem:[%s40 + $0xd8] sm:%s32] %v149
        %v151 = vld [vmem:[%s39 + $0xdc] sm:%s32]
        %152 = vst [vmem:[%s40 + $0xdc] sm:%s32] %v151
        %v153 = vld [vmem:[%s39 + $0xe0] sm:%s32]
        %154 = vst [vmem:[%s40 + $0xe0] sm:%s32] %v153
        %v155 = vld [vmem:[%s39 + $0xf0] sm:%s32]
        %156 = vst [vmem:[%s40 + $0xe4] sm:%s32] %v155
        %v157 = vld [vmem:[%s39 + $0xe4] sm:%s32]
        %158 = vst [vmem:[%s40 + $0xe8] sm:%s32] %v157
        %v159 = vld [vmem:[%s39 + $0xf4] sm:%s32]
        %160 = vst [vmem:[%s40 + $0xec] sm:%s32] %v159
        %v161 = vld [vmem:[%s39 + $0xe8] sm:%s32]
        %162 = vst [vmem:[%s40 + $0xf0] sm:%s32] %v161
        %v163 = vld [vmem:[%s39 + $0xf8] sm:%s32]
        %164 = vst [vmem:[%s40 + $0xf4] sm:%s32] %v163
        %v165 = vld [vmem:[%s39 + $0xec] sm:%s32]
        %166 = vst [vmem:[%s40 + $0xf8] sm:%s32] %v165
        %v167 = vld [vmem:[%s39 + $0xfc] sm:%s32]
        %168 = vst [vmem:[%s40 + $0xfc] sm:%s32] %v167
      $region34: #{llama_decoder_layer.1} parent=28 // loop_footer
        %s38 = sadd.s32 1, %s34
      $region35: #{llama_decoder_layer.1} parent=28 // loop_footer_branch
        %33 = sbr.rel target = $region31
      $region36: #{llama_decoder_layer.1} parent=28 // loop_exit
        _
    $region29: #{llama_decoder_layer.1} parent=1 // pred_fallthru
      _
    // Predicated region
    $region55: #{llama_decoder_layer.1} parent=1 // pred_check
      _
    $region56: #{llama_decoder_layer.1} parent=1 // pred_check_branch
      %326 = sbr.rel (0) target = $region58
    $region57: #{llama_decoder_layer.1} parent=1 // pred_region
      %327 = vsyncadd [#allocation4], 4096
    $region58: #{llama_decoder_layer.1} parent=1 // pred_fallthru
      _
    %s328 = scalar_lea.sflag [#allocation4], 1
    %p330 = scmp.lt.u32.totalorder 128, 8
    %p331 = pneg %p330
    // Predicated region
    $region59: #{llama_decoder_layer.1} parent=1 // pred_check
      _
    $region60: #{llama_decoder_layer.1} parent=1 // pred_check_branch
      %333 = sbr.rel (%p330) target = $region62
    $region61: #{llama_decoder_layer.1} parent=1 // pred_region
      %s348 = sand.u32 128, 7
      %p349 = scmp.eq.s32.totalorder %s348, 0
      // Predicated region
      $region74: #{llama_decoder_layer.1} parent=61 // pred_check
        %p350 = pneg %p349
      $region75: #{llama_decoder_layer.1} parent=61 // pred_check_branch
        %352 = sbr.rel (%p350) target = $region77
      $region76: #{llama_decoder_layer.1} parent=61 // pred_region
        loop: start=0, step=1, limit=1
        $region78: #{llama_decoder_layer.1} parent=76 // loop_pre_header
          _
        $region79: #{llama_decoder_layer.1} parent=76 // loop_header
          %s354 = sphi 0, %s358
          %p355 = scmp.ge.s32.totalorder %s354, 1
          %s359 = sphi %s6, %s6
          %s360 = sphi [#allocation3], [#allocation3]
        $region80: #{llama_decoder_layer.1} parent=76 // loop_header_branch
          %357 = sbr.rel (%p355) target = $region84
        $region81: #{llama_decoder_layer.1} parent=76 // loop_body
          %v361 = vld [vmem:[%s359] sm:$0xff]
          %362 = vst [vmem:[%s360] sm:$0xff] %v361
          %v363 = vld [vmem:[%s359 + $0x8] sm:$0xff]
          %364 = vst [vmem:[%s360 + $0x8] sm:$0xff] %v363
          %v365 = vld [vmem:[%s359 + $0x10] sm:$0xff]
          %366 = vst [vmem:[%s360 + $0x10] sm:$0xff] %v365
          %v367 = vld [vmem:[%s359 + $0x18] sm:$0xff]
          %368 = vst [vmem:[%s360 + $0x18] sm:$0xff] %v367
          %v369 = vld [vmem:[%s359 + $0x20] sm:$0xff]
          %370 = vst [vmem:[%s360 + $0x20] sm:$0xff] %v369
          %v371 = vld [vmem:[%s359 + $0x28] sm:$0xff]
          %372 = vst [vmem:[%s360 + $0x28] sm:$0xff] %v371
          %v373 = vld [vmem:[%s359 + $0x30] sm:$0xff]
          %374 = vst [vmem:[%s360 + $0x30] sm:$0xff] %v373
          %v375 = vld [vmem:[%s359 + $0x38] sm:$0xff]
          %376 = vst [vmem:[%s360 + $0x38] sm:$0xff] %v375
          %v377 = vld [vmem:[%s359 + $0x40] sm:$0xff]
          %378 = vst [vmem:[%s360 + $0x40] sm:$0xff] %v377
          %v379 = vld [vmem:[%s359 + $0x48] sm:$0xff]
          %380 = vst [vmem:[%s360 + $0x48] sm:$0xff] %v379
          %v381 = vld [vmem:[%s359 + $0x50] sm:$0xff]
          %382 = vst [vmem:[%s360 + $0x50] sm:$0xff] %v381
          %v383 = vld [vmem:[%s359 + $0x58] sm:$0xff]
          %384 = vst [vmem:[%s360 + $0x58] sm:$0xff] %v383
          %v385 = vld [vmem:[%s359 + $0x60] sm:$0xff]
          %386 = vst [vmem:[%s360 + $0x60] sm:$0xff] %v385
          %v387 = vld [vmem:[%s359 + $0x68] sm:$0xff]
          %388 = vst [vmem:[%s360 + $0x68] sm:$0xff] %v387
          %v389 = vld [vmem:[%s359 + $0x70] sm:$0xff]
          %390 = vst [vmem:[%s360 + $0x70] sm:$0xff] %v389
          %v391 = vld [vmem:[%s359 + $0x78] sm:$0xff]
          %392 = vst [vmem:[%s360 + $0x78] sm:$0xff] %v391
        $region82: #{llama_decoder_layer.1} parent=76 // loop_footer
          %s358 = sadd.s32 1, %s354
        $region83: #{llama_decoder_layer.1} parent=76 // loop_footer_branch
          %353 = sbr.rel target = $region79
        $region84: #{llama_decoder_layer.1} parent=76 // loop_exit
          _
      $region77: #{llama_decoder_layer.1} parent=61 // pred_fallthru
        _
      %p393 = pneg %p349
      // Predicated region
      $region85: #{llama_decoder_layer.1} parent=61 // pred_check
        _
      $region86: #{llama_decoder_layer.1} parent=61 // pred_check_branch
        %395 = sbr.rel (%p349) target = $region88
      $region87: #{llama_decoder_layer.1} parent=61 // pred_region
        %s396 = sand.u32 128, 7
      $region88: #{llama_decoder_layer.1} parent=61 // pred_fallthru
        _
    $region62: #{llama_decoder_layer.1} parent=1 // pred_fallthru
      _
    // Predicated region
    $region63: #{llama_decoder_layer.1} parent=1 // pred_check
      %p334 = pneg %p330
    $region64: #{llama_decoder_layer.1} parent=1 // pred_check_branch
      %336 = sbr.rel (%p334) target = $region66
    $region65: #{llama_decoder_layer.1} parent=1 // pred_region
      %s337 = sshllo.u32 0, 128
      loop: start=0, step=1, limit=1
      $region67: #{llama_decoder_layer.1} parent=65 // loop_pre_header
        _
      $region68: #{llama_decoder_layer.1} parent=65 // loop_header
        %s339 = sphi 0, %s343
        %p340 = scmp.ge.s32.totalorder %s339, 1
        %s344 = sphi %s6, %s6
        %s345 = sphi [#allocation3], [#allocation3]
      $region69: #{llama_decoder_layer.1} parent=65 // loop_header_branch
        %342 = sbr.rel (%p340) target = $region73
      $region70: #{llama_decoder_layer.1} parent=65 // loop_body
        %v346 = vld [vmem:[%s344] sm:%s337]
        %347 = vst [vmem:[%s345] sm:%s337] %v346
      $region71: #{llama_decoder_layer.1} parent=65 // loop_footer
        %s343 = sadd.s32 1, %s339
      $region72: #{llama_decoder_layer.1} parent=65 // loop_footer_branch
        %338 = sbr.rel target = $region68
      $region73: #{llama_decoder_layer.1} parent=65 // loop_exit
        _
    $region66: #{llama_decoder_layer.1} parent=1 // pred_fallthru
      _
    // Predicated region
    $region89: #{llama_decoder_layer.1} parent=1 // pred_check
      _
    $region90: #{llama_decoder_layer.1} parent=1 // pred_check_branch
      %399 = sbr.rel (0) target = $region92
    $region91: #{llama_decoder_layer.1} parent=1 // pred_region
      %400 = vsyncadd %s328, 2048
    $region92: #{llama_decoder_layer.1} parent=1 // pred_fallthru
      _
    %v401 = vld [vmem:[%s0] sm:$0xff]
    %v402 = vld [vmem:[%s0 + $0x8] sm:$0xff]
    %v403 = vld [vmem:[%s0 + $0x10] sm:$0xff]
    %v404 = vld [vmem:[%s0 + $0x18] sm:$0xff]
    %v405 = vld [vmem:[%s0 + $0x20] sm:$0xff]
    %v406 = vld [vmem:[%s0 + $0x28] sm:$0xff]
    %v407 = vld [vmem:[%s0 + $0x30] sm:$0xff]
    %v408 = vld [vmem:[%s0 + $0x38] sm:$0xff]
    %v409 = vld [vmem:[%s0 + $0x40] sm:$0xff]
    %v410 = vld [vmem:[%s0 + $0x48] sm:$0xff]
    %v411 = vld [vmem:[%s0 + $0x50] sm:$0xff]
    %v412 = vld [vmem:[%s0 + $0x58] sm:$0xff]
    %v413 = vld [vmem:[%s0 + $0x60] sm:$0xff]
    %v414 = vld [vmem:[%s0 + $0x68] sm:$0xff]
    %v415 = vld [vmem:[%s0 + $0x70] sm:$0xff]
    %v416 = vld [vmem:[%s0 + $0x78] sm:$0xff]
    %v417 = vmul.f32 %v401, %v401
    %v418 = vmul.f32 %v402, %v402
    %v419 = vmul.f32 %v403, %v403
    %v420 = vmul.f32 %v404, %v404
    %v421 = vmul.f32 %v405, %v405
    %v422 = vmul.f32 %v406, %v406
    %v423 = vmul.f32 %v407, %v407
    %v424 = vmul.f32 %v408, %v408
    %v425 = vmul.f32 %v409, %v409
    %v426 = vmul.f32 %v410, %v410
    %v427 = vmul.f32 %v411, %v411
    %v428 = vmul.f32 %v412, %v412
    %v429 = vmul.f32 %v413, %v413
    %v430 = vmul.f32 %v414, %v414
    %v431 = vmul.f32 %v415, %v415
    %v432 = vmul.f32 %v416, %v416
    %433 = vadd.xlane.f32.xlu0 %v417
    %v434 = vpop.xlane.xlu0 %433
    %435 = vadd.xlane.f32.xlu0 %v418
    %v436 = vpop.xlane.xlu0 %435
    %437 = vadd.xlane.f32.xlu0 %v419
    %v438 = vpop.xlane.xlu0 %437
    %439 = vadd.xlane.f32.xlu0 %v420
    %v440 = vpop.xlane.xlu0 %439
    %441 = vadd.xlane.f32.xlu0 %v421
    %v442 = vpop.xlane.xlu0 %441
    %443 = vadd.xlane.f32.xlu0 %v422
    %v444 = vpop.xlane.xlu0 %443
    %445 = vadd.xlane.f32.xlu0 %v423
    %v446 = vpop.xlane.xlu0 %445
    %447 = vadd.xlane.f32.xlu0 %v424
    %v448 = vpop.xlane.xlu0 %447
    %449 = vadd.xlane.f32.xlu0 %v425
    %v450 = vpop.xlane.xlu0 %449
    %451 = vadd.xlane.f32.xlu0 %v426
    %v452 = vpop.xlane.xlu0 %451
    %453 = vadd.xlane.f32.xlu0 %v427
    %v454 = vpop.xlane.xlu0 %453
    %455 = vadd.xlane.f32.xlu0 %v428
    %v456 = vpop.xlane.xlu0 %455
    %457 = vadd.xlane.f32.xlu0 %v429
    %v458 = vpop.xlane.xlu0 %457
    %459 = vadd.xlane.f32.xlu0 %v430
    %v460 = vpop.xlane.xlu0 %459
    %461 = vadd.xlane.f32.xlu0 %v431
    %v462 = vpop.xlane.xlu0 %461
    %463 = vadd.xlane.f32.xlu0 %v432
    %v464 = vpop.xlane.xlu0 %463
    %v465 = vrcp.pop 128.0
    %v466 = vmul.f32 %v434, %v465
    %v467 = vmul.f32 %v436, %v465
    %v468 = vmul.f32 %v438, %v465
    %v469 = vmul.f32 %v440, %v465
    %v470 = vmul.f32 %v442, %v465
    %v471 = vmul.f32 %v444, %v465
    %v472 = vmul.f32 %v446, %v465
    %v473 = vmul.f32 %v448, %v465
    %v474 = vmul.f32 %v450, %v465
    %v475 = vmul.f32 %v452, %v465
    %v476 = vmul.f32 %v454, %v465
    %v477 = vmul.f32 %v456, %v465
    %v478 = vmul.f32 %v458, %v465
    %v479 = vmul.f32 %v460, %v465
    %v480 = vmul.f32 %v462, %v465
    %v481 = vmul.f32 %v464, %v465
    %v482 = vadd.f32 %v466, 1e-06
    %v483 = vadd.f32 %v467, 1e-06
    %v484 = vadd.f32 %v468, 1e-06
    %v485 = vadd.f32 %v469, 1e-06
    %v486 = vadd.f32 %v470, 1e-06
    %v487 = vadd.f32 %v471, 1e-06
    %v488 = vadd.f32 %v472, 1e-06
    %v489 = vadd.f32 %v473, 1e-06
    %v490 = vadd.f32 %v474, 1e-06
    %v491 = vadd.f32 %v475, 1e-06
    %v492 = vadd.f32 %v476, 1e-06
    %v493 = vadd.f32 %v477, 1e-06
    %v494 = vadd.f32 %v478, 1e-06
    %v495 = vadd.f32 %v479, 1e-06
    %v496 = vadd.f32 %v480, 1e-06
    %v497 = vadd.f32 %v481, 1e-06
    %v498 = vrsqrt.pop %v482
    %v499 = vrsqrt.pop %v483
    %v500 = vrsqrt.pop %v484
    %v501 = vrsqrt.pop %v485
    %v502 = vrsqrt.pop %v486
    %v503 = vrsqrt.pop %v487
    %v504 = vrsqrt.pop %v488
    %v505 = vrsqrt.pop %v489
    %v506 = vrsqrt.pop %v490
    %v507 = vrsqrt.pop %v491
    %v508 = vrsqrt.pop %v492
    %v509 = vrsqrt.pop %v493
    %v510 = vrsqrt.pop %v494
    %v511 = vrsqrt.pop %v495
    %v512 = vrsqrt.pop %v496
    %v513 = vrsqrt.pop %v497
    %v514 = vmul.f32 %v401, %v498
    %v515 = vmul.f32 %v402, %v499
    %v516 = vmul.f32 %v403, %v500
    %v517 = vmul.f32 %v404, %v501
    %v518 = vmul.f32 %v405, %v502
    %v519 = vmul.f32 %v406, %v503
    %v520 = vmul.f32 %v407, %v504
    %v521 = vmul.f32 %v408, %v505
    %v522 = vmul.f32 %v409, %v506
    %v523 = vmul.f32 %v410, %v507
    %v524 = vmul.f32 %v411, %v508
    %v525 = vmul.f32 %v412, %v509
    %v526 = vmul.f32 %v413, %v510
    %v527 = vmul.f32 %v414, %v511
    %v528 = vmul.f32 %v415, %v512
    %v529 = vmul.f32 %v416, %v513
    %v530 = vld [vmem:[%s2] sm:$0x1]
    %v531 = vlaneseq
    %v532 = vshrl.u32 %v531, 7
    %v533 = vsub.s32 0, %v532
    %v534 = vrot.slane %v530, %v533
    %v535 = vmul.f32 %v514, %v534
    %v536 = vmul.f32 %v515, %v534
    %v537 = vmul.f32 %v516, %v534
    %v538 = vmul.f32 %v517, %v534
    %v539 = vmul.f32 %v518, %v534
    %v540 = vmul.f32 %v519, %v534
    %v541 = vmul.f32 %v520, %v534
    %v542 = vmul.f32 %v521, %v534
    %v543 = vmul.f32 %v522, %v534
    %v544 = vmul.f32 %v523, %v534
    %v545 = vmul.f32 %v524, %v534
    %v546 = vmul.f32 %v525, %v534
    %v547 = vmul.f32 %v526, %v534
    %v548 = vmul.f32 %v527, %v534
    %v549 = vmul.f32 %v528, %v534
    %v550 = vmul.f32 %v529, %v534
    %v551 = vpack.c.bf16 %v536, %v535
    %v552 = vpack.c.bf16 %v538, %v537
    %v553 = vpack.c.bf16 %v540, %v539
    %v554 = vpack.c.bf16 %v542, %v541
    %v555 = vpack.c.bf16 %v544, %v543
    %v556 = vpack.c.bf16 %v546, %v545
    %v557 = vpack.c.bf16 %v548, %v547
    %v558 = vpack.c.bf16 %v550, %v549
    %v559 = vld [vmem:[%s3] sm:$0xff]
    %v560 = vld [vmem:[%s3 + $0x8] sm:$0xff]
    %v561 = vld [vmem:[%s3 + $0x10] sm:$0xff]
    %v562 = vld [vmem:[%s3 + $0x18] sm:$0xff]
    %v563 = vld [vmem:[%s3 + $0x20] sm:$0xff]
    %v564 = vld [vmem:[%s3 + $0x28] sm:$0xff]
    %v565 = vld [vmem:[%s3 + $0x30] sm:$0xff]
    %v566 = vld [vmem:[%s3 + $0x38] sm:$0xff]
    %v567 = vld [vmem:[%s3 + $0x40] sm:$0xff]
    %v568 = vld [vmem:[%s3 + $0x48] sm:$0xff]
    %v569 = vld [vmem:[%s3 + $0x50] sm:$0xff]
    %v570 = vld [vmem:[%s3 + $0x58] sm:$0xff]
    %v571 = vld [vmem:[%s3 + $0x60] sm:$0xff]
    %v572 = vld [vmem:[%s3 + $0x68] sm:$0xff]
    %v573 = vld [vmem:[%s3 + $0x70] sm:$0xff]
    %v574 = vld [vmem:[%s3 + $0x78] sm:$0xff]
    %v575 = vld [vmem:[%s3 + $0x80] sm:$0xff]
    %v576 = vld [vmem:[%s3 + $0x88] sm:$0xff]
    %v577 = vld [vmem:[%s3 + $0x90] sm:$0xff]
    %v578 = vld [vmem:[%s3 + $0x98] sm:$0xff]
    %v579 = vld [vmem:[%s3 + $0xa0] sm:$0xff]
    %v580 = vld [vmem:[%s3 + $0xa8] sm:$0xff]
    %v581 = vld [vmem:[%s3 + $0xb0] sm:$0xff]
    %v582 = vld [vmem:[%s3 + $0xb8] sm:$0xff]
    %v583 = vld [vmem:[%s3 + $0xc0] sm:$0xff]
    %v584 = vld [vmem:[%s3 + $0xc8] sm:$0xff]
    %v585 = vld [vmem:[%s3 + $0xd0] sm:$0xff]
    %v586 = vld [vmem:[%s3 + $0xd8] sm:$0xff]
    %v587 = vld [vmem:[%s3 + $0xe0] sm:$0xff]
    %v588 = vld [vmem:[%s3 + $0xe8] sm:$0xff]
    %v589 = vld [vmem:[%s3 + $0xf0] sm:$0xff]
    %v590 = vld [vmem:[%s3 + $0xf8] sm:$0xff]
    %v623 = vunpack.c.l.b16 %v559
    %v624 = vunpack.c.h.b16 %v559
    %v625 = vunpack.c.l.b16 %v560
    %v626 = vunpack.c.h.b16 %v560
    %v627 = vunpack.c.l.b16 %v561
    %v628 = vunpack.c.h.b16 %v561
    %v629 = vunpack.c.l.b16 %v562
    %v630 = vunpack.c.h.b16 %v562
    %v631 = vunpack.c.l.b16 %v563
    %v632 = vunpack.c.h.b16 %v563
    %v633 = vunpack.c.l.b16 %v564
    %v634 = vunpack.c.h.b16 %v564
    %v635 = vunpack.c.l.b16 %v565
    %v636 = vunpack.c.h.b16 %v565
    %v637 = vunpack.c.l.b16 %v566
    %v638 = vunpack.c.h.b16 %v566
    %v639 = vunpack.c.l.b16 %v567
    %v640 = vunpack.c.h.b16 %v567
    %v641 = vunpack.c.l.b16 %v568
    %v642 = vunpack.c.h.b16 %v568
    %v643 = vunpack.c.l.b16 %v569
    %v644 = vunpack.c.h.b16 %v569
    %v645 = vunpack.c.l.b16 %v570
    %v646 = vunpack.c.h.b16 %v570
    %v647 = vunpack.c.l.b16 %v571
    %v648 = vunpack.c.h.b16 %v571
    %v649 = vunpack.c.l.b16 %v572
    %v650 = vunpack.c.h.b16 %v572
    %v651 = vunpack.c.l.b16 %v573
    %v652 = vunpack.c.h.b16 %v573
    %v653 = vunpack.c.l.b16 %v574
    %v654 = vunpack.c.h.b16 %v574
    %v655 = vunpack.c.l.b16 %v575
    %v656 = vunpack.c.h.b16 %v575
    %v657 = vunpack.c.l.b16 %v576
    %v658 = vunpack.c.h.b16 %v576
    %v659 = vunpack.c.l.b16 %v577
    %v660 = vunpack.c.h.b16 %v577
    %v661 = vunpack.c.l.b16 %v578
    %v662 = vunpack.c.h.b16 %v578
    %v663 = vunpack.c.l.b16 %v579
    %v664 = vunpack.c.h.b16 %v579
    %v665 = vunpack.c.l.b16 %v580
    %v666 = vunpack.c.h.b16 %v580
    %v667 = vunpack.c.l.b16 %v581
    %v668 = vunpack.c.h.b16 %v581
    %v669 = vunpack.c.l.b16 %v582
    %v670 = vunpack.c.h.b16 %v582
    %v671 = vunpack.c.l.b16 %v583
    %v672 = vunpack.c.h.b16 %v583
    %v673 = vunpack.c.l.b16 %v584
    %v674 = vunpack.c.h.b16 %v584
    %v675 = vunpack.c.l.b16 %v585
    %v676 = vunpack.c.h.b16 %v585
    %v677 = vunpack.c.l.b16 %v586
    %v678 = vunpack.c.h.b16 %v586
    %v679 = vunpack.c.l.b16 %v587
    %v680 = vunpack.c.h.b16 %v587
    %v681 = vunpack.c.l.b16 %v588
    %v682 = vunpack.c.h.b16 %v588
    %v683 = vunpack.c.l.b16 %v589
    %v684 = vunpack.c.h.b16 %v589
    %v685 = vunpack.c.l.b16 %v590
    %v686 = vunpack.c.h.b16 %v590
    %v687 = vpack.c.b16 %v627, %v623
    %v688 = vpack.c.b16 %v628, %v624
    %v689 = vpack.c.b16 %v629, %v625
    %v690 = vpack.c.b16 %v630, %v626
    %v691 = vpack.c.b16 %v635, %v631
    %v692 = vpack.c.b16 %v636, %v632
    %v693 = vpack.c.b16 %v637, %v633
    %v694 = vpack.c.b16 %v638, %v634
    %v695 = vpack.c.b16 %v643, %v639
    %v696 = vpack.c.b16 %v644, %v640
    %v697 = vpack.c.b16 %v645, %v641
    %v698 = vpack.c.b16 %v646, %v642
    %v699 = vpack.c.b16 %v651, %v647
    %v700 = vpack.c.b16 %v652, %v648
    %v701 = vpack.c.b16 %v653, %v649
    %v702 = vpack.c.b16 %v654, %v650
    %v703 = vpack.c.b16 %v659, %v655
    %v704 = vpack.c.b16 %v660, %v656
    %v705 = vpack.c.b16 %v661, %v657
    %v706 = vpack.c.b16 %v662, %v658
    %v707 = vpack.c.b16 %v667, %v663
    %v708 = vpack.c.b16 %v668, %v664
    %v709 = vpack.c.b16 %v669, %v665
    %v710 = vpack.c.b16 %v670, %v666
    %v711 = vpack.c.b16 %v675, %v671
    %v712 = vpack.c.b16 %v676, %v672
    %v713 = vpack.c.b16 %v677, %v673
    %v714 = vpack.c.b16 %v678, %v674
    %v715 = vpack.c.b16 %v683, %v679
    %v716 = vpack.c.b16 %v684, %v680
    %v717 = vpack.c.b16 %v685, %v681
    %v718 = vpack.c.b16 %v686, %v682
    %751 = vmatprep.subr.bf16.mxu0 %v688
    %752 = vmatpush1.bf16.msra.mxu0 %v687
    %753 = vmatprep.subr.bf16.mxu0 %v692
    %754 = vmatpush1.bf16.msra.mxu0 %v691
    %755 = vmatprep.subr.bf16.mxu0 %v696
    %756 = vmatpush1.bf16.msra.mxu0 %v695
    %757 = vmatprep.subr.bf16.mxu0 %v700
    %758 = vmatpush1.bf16.msra.mxu0 %v699
    %759 = vmatprep.subr.bf16.mxu0 %v704
    %760 = vmatpush1.bf16.msra.mxu0 %v703
    %761 = vmatprep.subr.bf16.mxu0 %v708
    %762 = vmatpush1.bf16.msra.mxu0 %v707
    %763 = vmatprep.subr.bf16.mxu0 %v712
    %764 = vmatpush1.bf16.msra.mxu0 %v711
    %765 = vmatprep.subr.bf16.mxu0 %v716
    %766 = vmatpush1.bf16.msra.mxu0 %v715
    %767 = vmatprep.subr.bf16.mxu0 0
    %768 = vmatpush1.bf16.msra.mxu0 0
    %769 = vmatprep.subr.bf16.mxu0 0
    %770 = vmatpush1.bf16.msra.mxu0 0
    %771 = vmatprep.subr.bf16.mxu0 0
    %772 = vmatpush1.bf16.msra.mxu0 0
    %773 = vmatprep.subr.bf16.mxu0 0
    %774 = vmatpush1.bf16.msra.mxu0 0
    %775 = vmatprep.subr.bf16.mxu0 0
    %776 = vmatpush1.bf16.msra.mxu0 0
    %777 = vmatprep.subr.bf16.mxu0 0
    %778 = vmatpush1.bf16.msra.mxu0 0
    %779 = vmatprep.subr.bf16.mxu0 0
    %780 = vmatpush1.bf16.msra.mxu0 0
    %781 = vmatprep.subr.bf16.mxu0 0
    %782 = vmatpush1.bf16.msra.mxu0 0
    %783 = vmatprep.mubr.bf16.mxu0 0
    %784 = vmatmul.mubr.bf16.gmra.mrb[0].mxu0 %v551
    %v785 = vpop.f32.mrb[0].mxu0
    %v786 = vadd.f32 0.0, %v785
    %v787 = vpop.f32.mrb[0].mxu0
    %v788 = vadd.f32 0.0, %v787
    %v789 = vpop.f32.mrb[0].mxu0
    %v790 = vadd.f32 0.0, %v789
    %v791 = vpop.f32.mrb[0].mxu0
    %v792 = vadd.f32 0.0, %v791
    %793 = vmatprep.mubr.bf16.mxu0 0
    %794 = vmatmul.mubr.bf16.gmra.mrb[0].mxu0 %v552
    %v795 = vpop.f32.mrb[0].mxu0
    %v796 = vadd.f32 0.0, %v795
    %v797 = vpop.f32.mrb[0].mxu0
    %v798 = vadd.f32 0.0, %v797
    %v799 = vpop.f32.mrb[0].mxu0
    %v800 = vadd.f32 0.0, %v799
    %v801 = vpop.f32.mrb[0].mxu0
    %v802 = vadd.f32 0.0, %v801
    %803 = vmatprep.mubr.bf16.mxu0 0
    %804 = vmatmul.mubr.bf16.gmra.mrb[0].mxu0 %v553
    %v805 = vpop.f32.mrb[0].mxu0
    %v806 = vadd.f32 0.0, %v805
    %v807 = vpop.f32.mrb[0].mxu0
    %v808 = vadd.f32 0.0, %v807
    %v809 = vpop.f32.mrb[0].mxu0
    %v810 = vadd.f32 0.0, %v809
    %v811 = vpop.f32.mrb[0].mxu0
    %v812 = vadd.f32 0.0, %v811
    %813 = vmatprep.mubr.bf16.mxu0 0
    %814 = vmatmul.mubr.bf16.gmra.mrb[0].mxu0 %v554
    %v815 = vpop.f32.mrb[0].mxu0
    %v816 = vadd.f32 0.0, %v815
    %v817 = vpop.f32.mrb[0].mxu0
    %v818 = vadd.f32 0.0, %v817
    %v819 = vpop.f32.mrb[0].mxu0
    %v820 = vadd.f32 0.0, %v819
    %v821 = vpop.f32.mrb[0].mxu0
    %v822 = vadd.f32 0.0, %v821
    %823 = vmatprep.mubr.bf16.mxu0 0
    %824 = vmatmul.mubr.bf16.gmra.mrb[0].mxu0 %v555
    %v825 = vpop.f32.mrb[0].mxu0
    %v826 = vadd.f32 0.0, %v825
    %v827 = vpop.f32.mrb[0].mxu0
    %v828 = vadd.f32 0.0, %v827
    %v829 = vpop.f32.mrb[0].mxu0
    %v830 = vadd.f32 0.0, %v829
    %v831 = vpop.f32.mrb[0].mxu0
    %v832 = vadd.f32 0.0, %v831
    %833 = vmatprep.mubr.bf16.mxu0 0
    %834 = vmatmul.mubr.bf16.gmra.mrb[0].mxu0 %v556
    %v835 = vpop.f32.mrb[0].mxu0
    %v836 = vadd.f32 0.0, %v835
    %v837 = vpop.f32.mrb[0].mxu0
    %v838 = vadd.f32 0.0, %v837
    %v839 = vpop.f32.mrb[0].mxu0
    %v840 = vadd.f32 0.0, %v839
    %v841 = vpop.f32.mrb[0].mxu0
    %v842 = vadd.f32 0.0, %v841
    %843 = vmatprep.mubr.bf16.mxu0 0
    %844 = vmatmul.mubr.bf16.gmra.mrb[0].mxu0 %v557
    %v845 = vpop.f32.mrb[0].mxu0
    %v846 = vadd.f32 0.0, %v845
    %v847 = vpop.f32.mrb[0].mxu0
    %v848 = vadd.f32 0.0, %v847
    %v849 = vpop.f32.mrb[0].mxu0
    %v850 = vadd.f32 0.0, %v849
    %v851 = vpop.f32.mrb[0].mxu0
    %v852 = vadd.f32 0.0, %v851
    %853 = vmatprep.mubr.bf16.mxu0 0
    %854 = vmatmul.mubr.bf16.gmra.mrb[0].mxu0 %v558
    %v855 = vpop.f32.mrb[0].mxu0
    %v856 = vadd.f32 0.0, %v855
    %v857 = vpop.f32.mrb[0].mxu0
    %v858 = vadd.f32 0.0, %v857
    %v859 = vpop.f32.mrb[0].mxu0
    %v860 = vadd.f32 0.0, %v859
    %v861 = vpop.f32.mrb[0].mxu0
    %v862 = vadd.f32 0.0, %v861
    %863 = vdwg.mxu0
    %864 = vmatprep.subr.bf16.mxu0 %v690
    %865 = vmatpush1.bf16.msra.mxu0 %v689
    %866 = vmatprep.subr.bf16.mxu0 %v694
    %867 = vmatpush1.bf16.msra.mxu0 %v693
    %868 = vmatprep.subr.bf16.mxu0 %v698
    %869 = vmatpush1.bf16.msra.mxu0 %v697
    %870 = vmatprep.subr.bf16.mxu0 %v702
    %871 = vmatpush1.bf16.msra.mxu0 %v701
    %872 = vmatprep.subr.bf16.mxu0 %v706
    %873 = vmatpush1.bf16.msra.mxu0 %v705
    %874 = vmatprep.subr.bf16.mxu0 %v710
    %875 = vmatpush1.bf16.msra.mxu0 %v709
    %876 = vmatprep.subr.bf16.mxu0 %v714
    %877 = vmatpush1.bf16.msra.mxu0 %v713
    %878 = vmatprep.subr.bf16.mxu0 %v718
    %879 = vmatpush1.bf16.msra.mxu0 %v717
    %880 = vmatprep.subr.bf16.mxu0 0
    %881 = vmatpush1.bf16.msra.mxu0 0
    %882 = vmatprep.subr.bf16.mxu0 0
    %883 = vmatpush1.bf16.msra.mxu0 0
    %884 = vmatprep.subr.bf16.mxu0 0
    %885 = vmatpush1.bf16.msra.mxu0 0
    %886 = vmatprep.subr.bf16.mxu0 0
    %887 = vmatpush1.bf16.msra.mxu0 0
    %888 = vmatprep.subr.bf16.mxu0 0
    %889 = vmatpush1.bf16.msra.mxu0 0
    %890 = vmatprep.subr.bf16.mxu0 0
    %891 = vmatpush1.bf16.msra.mxu0 0
    %892 = vmatprep.subr.bf16.mxu0 0
    %893 = vmatpush1.bf16.msra.mxu0 0
    %894 = vmatprep.subr.bf16.mxu0 0
    %895 = vmatpush1.bf16.msra.mxu0 0
    %896 = vmatprep.mubr.bf16.mxu0 0
    %897 = vmatmul.mubr.bf16.gmra.mrb[0].mxu0 %v551
    %v898 = vpop.f32.mrb[0].mxu0
    %v899 = vadd.f32 0.0, %v898
    %v900 = vpop.f32.mrb[0].mxu0
    %v901 = vadd.f32 0.0, %v900
    %v902 = vpop.f32.mrb[0].mxu0
    %v903 = vadd.f32 0.0, %v902
    %v904 = vpop.f32.mrb[0].mxu0
    %v905 = vadd.f32 0.0, %v904
    %906 = vmatprep.mubr.bf16.mxu0 0
    %907 = vmatmul.mubr.bf16.gmra.mrb[0].mxu0 %v552
    %v908 = vpop.f32.mrb[0].mxu0
    %v909 = vadd.f32 0.0, %v908
    %v910 = vpop.f32.mrb[0].mxu0
    %v911 = vadd.f32 0.0, %v910
    %v912 = vpop.f32.mrb[0].mxu0
    %v913 = vadd.f32 0.0, %v912
    %v914 = vpop.f32.mrb[0].mxu0
    %v915 = vadd.f32 0.0, %v914
    %916 = vmatprep.mubr.bf16.mxu0 0
    %917 = vmatmul.mubr.bf16.gmra.mrb[0].mxu0 %v553
    %v918 = vpop.f32.mrb[0].mxu0
    %v919 = vadd.f32 0.0, %v918
    %v920 = vpop.f32.mrb[0].mxu0
    %v921 = vadd.f32 0.0, %v920
    %v922 = vpop.f32.mrb[0].mxu0
    %v923 = vadd.f32 0.0, %v922
    %v924 = vpop.f32.mrb[0].mxu0
    %v925 = vadd.f32 0.0, %v924
    %926 = vmatprep.mubr.bf16.mxu0 0
    %927 = vmatmul.mubr.bf16.gmra.mrb[0].mxu0 %v554
    %v928 = vpop.f32.mrb[0].mxu0
    %v929 = vadd.f32 0.0, %v928
    %v930 = vpop.f32.mrb[0].mxu0
    %v931 = vadd.f32 0.0, %v930
    %v932 = vpop.f32.mrb[0].mxu0
    %v933 = vadd.f32 0.0, %v932
    %v934 = vpop.f32.mrb[0].mxu0
    %v935 = vadd.f32 0.0, %v934
    %936 = vmatprep.mubr.bf16.mxu0 0
    %937 = vmatmul.mubr.bf16.gmra.mrb[0].mxu0 %v555
    %v938 = vpop.f32.mrb[0].mxu0
    %v939 = vadd.f32 0.0, %v938
    %v940 = vpop.f32.mrb[0].mxu0
    %v941 = vadd.f32 0.0, %v940
    %v942 = vpop.f32.mrb[0].mxu0
    %v943 = vadd.f32 0.0, %v942
    %v944 = vpop.f32.mrb[0].mxu0
    %v945 = vadd.f32 0.0, %v944
    %946 = vmatprep.mubr.bf16.mxu0 0
    %947 = vmatmul.mubr.bf16.gmra.mrb[0].mxu0 %v556
    %v948 = vpop.f32.mrb[0].mxu0
    %v949 = vadd.f32 0.0, %v948
    %v950 = vpop.f32.mrb[0].mxu0
    %v951 = vadd.f32 0.0, %v950
    %v952 = vpop.f32.mrb[0].mxu0
    %v953 = vadd.f32 0.0, %v952
    %v954 = vpop.f32.mrb[0].mxu0
    %v955 = vadd.f32 0.0, %v954
    %956 = vmatprep.mubr.bf16.mxu0 0
    %957 = vmatmul.mubr.bf16.gmra.mrb[0].mxu0 %v557
    %v958 = vpop.f32.mrb[0].mxu0
    %v959 = vadd.f32 0.0, %v958
    %v960 = vpop.f32.mrb[0].mxu0
    %v961 = vadd.f32 0.0, %v960
    %v962 = vpop.f32.mrb[0].mxu0
    %v963 = vadd.f32 0.0, %v962
    %v964 = vpop.f32.mrb[0].mxu0
    %v965 = vadd.f32 0.0, %v964
    %966 = vmatprep.mubr.bf16.mxu0 0
    %967 = vmatmul.mubr.bf16.gmra.mrb[0].mxu0 %v558
    %v968 = vpop.f32.mrb[0].mxu0
    %v969 = vadd.f32 0.0, %v968
    %v970 = vpop.f32.mrb[0].mxu0
    %v971 = vadd.f32 0.0, %v970
    %v972 = vpop.f32.mrb[0].mxu0
    %v973 = vadd.f32 0.0, %v972
    %v974 = vpop.f32.mrb[0].mxu0
    %v975 = vadd.f32 0.0, %v974
    %976 = vdwg.mxu0
    %v977 = vld [vmem:[%s1] sm:$0xff]
    %v978 = vld [vmem:[%s1 + $0x8] sm:$0xff]
    %v979 = vld [vmem:[%s1 + $0x10] sm:$0xff]
    %v980 = vld [vmem:[%s1 + $0x18] sm:$0xff]
    %v981 = vld [vmem:[%s1 + $0x20] sm:$0xff]
    %v982 = vld [vmem:[%s1 + $0x28] sm:$0xff]
    %v983 = vld [vmem:[%s1 + $0x30] sm:$0xff]
    %v984 = vld [vmem:[%s1 + $0x38] sm:$0xff]
    %s985 = scalar_lea.vmem %s1, 64
    %v986 = vld [vmem:[%s985] sm:$0xff]
    %v987 = vld [vmem:[%s985 + $0x8] sm:$0xff]
    %v988 = vld [vmem:[%s985 + $0x10] sm:$0xff]
    %v989 = vld [vmem:[%s985 + $0x18] sm:$0xff]
    %v990 = vld [vmem:[%s985 + $0x20] sm:$0xff]
    %v991 = vld [vmem:[%s985 + $0x28] sm:$0xff]
    %v992 = vld [vmem:[%s985 + $0x30] sm:$0xff]
    %v993 = vld [vmem:[%s985 + $0x38] sm:$0xff]
    %1002 = vrot.lane.b32.xlu0 %v977, 32
    %v1003 = vpop.permute.xlu0 %1002
    %1004 = vrot.lane.b32.xlu0 %v978, 32
    %v1005 = vpop.permute.xlu0 %1004
    %1006 = vrot.lane.b32.xlu0 %v979, 32
    %v1007 = vpop.permute.xlu0 %1006
    %1008 = vrot.lane.b32.xlu0 %v980, 32
    %v1009 = vpop.permute.xlu0 %1008
    %1010 = vrot.lane.b32.xlu0 %v981, 32
    %v1011 = vpop.permute.xlu0 %1010
    %1012 = vrot.lane.b32.xlu0 %v982, 32
    %v1013 = vpop.permute.xlu0 %1012
    %1014 = vrot.lane.b32.xlu0 %v983, 32
    %v1015 = vpop.permute.xlu0 %1014
    %1016 = vrot.lane.b32.xlu0 %v984, 32
    %v1017 = vpop.permute.xlu0 %1016
    %vm1026 = vcmask 261120
    %v1027 = vsel %vm1026, %v977, %v1003
    %v1028 = vsel %vm1026, %v978, %v1005
    %v1029 = vsel %vm1026, %v979, %v1007
    %v1030 = vsel %vm1026, %v980, %v1009
    %v1031 = vsel %vm1026, %v981, %v1011
    %v1032 = vsel %vm1026, %v982, %v1013
    %v1033 = vsel %vm1026, %v983, %v1015
    %v1034 = vsel %vm1026, %v984, %v1017
    %1043 = vrot.lane.b32.xlu0 %v986, 32
    %v1044 = vpop.permute.xlu0 %1043
    %1045 = vrot.lane.b32.xlu0 %v987, 32
    %v1046 = vpop.permute.xlu0 %1045
    %1047 = vrot.lane.b32.xlu0 %v988, 32
    %v1048 = vpop.permute.xlu0 %1047
    %1049 = vrot.lane.b32.xlu0 %v989, 32
    %v1050 = vpop.permute.xlu0 %1049
    %1051 = vrot.lane.b32.xlu0 %v990, 32
    %v1052 = vpop.permute.xlu0 %1051
    %1053 = vrot.lane.b32.xlu0 %v991, 32
    %v1054 = vpop.permute.xlu0 %1053
    %1055 = vrot.lane.b32.xlu0 %v992, 32
    %v1056 = vpop.permute.xlu0 %1055
    %1057 = vrot.lane.b32.xlu0 %v993, 32
    %v1058 = vpop.permute.xlu0 %1057
    %v1067 = vsel %vm1026, %v986, %v1044
    %v1068 = vsel %vm1026, %v987, %v1046
    %v1069 = vsel %vm1026, %v988, %v1048
    %v1070 = vsel %vm1026, %v989, %v1050
    %v1071 = vsel %vm1026, %v990, %v1052
    %v1072 = vsel %vm1026, %v991, %v1054
    %v1073 = vsel %vm1026, %v992, %v1056
    %v1074 = vsel %vm1026, %v993, %v1058
    %1075 = vrot.lane.b32.xlu0 %v977, 64
    %v1076 = vpop.permute.xlu0 %1075
    %1077 = vrot.lane.b32.xlu0 %v978, 64
    %v1078 = vpop.permute.xlu0 %1077
    %1079 = vrot.lane.b32.xlu0 %v979, 64
    %v1080 = vpop.permute.xlu0 %1079
    %1081 = vrot.lane.b32.xlu0 %v980, 64
    %v1082 = vpop.permute.xlu0 %1081
    %1083 = vrot.lane.b32.xlu0 %v981, 64
    %v1084 = vpop.permute.xlu0 %1083
    %1085 = vrot.lane.b32.xlu0 %v982, 64
    %v1086 = vpop.permute.xlu0 %1085
    %1087 = vrot.lane.b32.xlu0 %v983, 64
    %v1088 = vpop.permute.xlu0 %1087
    %1089 = vrot.lane.b32.xlu0 %v984, 64
    %v1090 = vpop.permute.xlu0 %1089
    %1099 = vrot.lane.b32.xlu0 %v977, 96
    %v1100 = vpop.permute.xlu0 %1099
    %1101 = vrot.lane.b32.xlu0 %v978, 96
    %v1102 = vpop.permute.xlu0 %1101
    %1103 = vrot.lane.b32.xlu0 %v979, 96
    %v1104 = vpop.permute.xlu0 %1103
    %1105 = vrot.lane.b32.xlu0 %v980, 96
    %v1106 = vpop.permute.xlu0 %1105
    %1107 = vrot.lane.b32.xlu0 %v981, 96
    %v1108 = vpop.permute.xlu0 %1107
    %1109 = vrot.lane.b32.xlu0 %v982, 96
    %v1110 = vpop.permute.xlu0 %1109
    %1111 = vrot.lane.b32.xlu0 %v983, 96
    %v1112 = vpop.permute.xlu0 %1111
    %1113 = vrot.lane.b32.xlu0 %v984, 96
    %v1114 = vpop.permute.xlu0 %1113
    %vm1123 = vcmask 523264
    %v1124 = vsel %vm1123, %v1027, %v1076
    %v1125 = vsel %vm1123, %v1028, %v1078
    %v1126 = vsel %vm1123, %v1029, %v1080
    %v1127 = vsel %vm1123, %v1030, %v1082
    %v1128 = vsel %vm1123, %v1031, %v1084
    %v1129 = vsel %vm1123, %v1032, %v1086
    %v1130 = vsel %vm1123, %v1033, %v1088
    %v1131 = vsel %vm1123, %v1034, %v1090
    %vm1132 = vcmask 785408
    %v1133 = vsel %vm1132, %v1124, %v1100
    %v1134 = vsel %vm1132, %v1125, %v1102
    %v1135 = vsel %vm1132, %v1126, %v1104
    %v1136 = vsel %vm1132, %v1127, %v1106
    %v1137 = vsel %vm1132, %v1128, %v1108
    %v1138 = vsel %vm1132, %v1129, %v1110
    %v1139 = vsel %vm1132, %v1130, %v1112
    %v1140 = vsel %vm1132, %v1131, %v1114
    %1141 = vrot.lane.b32.xlu0 %v986, 64
    %v1142 = vpop.permute.xlu0 %1141
    %1143 = vrot.lane.b32.xlu0 %v987, 64
    %v1144 = vpop.permute.xlu0 %1143
    %1145 = vrot.lane.b32.xlu0 %v988, 64
    %v1146 = vpop.permute.xlu0 %1145
    %1147 = vrot.lane.b32.xlu0 %v989, 64
    %v1148 = vpop.permute.xlu0 %1147
    %1149 = vrot.lane.b32.xlu0 %v990, 64
    %v1150 = vpop.permute.xlu0 %1149
    %1151 = vrot.lane.b32.xlu0 %v991, 64
    %v1152 = vpop.permute.xlu0 %1151
    %1153 = vrot.lane.b32.xlu0 %v992, 64
    %v1154 = vpop.permute.xlu0 %1153
    %1155 = vrot.lane.b32.xlu0 %v993, 64
    %v1156 = vpop.permute.xlu0 %1155
    %1165 = vrot.lane.b32.xlu0 %v986, 96
    %v1166 = vpop.permute.xlu0 %1165
    %1167 = vrot.lane.b32.xlu0 %v987, 96
    %v1168 = vpop.permute.xlu0 %1167
    %1169 = vrot.lane.b32.xlu0 %v988, 96
    %v1170 = vpop.permute.xlu0 %1169
    %1171 = vrot.lane.b32.xlu0 %v989, 96
    %v1172 = vpop.permute.xlu0 %1171
    %1173 = vrot.lane.b32.xlu0 %v990, 96
    %v1174 = vpop.permute.xlu0 %1173
    %1175 = vrot.lane.b32.xlu0 %v991, 96
    %v1176 = vpop.permute.xlu0 %1175
    %1177 = vrot.lane.b32.xlu0 %v992, 96
    %v1178 = vpop.permute.xlu0 %1177
    %1179 = vrot.lane.b32.xlu0 %v993, 96
    %v1180 = vpop.permute.xlu0 %1179
    %v1189 = vsel %vm1123, %v1067, %v1142
    %v1190 = vsel %vm1123, %v1068, %v1144
    %v1191 = vsel %vm1123, %v1069, %v1146
    %v1192 = vsel %vm1123, %v1070, %v1148
    %v1193 = vsel %vm1123, %v1071, %v1150
    %v1194 = vsel %vm1123, %v1072, %v1152
    %v1195 = vsel %vm1123, %v1073, %v1154
    %v1196 = vsel %vm1123, %v1074, %v1156
    %v1197 = vsel %vm1132, %v1189, %v1166
    %v1198 = vsel %vm1132, %v1190, %v1168
    %v1199 = vsel %vm1132, %v1191, %v1170
    %v1200 = vsel %vm1132, %v1192, %v1172
    %v1201 = vsel %vm1132, %v1193, %v1174
    %v1202 = vsel %vm1132, %v1194, %v1176
    %v1203 = vsel %vm1132, %v1195, %v1178
    %v1204 = vsel %vm1132, %v1196, %v1180
    %v1205 = vmul.f32 %v899, %v1027
    %v1206 = vmul.f32 %v903, %v1028
    %v1207 = vmul.f32 %v909, %v1029
    %v1208 = vmul.f32 %v913, %v1030
    %v1209 = vmul.f32 %v919, %v1031
    %v1210 = vmul.f32 %v923, %v1032
    %v1211 = vmul.f32 %v929, %v1033
    %v1212 = vmul.f32 %v933, %v1034
    %v1213 = vmul.f32 %v939, %v1027
    %v1214 = vmul.f32 %v943, %v1028
    %v1215 = vmul.f32 %v949, %v1029
    %v1216 = vmul.f32 %v953, %v1030
    %v1217 = vmul.f32 %v959, %v1031
    %v1218 = vmul.f32 %v963, %v1032
    %v1219 = vmul.f32 %v969, %v1033
    %v1220 = vmul.f32 %v973, %v1034
    %1229 = vrot.lane.b32.xlu0 %v1067, 64
    %v1230 = vpop.permute.xlu0 %1229
    %1231 = vrot.lane.b32.xlu0 %v1068, 64
    %v1232 = vpop.permute.xlu0 %1231
    %1233 = vrot.lane.b32.xlu0 %v1069, 64
    %v1234 = vpop.permute.xlu0 %1233
    %1235 = vrot.lane.b32.xlu0 %v1070, 64
    %v1236 = vpop.permute.xlu0 %1235
    %1237 = vrot.lane.b32.xlu0 %v1071, 64
    %v1238 = vpop.permute.xlu0 %1237
    %1239 = vrot.lane.b32.xlu0 %v1072, 64
    %v1240 = vpop.permute.xlu0 %1239
    %1241 = vrot.lane.b32.xlu0 %v1073, 64
    %v1242 = vpop.permute.xlu0 %1241
    %1243 = vrot.lane.b32.xlu0 %v1074, 64
    %v1244 = vpop.permute.xlu0 %1243
    %v1253 = vmul.f32 %v899, %v1230
    %v1254 = vmul.f32 %v903, %v1232
    %v1255 = vmul.f32 %v909, %v1234
    %v1256 = vmul.f32 %v913, %v1236
    %v1257 = vmul.f32 %v919, %v1238
    %v1258 = vmul.f32 %v923, %v1240
    %v1259 = vmul.f32 %v929, %v1242
    %v1260 = vmul.f32 %v933, %v1244
    %v1261 = vmul.f32 %v939, %v1230
    %v1262 = vmul.f32 %v943, %v1232
    %v1263 = vmul.f32 %v949, %v1234
    %v1264 = vmul.f32 %v953, %v1236
    %v1265 = vmul.f32 %v959, %v1238
    %v1266 = vmul.f32 %v963, %v1240
    %v1267 = vmul.f32 %v969, %v1242
    %v1268 = vmul.f32 %v973, %v1244
    %1285 = vrot.lane.b32.xlu0 %v1253, 64
    %v1286 = vpop.permute.xlu0 %1285
    %1287 = vrot.lane.b32.xlu0 %v1254, 64
    %v1288 = vpop.permute.xlu0 %1287
    %1289 = vrot.lane.b32.xlu0 %v1255, 64
    %v1290 = vpop.permute.xlu0 %1289
    %1291 = vrot.lane.b32.xlu0 %v1256, 64
    %v1292 = vpop.permute.xlu0 %1291
    %1293 = vrot.lane.b32.xlu0 %v1257, 64
    %v1294 = vpop.permute.xlu0 %1293
    %1295 = vrot.lane.b32.xlu0 %v1258, 64
    %v1296 = vpop.permute.xlu0 %1295
    %1297 = vrot.lane.b32.xlu0 %v1259, 64
    %v1298 = vpop.permute.xlu0 %1297
    %1299 = vrot.lane.b32.xlu0 %v1260, 64
    %v1300 = vpop.permute.xlu0 %1299
    %1301 = vrot.lane.b32.xlu0 %v1261, 64
    %v1302 = vpop.permute.xlu0 %1301
    %1303 = vrot.lane.b32.xlu0 %v1262, 64
    %v1304 = vpop.permute.xlu0 %1303
    %1305 = vrot.lane.b32.xlu0 %v1263, 64
    %v1306 = vpop.permute.xlu0 %1305
    %1307 = vrot.lane.b32.xlu0 %v1264, 64
    %v1308 = vpop.permute.xlu0 %1307
    %1309 = vrot.lane.b32.xlu0 %v1265, 64
    %v1310 = vpop.permute.xlu0 %1309
    %1311 = vrot.lane.b32.xlu0 %v1266, 64
    %v1312 = vpop.permute.xlu0 %1311
    %1313 = vrot.lane.b32.xlu0 %v1267, 64
    %v1314 = vpop.permute.xlu0 %1313
    %1315 = vrot.lane.b32.xlu0 %v1268, 64
    %v1316 = vpop.permute.xlu0 %1315
    %v1333 = vadd.f32 %v1205, %v1286
    %v1334 = vadd.f32 %v1206, %v1288
    %v1335 = vadd.f32 %v1207, %v1290
    %v1336 = vadd.f32 %v1208, %v1292
    %v1337 = vadd.f32 %v1209, %v1294
    %v1338 = vadd.f32 %v1210, %v1296
    %v1339 = vadd.f32 %v1211, %v1298
    %v1340 = vadd.f32 %v1212, %v1300
    %v1341 = vadd.f32 %v1213, %v1302
    %v1342 = vadd.f32 %v1214, %v1304
    %v1343 = vadd.f32 %v1215, %v1306
    %v1344 = vadd.f32 %v1216, %v1308
    %v1345 = vadd.f32 %v1217, %v1310
    %v1346 = vadd.f32 %v1218, %v1312
    %v1347 = vadd.f32 %v1219, %v1314
    %v1348 = vadd.f32 %v1220, %v1316
    %v1349 = vpack.c.bf16 %v1334, %v1333
    %v1350 = vpack.c.bf16 %v1336, %v1335
    %v1351 = vpack.c.bf16 %v1338, %v1337
    %v1352 = vpack.c.bf16 %v1340, %v1339
    %v1353 = vpack.c.bf16 %v1342, %v1341
    %v1354 = vpack.c.bf16 %v1344, %v1343
    %v1355 = vpack.c.bf16 %v1346, %v1345
    %v1356 = vpack.c.bf16 %v1348, %v1347
    %v1357 = vpack.c.bf16 %v905, %v901
    %v1358 = vpack.c.bf16 %v915, %v911
    %v1359 = vpack.c.bf16 %v925, %v921
    %v1360 = vpack.c.bf16 %v935, %v931
    %v1361 = vpack.c.bf16 %v945, %v941
    %v1362 = vpack.c.bf16 %v955, %v951
    %v1363 = vpack.c.bf16 %v965, %v961
    %v1364 = vpack.c.bf16 %v975, %v971
    %v1365 = vmul.f32 %v786, %v1133
    %v1366 = vmul.f32 %v790, %v1134
    %v1367 = vmul.f32 %v796, %v1135
    %v1368 = vmul.f32 %v800, %v1136
    %v1369 = vmul.f32 %v806, %v1137
    %v1370 = vmul.f32 %v810, %v1138
    %v1371 = vmul.f32 %v816, %v1139
    %v1372 = vmul.f32 %v820, %v1140
    %v1373 = vmul.f32 %v826, %v1133
    %v1374 = vmul.f32 %v830, %v1134
    %v1375 = vmul.f32 %v836, %v1135
    %v1376 = vmul.f32 %v840, %v1136
    %v1377 = vmul.f32 %v846, %v1137
    %v1378 = vmul.f32 %v850, %v1138
    %v1379 = vmul.f32 %v856, %v1139
    %v1380 = vmul.f32 %v860, %v1140
    %v1381 = vmul.f32 %v788, %v1197
    %v1382 = vmul.f32 %v792, %v1198
    %v1383 = vmul.f32 %v798, %v1199
    %v1384 = vmul.f32 %v802, %v1200
    %v1385 = vmul.f32 %v808, %v1201
    %v1386 = vmul.f32 %v812, %v1202
    %v1387 = vmul.f32 %v818, %v1203
    %v1388 = vmul.f32 %v822, %v1204
    %v1389 = vmul.f32 %v828, %v1197
    %v1390 = vmul.f32 %v832, %v1198
    %v1391 = vmul.f32 %v838, %v1199
    %v1392 = vmul.f32 %v842, %v1200
    %v1393 = vmul.f32 %v848, %v1201
    %v1394 = vmul.f32 %v852, %v1202
    %v1395 = vmul.f32 %v858, %v1203
    %v1396 = vmul.f32 %v862, %v1204
    %v1397 = vadd.f32 %v1365, %v1381
    %v1398 = vadd.f32 %v1366, %v1382
    %v1399 = vadd.f32 %v1367, %v1383
    %v1400 = vadd.f32 %v1368, %v1384
    %v1401 = vadd.f32 %v1369, %v1385
    %v1402 = vadd.f32 %v1370, %v1386
    %v1403 = vadd.f32 %v1371, %v1387
    %v1404 = vadd.f32 %v1372, %v1388
    %v1405 = vadd.f32 %v1373, %v1389
    %v1406 = vadd.f32 %v1374, %v1390
    %v1407 = vadd.f32 %v1375, %v1391
    %v1408 = vadd.f32 %v1376, %v1392
    %v1409 = vadd.f32 %v1377, %v1393
    %v1410 = vadd.f32 %v1378, %v1394
    %v1411 = vadd.f32 %v1379, %v1395
    %v1412 = vadd.f32 %v1380, %v1396
    %v1413 = vpack.c.bf16 %v1398, %v1397
    %v1414 = vpack.c.bf16 %v1400, %v1399
    %v1415 = vpack.c.bf16 %v1402, %v1401
    %v1416 = vpack.c.bf16 %v1404, %v1403
    %v1417 = vpack.c.bf16 %v1406, %v1405
    %v1418 = vpack.c.bf16 %v1408, %v1407
    %v1419 = vpack.c.bf16 %v1410, %v1409
    %v1420 = vpack.c.bf16 %v1412, %v1411
    %v1421 = vlaneseq
    %v1422 = vshrl.u32 %v1421, 7
    %v1423 = vadd.s32 %v1422, 8
    %v1424 = vadd.s32 %v1422, 16
    %v1425 = vadd.s32 %v1422, 24
    %v1426 = vadd.s32 %v1422, 32
    %v1427 = vadd.s32 %v1422, 40
    %v1428 = vadd.s32 %v1422, 48
    %v1429 = vadd.s32 %v1422, 56
    %v1430 = vlaneseq
    %v1431 = vand.u32 %v1430, 127
    %vm1432 = vcmp.ge.s32.totalorder %v1422, %v1431
    %vm1433 = vcmp.ge.s32.totalorder %v1423, %v1431
    %vm1434 = vcmp.ge.s32.totalorder %v1424, %v1431
    %vm1435 = vcmp.ge.s32.totalorder %v1425, %v1431
    %vm1436 = vcmp.ge.s32.totalorder %v1426, %v1431
    %vm1437 = vcmp.ge.s32.totalorder %v1427, %v1431
    %vm1438 = vcmp.ge.s32.totalorder %v1428, %v1431
    %vm1439 = vcmp.ge.s32.totalorder %v1429, %v1431
    %v1440 = vsel %vm1432, 0.0, -1e+09
    %v1441 = vsel %vm1433, 0.0, -1e+09
    %v1442 = vsel %vm1434, 0.0, -1e+09
    %v1443 = vsel %vm1435, 0.0, -1e+09
    %v1444 = vsel %vm1436, 0.0, -1e+09
    %v1445 = vsel %vm1437, 0.0, -1e+09
    %v1446 = vsel %vm1438, 0.0, -1e+09
    %v1447 = vsel %vm1439, 0.0, -1e+09
    %1452 = vrot.lane.b32.xlu0 %v1413, 96
    %v1453 = vpop.permute.xlu0 %1452
    %1454 = vrot.lane.b32.xlu0 %v1414, 96
    %v1455 = vpop.permute.xlu0 %1454
    %1456 = vrot.lane.b32.xlu0 %v1415, 96
    %v1457 = vpop.permute.xlu0 %1456
    %1458 = vrot.lane.b32.xlu0 %v1416, 96
    %v1459 = vpop.permute.xlu0 %1458
    %v1461 = vsel %vm1026, %v1413, 0
    %v1464 = vsel %vm1026, %v1414, 0
    %v1467 = vsel %vm1026, %v1415, 0
    %v1470 = vsel %vm1026, %v1416, 0
    %v1473 = vsel %vm1026, %v1453, 0
    %v1476 = vsel %vm1026, %v1455, 0
    %v1479 = vsel %vm1026, %v1457, 0
    %v1482 = vsel %vm1026, %v1459, 0
    %v1485 = vsel %vm1026, %v1349, 0
    %v1488 = vsel %vm1026, %v1350, 0
    %v1491 = vsel %vm1026, %v1351, 0
    %v1494 = vsel %vm1026, %v1352, 0
    %1496 = vmatprep.subr.bf16.mxu0 0
    %1497 = vmatpush1.bf16.xpose.msra.mxu0 %v1485
    %1498 = vmatprep.subr.bf16.mxu0 0
    %1499 = vmatpush1.bf16.xpose.msra.mxu0 %v1488
    %1500 = vmatprep.subr.bf16.mxu0 0
    %1501 = vmatpush1.bf16.xpose.msra.mxu0 %v1491
    %1502 = vmatprep.subr.bf16.mxu0 0
    %1503 = vmatpush1.bf16.xpose.msra.mxu0 %v1494
    %1504 = vmatprep.subr.bf16.mxu0 0
    %1505 = vmatpush1.bf16.xpose.msra.mxu0 0
    %1506 = vmatprep.subr.bf16.mxu0 0
    %1507 = vmatpush1.bf16.xpose.msra.mxu0 0
    %1508 = vmatprep.subr.bf16.mxu0 0
    %1509 = vmatpush1.bf16.xpose.msra.mxu0 0
    %1510 = vmatprep.subr.bf16.mxu0 0
    %1511 = vmatpush1.bf16.xpose.msra.mxu0 0
    %1512 = vmatprep.subr.bf16.mxu0 0
    %1513 = vmatpush1.bf16.xpose.msra.mxu0 0
    %1514 = vmatprep.subr.bf16.mxu0 0
    %1515 = vmatpush1.bf16.xpose.msra.mxu0 0
    %1516 = vmatprep.subr.bf16.mxu0 0
    %1517 = vmatpush1.bf16.xpose.msra.mxu0 0
    %1518 = vmatprep.subr.bf16.mxu0 0
    %1519 = vmatpush1.bf16.xpose.msra.mxu0 0
    %1520 = vmatprep.subr.bf16.mxu0 0
    %1521 = vmatpush1.bf16.xpose.msra.mxu0 0
    %1522 = vmatprep.subr.bf16.mxu0 0
    %1523 = vmatpush1.bf16.xpose.msra.mxu0 0
    %1524 = vmatprep.subr.bf16.mxu0 0
    %1525 = vmatpush1.bf16.xpose.msra.mxu0 0
    %1526 = vmatprep.subr.bf16.mxu0 0
    %1527 = vmatpush1.bf16.xpose.msra.mxu0 0
    %1528 = vmatprep.mubr.bf16.mxu0 0
    %1529 = vmatmul.mubr.bf16.gmra.mrb[0].mxu0 %v1461
    %v1530 = vpop.f32.mrb[0].mxu0
    %v1531 = vadd.f32 0.0, %v1530
    %v1532 = vpop.f32.mrb[0].mxu0
    %v1533 = vpop.f32.mrb[0].mxu0
    %v1534 = vadd.f32 0.0, %v1533
    %v1535 = vpop.f32.mrb[0].mxu0
    %1536 = vmatprep.mubr.bf16.mxu0 0
    %1537 = vmatmul.mubr.bf16.gmra.mrb[0].mxu0 %v1464
    %v1538 = vpop.f32.mrb[0].mxu0
    %v1539 = vadd.f32 0.0, %v1538
    %v1540 = vpop.f32.mrb[0].mxu0
    %v1541 = vpop.f32.mrb[0].mxu0
    %v1542 = vadd.f32 0.0, %v1541
    %v1543 = vpop.f32.mrb[0].mxu0
    %1544 = vmatprep.mubr.bf16.mxu0 0
    %1545 = vmatmul.mubr.bf16.gmra.mrb[0].mxu0 %v1467
    %v1546 = vpop.f32.mrb[0].mxu0
    %v1547 = vadd.f32 0.0, %v1546
    %v1548 = vpop.f32.mrb[0].mxu0
    %v1549 = vpop.f32.mrb[0].mxu0
    %v1550 = vadd.f32 0.0, %v1549
    %v1551 = vpop.f32.mrb[0].mxu0
    %1552 = vmatprep.mubr.bf16.mxu0 0
    %1553 = vmatmul.mubr.bf16.gmra.mrb[0].mxu0 %v1470
    %v1554 = vpop.f32.mrb[0].mxu0
    %v1555 = vadd.f32 0.0, %v1554
    %v1556 = vpop.f32.mrb[0].mxu0
    %v1557 = vpop.f32.mrb[0].mxu0
    %v1558 = vadd.f32 0.0, %v1557
    %v1559 = vpop.f32.mrb[0].mxu0
    %1560 = vmatprep.mubr.bf16.mxu0 0
    %1561 = vmatmul.mubr.bf16.gmra.mrb[0].mxu0 %v1473
    %v1562 = vpop.f32.mrb[0].mxu0
    %v1563 = vadd.f32 0.0, %v1562
    %v1564 = vpop.f32.mrb[0].mxu0
    %v1565 = vpop.f32.mrb[0].mxu0
    %v1566 = vadd.f32 0.0, %v1565
    %v1567 = vpop.f32.mrb[0].mxu0
    %1568 = vmatprep.mubr.bf16.mxu0 0
    %1569 = vmatmul.mubr.bf16.gmra.mrb[0].mxu0 %v1476
    %v1570 = vpop.f32.mrb[0].mxu0
    %v1571 = vadd.f32 0.0, %v1570
    %v1572 = vpop.f32.mrb[0].mxu0
    %v1573 = vpop.f32.mrb[0].mxu0
    %v1574 = vadd.f32 0.0, %v1573
    %v1575 = vpop.f32.mrb[0].mxu0
    %1576 = vmatprep.mubr.bf16.mxu0 0
    %1577 = vmatmul.mubr.bf16.gmra.mrb[0].mxu0 %v1479
    %v1578 = vpop.f32.mrb[0].mxu0
    %v1579 = vadd.f32 0.0, %v1578
    %v1580 = vpop.f32.mrb[0].mxu0
    %v1581 = vpop.f32.mrb[0].mxu0
    %v1582 = vadd.f32 0.0, %v1581
    %v1583 = vpop.f32.mrb[0].mxu0
    %1584 = vmatprep.mubr.bf16.mxu0 0
    %1585 = vmatmul.mubr.bf16.gmra.mrb[0].mxu0 %v1482
    %v1586 = vpop.f32.mrb[0].mxu0
    %v1587 = vadd.f32 0.0, %v1586
    %v1588 = vpop.f32.mrb[0].mxu0
    %v1589 = vpop.f32.mrb[0].mxu0
    %v1590 = vadd.f32 0.0, %v1589
    %v1591 = vpop.f32.mrb[0].mxu0
    %1592 = vdwg.mxu0
    %v1593 = vmul.f32 %v1531, 0.17677669
    %v1594 = vmul.f32 %v1534, 0.17677669
    %v1595 = vmul.f32 %v1539, 0.17677669
    %v1596 = vmul.f32 %v1542, 0.17677669
    %v1597 = vmul.f32 %v1547, 0.17677669
    %v1598 = vmul.f32 %v1550, 0.17677669
    %v1599 = vmul.f32 %v1555, 0.17677669
    %v1600 = vmul.f32 %v1558, 0.17677669
    %v1601 = vmul.f32 %v1563, 0.17677669
    %v1602 = vmul.f32 %v1566, 0.17677669
    %v1603 = vmul.f32 %v1571, 0.17677669
    %v1604 = vmul.f32 %v1574, 0.17677669
    %v1605 = vmul.f32 %v1579, 0.17677669
    %v1606 = vmul.f32 %v1582, 0.17677669
    %v1607 = vmul.f32 %v1587, 0.17677669
    %v1608 = vmul.f32 %v1590, 0.17677669
    %v1609 = vadd.f32 %v1593, %v1440
    %v1610 = vadd.f32 %v1594, %v1441
    %v1611 = vadd.f32 %v1595, %v1442
    %v1612 = vadd.f32 %v1596, %v1443
    %v1613 = vadd.f32 %v1597, %v1444
    %v1614 = vadd.f32 %v1598, %v1445
    %v1615 = vadd.f32 %v1599, %v1446
    %v1616 = vadd.f32 %v1600, %v1447
    %v1617 = vadd.f32 %v1601, %v1440
    %v1618 = vadd.f32 %v1602, %v1441
    %v1619 = vadd.f32 %v1603, %v1442
    %v1620 = vadd.f32 %v1604, %v1443
    %v1621 = vadd.f32 %v1605, %v1444
    %v1622 = vadd.f32 %v1606, %v1445
    %v1623 = vadd.f32 %v1607, %v1446
    %v1624 = vadd.f32 %v1608, %v1447
    %v1625 = vsel %vm1123, %v1609, -inf
    %1626 = vmax.xlane.f32.xlu0 %v1625
    %v1627 = vpop.xlane.xlu0 %1626
    %v1628 = vsel %vm1123, %v1610, -inf
    %1629 = vmax.xlane.f32.xlu0 %v1628
    %v1630 = vpop.xlane.xlu0 %1629
    %v1631 = vsel %vm1123, %v1611, -inf
    %1632 = vmax.xlane.f32.xlu0 %v1631
    %v1633 = vpop.xlane.xlu0 %1632
    %v1634 = vsel %vm1123, %v1612, -inf
    %1635 = vmax.xlane.f32.xlu0 %v1634
    %v1636 = vpop.xlane.xlu0 %1635
    %v1637 = vsel %vm1123, %v1613, -inf
    %1638 = vmax.xlane.f32.xlu0 %v1637
    %v1639 = vpop.xlane.xlu0 %1638
    %v1640 = vsel %vm1123, %v1614, -inf
    %1641 = vmax.xlane.f32.xlu0 %v1640
    %v1642 = vpop.xlane.xlu0 %1641
    %v1643 = vsel %vm1123, %v1615, -inf
    %1644 = vmax.xlane.f32.xlu0 %v1643
    %v1645 = vpop.xlane.xlu0 %1644
    %v1646 = vsel %vm1123, %v1616, -inf
    %1647 = vmax.xlane.f32.xlu0 %v1646
    %v1648 = vpop.xlane.xlu0 %1647
    %v1649 = vsel %vm1123, %v1617, -inf
    %1650 = vmax.xlane.f32.xlu0 %v1649
    %v1651 = vpop.xlane.xlu0 %1650
    %v1652 = vsel %vm1123, %v1618, -inf
    %1653 = vmax.xlane.f32.xlu0 %v1652
    %v1654 = vpop.xlane.xlu0 %1653
    %v1655 = vsel %vm1123, %v1619, -inf
    %1656 = vmax.xlane.f32.xlu0 %v1655
    %v1657 = vpop.xlane.xlu0 %1656
    %v1658 = vsel %vm1123, %v1620, -inf
    %1659 = vmax.xlane.f32.xlu0 %v1658
    %v1660 = vpop.xlane.xlu0 %1659
    %v1661 = vsel %vm1123, %v1621, -inf
    %1662 = vmax.xlane.f32.xlu0 %v1661
    %v1663 = vpop.xlane.xlu0 %1662
    %v1664 = vsel %vm1123, %v1622, -inf
    %1665 = vmax.xlane.f32.xlu0 %v1664
    %v1666 = vpop.xlane.xlu0 %1665
    %v1667 = vsel %vm1123, %v1623, -inf
    %1668 = vmax.xlane.f32.xlu0 %v1667
    %v1669 = vpop.xlane.xlu0 %1668
    %v1670 = vsel %vm1123, %v1624, -inf
    %1671 = vmax.xlane.f32.xlu0 %v1670
    %v1672 = vpop.xlane.xlu0 %1671
    %v1673 = vsub.f32 %v1609, %v1627
    %v1674 = vsub.f32 %v1610, %v1630
    %v1675 = vsub.f32 %v1611, %v1633
    %v1676 = vsub.f32 %v1612, %v1636
    %v1677 = vsub.f32 %v1613, %v1639
    %v1678 = vsub.f32 %v1614, %v1642
    %v1679 = vsub.f32 %v1615, %v1645
    %v1680 = vsub.f32 %v1616, %v1648
    %v1681 = vsub.f32 %v1617, %v1651
    %v1682 = vsub.f32 %v1618, %v1654
    %v1683 = vsub.f32 %v1619, %v1657
    %v1684 = vsub.f32 %v1620, %v1660
    %v1685 = vsub.f32 %v1621, %v1663
    %v1686 = vsub.f32 %v1622, %v1666
    %v1687 = vsub.f32 %v1623, %v1669
    %v1688 = vsub.f32 %v1624, %v1672
    %v1689 = vmul.f32 %v1673, 1.442695
    %v1690 = vpow.pop %v1689
    %v1691 = vmul.f32 %v1674, 1.442695
    %v1692 = vpow.pop %v1691
    %v1693 = vmul.f32 %v1675, 1.442695
    %v1694 = vpow.pop %v1693
    %v1695 = vmul.f32 %v1676, 1.442695
    %v1696 = vpow.pop %v1695
    %v1697 = vmul.f32 %v1677, 1.442695
    %v1698 = vpow.pop %v1697
    %v1699 = vmul.f32 %v1678, 1.442695
    %v1700 = vpow.pop %v1699
    %v1701 = vmul.f32 %v1679, 1.442695
    %v1702 = vpow.pop %v1701
    %v1703 = vmul.f32 %v1680, 1.442695
    %v1704 = vpow.pop %v1703
    %v1705 = vmul.f32 %v1681, 1.442695
    %v1706 = vpow.pop %v1705
    %v1707 = vmul.f32 %v1682, 1.442695
    %v1708 = vpow.pop %v1707
    %v1709 = vmul.f32 %v1683, 1.442695
    %v1710 = vpow.pop %v1709
    %v1711 = vmul.f32 %v1684, 1.442695
    %v1712 = vpow.pop %v1711
    %v1713 = vmul.f32 %v1685, 1.442695
    %v1714 = vpow.pop %v1713
    %v1715 = vmul.f32 %v1686, 1.442695
    %v1716 = vpow.pop %v1715
    %v1717 = vmul.f32 %v1687, 1.442695
    %v1718 = vpow.pop %v1717
    %v1719 = vmul.f32 %v1688, 1.442695
    %v1720 = vpow.pop %v1719
    %v1721 = vsel %vm1123, %v1690, 0.0
    %1722 = vadd.xlane.f32.xlu0 %v1721
    %v1723 = vpop.xlane.xlu0 %1722
    %v1724 = vsel %vm1123, %v1692, 0.0
    %1725 = vadd.xlane.f32.xlu0 %v1724
    %v1726 = vpop.xlane.xlu0 %1725
    %v1727 = vsel %vm1123, %v1694, 0.0
    %1728 = vadd.xlane.f32.xlu0 %v1727
    %v1729 = vpop.xlane.xlu0 %1728
    %v1730 = vsel %vm1123, %v1696, 0.0
    %1731 = vadd.xlane.f32.xlu0 %v1730
    %v1732 = vpop.xlane.xlu0 %1731
    %v1733 = vsel %vm1123, %v1698, 0.0
    %1734 = vadd.xlane.f32.xlu0 %v1733
    %v1735 = vpop.xlane.xlu0 %1734
    %v1736 = vsel %vm1123, %v1700, 0.0
    %1737 = vadd.xlane.f32.xlu0 %v1736
    %v1738 = vpop.xlane.xlu0 %1737
    %v1739 = vsel %vm1123, %v1702, 0.0
    %1740 = vadd.xlane.f32.xlu0 %v1739
    %v1741 = vpop.xlane.xlu0 %1740
    %v1742 = vsel %vm1123, %v1704, 0.0
    %1743 = vadd.xlane.f32.xlu0 %v1742
    %v1744 = vpop.xlane.xlu0 %1743
    %v1745 = vsel %vm1123, %v1706, 0.0
    %1746 = vadd.xlane.f32.xlu0 %v1745
    %v1747 = vpop.xlane.xlu0 %1746
    %v1748 = vsel %vm1123, %v1708, 0.0
    %1749 = vadd.xlane.f32.xlu0 %v1748
    %v1750 = vpop.xlane.xlu0 %1749
    %v1751 = vsel %vm1123, %v1710, 0.0
    %1752 = vadd.xlane.f32.xlu0 %v1751
    %v1753 = vpop.xlane.xlu0 %1752
    %v1754 = vsel %vm1123, %v1712, 0.0
    %1755 = vadd.xlane.f32.xlu0 %v1754
    %v1756 = vpop.xlane.xlu0 %1755
    %v1757 = vsel %vm1123, %v1714, 0.0
    %1758 = vadd.xlane.f32.xlu0 %v1757
    %v1759 = vpop.xlane.xlu0 %1758
    %v1760 = vsel %vm1123, %v1716, 0.0
    %1761 = vadd.xlane.f32.xlu0 %v1760
    %v1762 = vpop.xlane.xlu0 %1761
    %v1763 = vsel %vm1123, %v1718, 0.0
    %1764 = vadd.xlane.f32.xlu0 %v1763
    %v1765 = vpop.xlane.xlu0 %1764
    %v1766 = vsel %vm1123, %v1720, 0.0
    %1767 = vadd.xlane.f32.xlu0 %v1766
    %v1768 = vpop.xlane.xlu0 %1767
    %v1769 = vrcp.pop %v1723
    %v1770 = vrcp.pop %v1726
    %v1771 = vrcp.pop %v1729
    %v1772 = vrcp.pop %v1732
    %v1773 = vrcp.pop %v1735
    %v1774 = vrcp.pop %v1738
    %v1775 = vrcp.pop %v1741
    %v1776 = vrcp.pop %v1744
    %v1777 = vrcp.pop %v1747
    %v1778 = vrcp.pop %v1750
    %v1779 = vrcp.pop %v1753
    %v1780 = vrcp.pop %v1756
    %v1781 = vrcp.pop %v1759
    %v1782 = vrcp.pop %v1762
    %v1783 = vrcp.pop %v1765
    %v1784 = vrcp.pop %v1768
    %v1785 = vmul.f32 %v1690, %v1769
    %v1786 = vmul.f32 %v1692, %v1770
    %v1787 = vmul.f32 %v1694, %v1771
    %v1788 = vmul.f32 %v1696, %v1772
    %v1789 = vmul.f32 %v1698, %v1773
    %v1790 = vmul.f32 %v1700, %v1774
    %v1791 = vmul.f32 %v1702, %v1775
    %v1792 = vmul.f32 %v1704, %v1776
    %v1793 = vmul.f32 %v1706, %v1777
    %v1794 = vmul.f32 %v1708, %v1778
    %v1795 = vmul.f32 %v1710, %v1779
    %v1796 = vmul.f32 %v1712, %v1780
    %v1797 = vmul.f32 %v1714, %v1781
    %v1798 = vmul.f32 %v1716, %v1782
    %v1799 = vmul.f32 %v1718, %v1783
    %v1800 = vmul.f32 %v1720, %v1784
    %v1801 = vpack.c.bf16 %v1786, %v1785
    %v1802 = vpack.c.bf16 %v1788, %v1787
    %v1803 = vpack.c.bf16 %v1790, %v1789
    %v1804 = vpack.c.bf16 %v1792, %v1791
    %v1805 = vpack.c.bf16 %v1794, %v1793
    %v1806 = vpack.c.bf16 %v1796, %v1795
    %v1807 = vpack.c.bf16 %v1798, %v1797
    %v1808 = vpack.c.bf16 %v1800, %v1799
    %v1810 = vsel %vm1123, %v1801, 0
    %v1813 = vsel %vm1123, %v1802, 0
    %v1816 = vsel %vm1123, %v1803, 0
    %v1819 = vsel %vm1123, %v1804, 0
    %v1822 = vsel %vm1123, %v1805, 0
    %v1825 = vsel %vm1123, %v1806, 0
    %v1828 = vsel %vm1123, %v1807, 0
    %v1831 = vsel %vm1123, %v1808, 0
    %1833 = vmatprep.subr.bf16.mxu0 0
    %1834 = vmatpush1.bf16.msra.mxu0 %v1357
    %1835 = vmatprep.subr.bf16.mxu0 0
    %1836 = vmatpush1.bf16.msra.mxu0 %v1358
    %1837 = vmatprep.subr.bf16.mxu0 0
    %1838 = vmatpush1.bf16.msra.mxu0 %v1359
    %1839 = vmatprep.subr.bf16.mxu0 0
    %1840 = vmatpush1.bf16.msra.mxu0 %v1360
    %1841 = vmatprep.subr.bf16.mxu0 0
    %1842 = vmatpush1.bf16.msra.mxu0 0
    %1843 = vmatprep.subr.bf16.mxu0 0
    %1844 = vmatpush1.bf16.msra.mxu0 0
    %1845 = vmatprep.subr.bf16.mxu0 0
    %1846 = vmatpush1.bf16.msra.mxu0 0
    %1847 = vmatprep.subr.bf16.mxu0 0
    %1848 = vmatpush1.bf16.msra.mxu0 0
    %1849 = vmatprep.subr.bf16.mxu0 0
    %1850 = vmatpush1.bf16.msra.mxu0 0
    %1851 = vmatprep.subr.bf16.mxu0 0
    %1852 = vmatpush1.bf16.msra.mxu0 0
    %1853 = vmatprep.subr.bf16.mxu0 0
    %1854 = vmatpush1.bf16.msra.mxu0 0
    %1855 = vmatprep.subr.bf16.mxu0 0
    %1856 = vmatpush1.bf16.msra.mxu0 0
    %1857 = vmatprep.subr.bf16.mxu0 0
    %1858 = vmatpush1.bf16.msra.mxu0 0
    %1859 = vmatprep.subr.bf16.mxu0 0
    %1860 = vmatpush1.bf16.msra.mxu0 0
    %1861 = vmatprep.subr.bf16.mxu0 0
    %1862 = vmatpush1.bf16.msra.mxu0 0
    %1863 = vmatprep.subr.bf16.mxu0 0
    %1864 = vmatpush1.bf16.msra.mxu0 0
    %1865 = vmatprep.mubr.bf16.mxu0 0
    %1866 = vmatmul.mubr.bf16.gmra.mrb[0].mxu0 %v1810
    %v1867 = vpop.f32.mrb[0].mxu0
    %v1868 = vadd.f32 0.0, %v1867
    %v1869 = vpop.f32.mrb[0].mxu0
    %v1870 = vpop.f32.mrb[0].mxu0
    %v1871 = vadd.f32 0.0, %v1870
    %v1872 = vpop.f32.mrb[0].mxu0
    %1873 = vmatprep.mubr.bf16.mxu0 0
    %1874 = vmatmul.mubr.bf16.gmra.mrb[0].mxu0 %v1813
    %v1875 = vpop.f32.mrb[0].mxu0
    %v1876 = vadd.f32 0.0, %v1875
    %v1877 = vpop.f32.mrb[0].mxu0
    %v1878 = vpop.f32.mrb[0].mxu0
    %v1879 = vadd.f32 0.0, %v1878
    %v1880 = vpop.f32.mrb[0].mxu0
    %1881 = vmatprep.mubr.bf16.mxu0 0
    %1882 = vmatmul.mubr.bf16.gmra.mrb[0].mxu0 %v1816
    %v1883 = vpop.f32.mrb[0].mxu0
    %v1884 = vadd.f32 0.0, %v1883
    %v1885 = vpop.f32.mrb[0].mxu0
    %v1886 = vpop.f32.mrb[0].mxu0
    %v1887 = vadd.f32 0.0, %v1886
    %v1888 = vpop.f32.mrb[0].mxu0
    %1889 = vmatprep.mubr.bf16.mxu0 0
    %1890 = vmatmul.mubr.bf16.gmra.mrb[0].mxu0 %v1819
    %v1891 = vpop.f32.mrb[0].mxu0
    %v1892 = vadd.f32 0.0, %v1891
    %v1893 = vpop.f32.mrb[0].mxu0
    %v1894 = vpop.f32.mrb[0].mxu0
    %v1895 = vadd.f32 0.0, %v1894
    %v1896 = vpop.f32.mrb[0].mxu0
    %1897 = vmatprep.mubr.bf16.mxu0 0
    %1898 = vmatmul.mubr.bf16.gmra.mrb[0].mxu0 %v1822
    %v1899 = vpop.f32.mrb[0].mxu0
    %v1900 = vadd.f32 0.0, %v1899
    %v1901 = vpop.f32.mrb[0].mxu0
    %v1902 = vpop.f32.mrb[0].mxu0
    %v1903 = vadd.f32 0.0, %v1902
    %v1904 = vpop.f32.mrb[0].mxu0
    %1905 = vmatprep.mubr.bf16.mxu0 0
    %1906 = vmatmul.mubr.bf16.gmra.mrb[0].mxu0 %v1825
    %v1907 = vpop.f32.mrb[0].mxu0
    %v1908 = vadd.f32 0.0, %v1907
    %v1909 = vpop.f32.mrb[0].mxu0
    %v1910 = vpop.f32.mrb[0].mxu0
    %v1911 = vadd.f32 0.0, %v1910
    %v1912 = vpop.f32.mrb[0].mxu0
    %1913 = vmatprep.mubr.bf16.mxu0 0
    %1914 = vmatmul.mubr.bf16.gmra.mrb[0].mxu0 %v1828
    %v1915 = vpop.f32.mrb[0].mxu0
    %v1916 = vadd.f32 0.0, %v1915
    %v1917 = vpop.f32.mrb[0].mxu0
    %v1918 = vpop.f32.mrb[0].mxu0
    %v1919 = vadd.f32 0.0, %v1918
    %v1920 = vpop.f32.mrb[0].mxu0
    %1921 = vmatprep.mubr.bf16.mxu0 0
    %1922 = vmatmul.mubr.bf16.gmra.mrb[0].mxu0 %v1831
    %v1923 = vpop.f32.mrb[0].mxu0
    %v1924 = vadd.f32 0.0, %v1923
    %v1925 = vpop.f32.mrb[0].mxu0
    %v1926 = vpop.f32.mrb[0].mxu0
    %v1927 = vadd.f32 0.0, %v1926
    %v1928 = vpop.f32.mrb[0].mxu0
    %1929 = vdwg.mxu0
    %1934 = vrot.lane.b32.xlu0 %v1417, 96
    %v1935 = vpop.permute.xlu0 %1934
    %1936 = vrot.lane.b32.xlu0 %v1418, 96
    %v1937 = vpop.permute.xlu0 %1936
    %1938 = vrot.lane.b32.xlu0 %v1419, 96
    %v1939 = vpop.permute.xlu0 %1938
    %1940 = vrot.lane.b32.xlu0 %v1420, 96
    %v1941 = vpop.permute.xlu0 %1940
    %v1943 = vsel %vm1026, %v1417, 0
    %v1946 = vsel %vm1026, %v1418, 0
    %v1949 = vsel %vm1026, %v1419, 0
    %v1952 = vsel %vm1026, %v1420, 0
    %v1955 = vsel %vm1026, %v1935, 0
    %v1958 = vsel %vm1026, %v1937, 0
    %v1961 = vsel %vm1026, %v1939, 0
    %v1964 = vsel %vm1026, %v1941, 0
    %v1967 = vsel %vm1026, %v1353, 0
    %v1970 = vsel %vm1026, %v1354, 0
    %v1973 = vsel %vm1026, %v1355, 0
    %v1976 = vsel %vm1026, %v1356, 0
    %1978 = vmatprep.subr.bf16.mxu0 0
    %1979 = vmatpush1.bf16.xpose.msra.mxu0 %v1967
    %1980 = vmatprep.subr.bf16.mxu0 0
    %1981 = vmatpush1.bf16.xpose.msra.mxu0 %v1970
    %1982 = vmatprep.subr.bf16.mxu0 0
    %1983 = vmatpush1.bf16.xpose.msra.mxu0 %v1973
    %1984 = vmatprep.subr.bf16.mxu0 0
    %1985 = vmatpush1.bf16.xpose.msra.mxu0 %v1976
    %1986 = vmatprep.subr.bf16.mxu0 0
    %1987 = vmatpush1.bf16.xpose.msra.mxu0 0
    %1988 = vmatprep.subr.bf16.mxu0 0
    %1989 = vmatpush1.bf16.xpose.msra.mxu0 0
    %1990 = vmatprep.subr.bf16.mxu0 0
    %1991 = vmatpush1.bf16.xpose.msra.mxu0 0
    %1992 = vmatprep.subr.bf16.mxu0 0
    %1993 = vmatpush1.bf16.xpose.msra.mxu0 0
    %1994 = vmatprep.subr.bf16.mxu0 0
    %1995 = vmatpush1.bf16.xpose.msra.mxu0 0
    %1996 = vmatprep.subr.bf16.mxu0 0
    %1997 = vmatpush1.bf16.xpose.msra.mxu0 0
    %1998 = vmatprep.subr.bf16.mxu0 0
    %1999 = vmatpush1.bf16.xpose.msra.mxu0 0
    %2000 = vmatprep.subr.bf16.mxu0 0
    %2001 = vmatpush1.bf16.xpose.msra.mxu0 0
    %2002 = vmatprep.subr.bf16.mxu0 0
    %2003 = vmatpush1.bf16.xpose.msra.mxu0 0
    %2004 = vmatprep.subr.bf16.mxu0 0
    %2005 = vmatpush1.bf16.xpose.msra.mxu0 0
    %2006 = vmatprep.subr.bf16.mxu0 0
    %2007 = vmatpush1.bf16.xpose.msra.mxu0 0
    %2008 = vmatprep.subr.bf16.mxu0 0
    %2009 = vmatpush1.bf16.xpose.msra.mxu0 0
    %2010 = vmatprep.mubr.bf16.mxu0 0
    %2011 = vmatmul.mubr.bf16.gmra.mrb[0].mxu0 %v1943
    %v2012 = vpop.f32.mrb[0].mxu0
    %v2013 = vadd.f32 0.0, %v2012
    %v2014 = vpop.f32.mrb[0].mxu0
    %v2015 = vpop.f32.mrb[0].mxu0
    %v2016 = vadd.f32 0.0, %v2015
    %v2017 = vpop.f32.mrb[0].mxu0
    %2018 = vmatprep.mubr.bf16.mxu0 0
    %2019 = vmatmul.mubr.bf16.gmra.mrb[0].mxu0 %v1946
    %v2020 = vpop.f32.mrb[0].mxu0
    %v2021 = vadd.f32 0.0, %v2020
    %v2022 = vpop.f32.mrb[0].mxu0
    %v2023 = vpop.f32.mrb[0].mxu0
    %v2024 = vadd.f32 0.0, %v2023
    %v2025 = vpop.f32.mrb[0].mxu0
    %2026 = vmatprep.mubr.bf16.mxu0 0
    %2027 = vmatmul.mubr.bf16.gmra.mrb[0].mxu0 %v1949
    %v2028 = vpop.f32.mrb[0].mxu0
    %v2029 = vadd.f32 0.0, %v2028
    %v2030 = vpop.f32.mrb[0].mxu0
    %v2031 = vpop.f32.mrb[0].mxu0
    %v2032 = vadd.f32 0.0, %v2031
    %v2033 = vpop.f32.mrb[0].mxu0
    %2034 = vmatprep.mubr.bf16.mxu0 0
    %2035 = vmatmul.mubr.bf16.gmra.mrb[0].mxu0 %v1952
    %v2036 = vpop.f32.mrb[0].mxu0
    %v2037 = vadd.f32 0.0, %v2036
    %v2038 = vpop.f32.mrb[0].mxu0
    %v2039 = vpop.f32.mrb[0].mxu0
    %v2040 = vadd.f32 0.0, %v2039
    %v2041 = vpop.f32.mrb[0].mxu0
    %2042 = vmatprep.mubr.bf16.mxu0 0
    %2043 = vmatmul.mubr.bf16.gmra.mrb[0].mxu0 %v1955
    %v2044 = vpop.f32.mrb[0].mxu0
    %v2045 = vadd.f32 0.0, %v2044
    %v2046 = vpop.f32.mrb[0].mxu0
    %v2047 = vpop.f32.mrb[0].mxu0
    %v2048 = vadd.f32 0.0, %v2047
    %v2049 = vpop.f32.mrb[0].mxu0
    %2050 = vmatprep.mubr.bf16.mxu0 0
    %2051 = vmatmul.mubr.bf16.gmra.mrb[0].mxu0 %v1958
    %v2052 = vpop.f32.mrb[0].mxu0
    %v2053 = vadd.f32 0.0, %v2052
    %v2054 = vpop.f32.mrb[0].mxu0
    %v2055 = vpop.f32.mrb[0].mxu0
    %v2056 = vadd.f32 0.0, %v2055
    %v2057 = vpop.f32.mrb[0].mxu0
    %2058 = vmatprep.mubr.bf16.mxu0 0
    %2059 = vmatmul.mubr.bf16.gmra.mrb[0].mxu0 %v1961
    %v2060 = vpop.f32.mrb[0].mxu0
    %v2061 = vadd.f32 0.0, %v2060
    %v2062 = vpop.f32.mrb[0].mxu0
    %v2063 = vpop.f32.mrb[0].mxu0
    %v2064 = vadd.f32 0.0, %v2063
    %v2065 = vpop.f32.mrb[0].mxu0
    %2066 = vmatprep.mubr.bf16.mxu0 0
    %2067 = vmatmul.mubr.bf16.gmra.mrb[0].mxu0 %v1964
    %v2068 = vpop.f32.mrb[0].mxu0
    %v2069 = vadd.f32 0.0, %v2068
    %v2070 = vpop.f32.mrb[0].mxu0
    %v2071 = vpop.f32.mrb[0].mxu0
    %v2072 = vadd.f32 0.0, %v2071
    %v2073 = vpop.f32.mrb[0].mxu0
    %2074 = vdwg.mxu0
    %v2075 = vmul.f32 %v2013, 0.17677669
    %v2076 = vmul.f32 %v2016, 0.17677669
    %v2077 = vmul.f32 %v2021, 0.17677669
    %v2078 = vmul.f32 %v2024, 0.17677669
    %v2079 = vmul.f32 %v2029, 0.17677669
    %v2080 = vmul.f32 %v2032, 0.17677669
    %v2081 = vmul.f32 %v2037, 0.17677669
    %v2082 = vmul.f32 %v2040, 0.17677669
    %v2083 = vmul.f32 %v2045, 0.17677669
    %v2084 = vmul.f32 %v2048, 0.17677669
    %v2085 = vmul.f32 %v2053, 0.17677669
    %v2086 = vmul.f32 %v2056, 0.17677669
    %v2087 = vmul.f32 %v2061, 0.17677669
    %v2088 = vmul.f32 %v2064, 0.17677669
    %v2089 = vmul.f32 %v2069, 0.17677669
    %v2090 = vmul.f32 %v2072, 0.17677669
    %v2091 = vadd.f32 %v2075, %v1440
    %v2092 = vadd.f32 %v2076, %v1441
    %v2093 = vadd.f32 %v2077, %v1442
    %v2094 = vadd.f32 %v2078, %v1443
    %v2095 = vadd.f32 %v2079, %v1444
    %v2096 = vadd.f32 %v2080, %v1445
    %v2097 = vadd.f32 %v2081, %v1446
    %v2098 = vadd.f32 %v2082, %v1447
    %v2099 = vadd.f32 %v2083, %v1440
    %v2100 = vadd.f32 %v2084, %v1441
    %v2101 = vadd.f32 %v2085, %v1442
    %v2102 = vadd.f32 %v2086, %v1443
    %v2103 = vadd.f32 %v2087, %v1444
    %v2104 = vadd.f32 %v2088, %v1445
    %v2105 = vadd.f32 %v2089, %v1446
    %v2106 = vadd.f32 %v2090, %v1447
    %v2107 = vsel %vm1123, %v2091, -inf
    %2108 = vmax.xlane.f32.xlu0 %v2107
    %v2109 = vpop.xlane.xlu0 %2108
    %v2110 = vsel %vm1123, %v2092, -inf
    %2111 = vmax.xlane.f32.xlu0 %v2110
    %v2112 = vpop.xlane.xlu0 %2111
    %v2113 = vsel %vm1123, %v2093, -inf
    %2114 = vmax.xlane.f32.xlu0 %v2113
    %v2115 = vpop.xlane.xlu0 %2114
    %v2116 = vsel %vm1123, %v2094, -inf
    %2117 = vmax.xlane.f32.xlu0 %v2116
    %v2118 = vpop.xlane.xlu0 %2117
    %v2119 = vsel %vm1123, %v2095, -inf
    %2120 = vmax.xlane.f32.xlu0 %v2119
    %v2121 = vpop.xlane.xlu0 %2120
    %v2122 = vsel %vm1123, %v2096, -inf
    %2123 = vmax.xlane.f32.xlu0 %v2122
    %v2124 = vpop.xlane.xlu0 %2123
    %v2125 = vsel %vm1123, %v2097, -inf
    %2126 = vmax.xlane.f32.xlu0 %v2125
    %v2127 = vpop.xlane.xlu0 %2126
    %v2128 = vsel %vm1123, %v2098, -inf
    %2129 = vmax.xlane.f32.xlu0 %v2128
    %v2130 = vpop.xlane.xlu0 %2129
    %v2131 = vsel %vm1123, %v2099, -inf
    %2132 = vmax.xlane.f32.xlu0 %v2131
    %v2133 = vpop.xlane.xlu0 %2132
    %v2134 = vsel %vm1123, %v2100, -inf
    %2135 = vmax.xlane.f32.xlu0 %v2134
    %v2136 = vpop.xlane.xlu0 %2135
    %v2137 = vsel %vm1123, %v2101, -inf
    %2138 = vmax.xlane.f32.xlu0 %v2137
    %v2139 = vpop.xlane.xlu0 %2138
    %v2140 = vsel %vm1123, %v2102, -inf
    %2141 = vmax.xlane.f32.xlu0 %v2140
    %v2142 = vpop.xlane.xlu0 %2141
    %v2143 = vsel %vm1123, %v2103, -inf
    %2144 = vmax.xlane.f32.xlu0 %v2143
    %v2145 = vpop.xlane.xlu0 %2144
    %v2146 = vsel %vm1123, %v2104, -inf
    %2147 = vmax.xlane.f32.xlu0 %v2146
    %v2148 = vpop.xlane.xlu0 %2147
    %v2149 = vsel %vm1123, %v2105, -inf
    %2150 = vmax.xlane.f32.xlu0 %v2149
    %v2151 = vpop.xlane.xlu0 %2150
    %v2152 = vsel %vm1123, %v2106, -inf
    %2153 = vmax.xlane.f32.xlu0 %v2152
    %v2154 = vpop.xlane.xlu0 %2153
    %v2155 = vsub.f32 %v2091, %v2109
    %v2156 = vsub.f32 %v2092, %v2112
    %v2157 = vsub.f32 %v2093, %v2115
    %v2158 = vsub.f32 %v2094, %v2118
    %v2159 = vsub.f32 %v2095, %v2121
    %v2160 = vsub.f32 %v2096, %v2124
    %v2161 = vsub.f32 %v2097, %v2127
    %v2162 = vsub.f32 %v2098, %v2130
    %v2163 = vsub.f32 %v2099, %v2133
    %v2164 = vsub.f32 %v2100, %v2136
    %v2165 = vsub.f32 %v2101, %v2139
    %v2166 = vsub.f32 %v2102, %v2142
    %v2167 = vsub.f32 %v2103, %v2145
    %v2168 = vsub.f32 %v2104, %v2148
    %v2169 = vsub.f32 %v2105, %v2151
    %v2170 = vsub.f32 %v2106, %v2154
    %v2171 = vmul.f32 %v2155, 1.442695
    %v2172 = vpow.pop %v2171
    %v2173 = vmul.f32 %v2156, 1.442695
    %v2174 = vpow.pop %v2173
    %v2175 = vmul.f32 %v2157, 1.442695
    %v2176 = vpow.pop %v2175
    %v2177 = vmul.f32 %v2158, 1.442695
    %v2178 = vpow.pop %v2177
    %v2179 = vmul.f32 %v2159, 1.442695
    %v2180 = vpow.pop %v2179
    %v2181 = vmul.f32 %v2160, 1.442695
    %v2182 = vpow.pop %v2181
    %v2183 = vmul.f32 %v2161, 1.442695
    %v2184 = vpow.pop %v2183
    %v2185 = vmul.f32 %v2162, 1.442695
    %v2186 = vpow.pop %v2185
    %v2187 = vmul.f32 %v2163, 1.442695
    %v2188 = vpow.pop %v2187
    %v2189 = vmul.f32 %v2164, 1.442695
    %v2190 = vpow.pop %v2189
    %v2191 = vmul.f32 %v2165, 1.442695
    %v2192 = vpow.pop %v2191
    %v2193 = vmul.f32 %v2166, 1.442695
    %v2194 = vpow.pop %v2193
    %v2195 = vmul.f32 %v2167, 1.442695
    %v2196 = vpow.pop %v2195
    %v2197 = vmul.f32 %v2168, 1.442695
    %v2198 = vpow.pop %v2197
    %v2199 = vmul.f32 %v2169, 1.442695
    %v2200 = vpow.pop %v2199
    %v2201 = vmul.f32 %v2170, 1.442695
    %v2202 = vpow.pop %v2201
    %v2203 = vsel %vm1123, %v2172, 0.0
    %2204 = vadd.xlane.f32.xlu0 %v2203
    %v2205 = vpop.xlane.xlu0 %2204
    %v2206 = vsel %vm1123, %v2174, 0.0
    %2207 = vadd.xlane.f32.xlu0 %v2206
    %v2208 = vpop.xlane.xlu0 %2207
    %v2209 = vsel %vm1123, %v2176, 0.0
    %2210 = vadd.xlane.f32.xlu0 %v2209
    %v2211 = vpop.xlane.xlu0 %2210
    %v2212 = vsel %vm1123, %v2178, 0.0
    %2213 = vadd.xlane.f32.xlu0 %v2212
    %v2214 = vpop.xlane.xlu0 %2213
    %v2215 = vsel %vm1123, %v2180, 0.0
    %2216 = vadd.xlane.f32.xlu0 %v2215
    %v2217 = vpop.xlane.xlu0 %2216
    %v2218 = vsel %vm1123, %v2182, 0.0
    %2219 = vadd.xlane.f32.xlu0 %v2218
    %v2220 = vpop.xlane.xlu0 %2219
    %v2221 = vsel %vm1123, %v2184, 0.0
    %2222 = vadd.xlane.f32.xlu0 %v2221
    %v2223 = vpop.xlane.xlu0 %2222
    %v2224 = vsel %vm1123, %v2186, 0.0
    %2225 = vadd.xlane.f32.xlu0 %v2224
    %v2226 = vpop.xlane.xlu0 %2225
    %v2227 = vsel %vm1123, %v2188, 0.0
    %2228 = vadd.xlane.f32.xlu0 %v2227
    %v2229 = vpop.xlane.xlu0 %2228
    %v2230 = vsel %vm1123, %v2190, 0.0
    %2231 = vadd.xlane.f32.xlu0 %v2230
    %v2232 = vpop.xlane.xlu0 %2231
    %v2233 = vsel %vm1123, %v2192, 0.0
    %2234 = vadd.xlane.f32.xlu0 %v2233
    %v2235 = vpop.xlane.xlu0 %2234
    %v2236 = vsel %vm1123, %v2194, 0.0
    %2237 = vadd.xlane.f32.xlu0 %v2236
    %v2238 = vpop.xlane.xlu0 %2237
    %v2239 = vsel %vm1123, %v2196, 0.0
    %2240 = vadd.xlane.f32.xlu0 %v2239
    %v2241 = vpop.xlane.xlu0 %2240
    %v2242 = vsel %vm1123, %v2198, 0.0
    %2243 = vadd.xlane.f32.xlu0 %v2242
    %v2244 = vpop.xlane.xlu0 %2243
    %v2245 = vsel %vm1123, %v2200, 0.0
    %2246 = vadd.xlane.f32.xlu0 %v2245
    %v2247 = vpop.xlane.xlu0 %2246
    %v2248 = vsel %vm1123, %v2202, 0.0
    %2249 = vadd.xlane.f32.xlu0 %v2248
    %v2250 = vpop.xlane.xlu0 %2249
    %v2251 = vrcp.pop %v2205
    %v2252 = vrcp.pop %v2208
    %v2253 = vrcp.pop %v2211
    %v2254 = vrcp.pop %v2214
    %v2255 = vrcp.pop %v2217
    %v2256 = vrcp.pop %v2220
    %v2257 = vrcp.pop %v2223
    %v2258 = vrcp.pop %v2226
    %v2259 = vrcp.pop %v2229
    %v2260 = vrcp.pop %v2232
    %v2261 = vrcp.pop %v2235
    %v2262 = vrcp.pop %v2238
    %v2263 = vrcp.pop %v2241
    %v2264 = vrcp.pop %v2244
    %v2265 = vrcp.pop %v2247
    %v2266 = vrcp.pop %v2250
    %v2267 = vmul.f32 %v2172, %v2251
    %v2268 = vmul.f32 %v2174, %v2252
    %v2269 = vmul.f32 %v2176, %v2253
    %v2270 = vmul.f32 %v2178, %v2254
    %v2271 = vmul.f32 %v2180, %v2255
    %v2272 = vmul.f32 %v2182, %v2256
    %v2273 = vmul.f32 %v2184, %v2257
    %v2274 = vmul.f32 %v2186, %v2258
    %v2275 = vmul.f32 %v2188, %v2259
    %v2276 = vmul.f32 %v2190, %v2260
    %v2277 = vmul.f32 %v2192, %v2261
    %v2278 = vmul.f32 %v2194, %v2262
    %v2279 = vmul.f32 %v2196, %v2263
    %v2280 = vmul.f32 %v2198, %v2264
    %v2281 = vmul.f32 %v2200, %v2265
    %v2282 = vmul.f32 %v2202, %v2266
    %v2283 = vpack.c.bf16 %v2268, %v2267
    %v2284 = vpack.c.bf16 %v2270, %v2269
    %v2285 = vpack.c.bf16 %v2272, %v2271
    %v2286 = vpack.c.bf16 %v2274, %v2273
    %v2287 = vpack.c.bf16 %v2276, %v2275
    %v2288 = vpack.c.bf16 %v2278, %v2277
    %v2289 = vpack.c.bf16 %v2280, %v2279
    %v2290 = vpack.c.bf16 %v2282, %v2281
    %v2292 = vsel %vm1123, %v2283, 0
    %v2295 = vsel %vm1123, %v2284, 0
    %v2298 = vsel %vm1123, %v2285, 0
    %v2301 = vsel %vm1123, %v2286, 0
    %v2304 = vsel %vm1123, %v2287, 0
    %v2307 = vsel %vm1123, %v2288, 0
    %v2310 = vsel %vm1123, %v2289, 0
    %v2313 = vsel %vm1123, %v2290, 0
    %2315 = vmatprep.subr.bf16.mxu0 0
    %2316 = vmatpush1.bf16.msra.mxu0 %v1361
    %2317 = vmatprep.subr.bf16.mxu0 0
    %2318 = vmatpush1.bf16.msra.mxu0 %v1362
    %2319 = vmatprep.subr.bf16.mxu0 0
    %2320 = vmatpush1.bf16.msra.mxu0 %v1363
    %2321 = vmatprep.subr.bf16.mxu0 0
    %2322 = vmatpush1.bf16.msra.mxu0 %v1364
    %2323 = vmatprep.subr.bf16.mxu0 0
    %2324 = vmatpush1.bf16.msra.mxu0 0
    %2325 = vmatprep.subr.bf16.mxu0 0
    %2326 = vmatpush1.bf16.msra.mxu0 0
    %2327 = vmatprep.subr.bf16.mxu0 0
    %2328 = vmatpush1.bf16.msra.mxu0 0
    %2329 = vmatprep.subr.bf16.mxu0 0
    %2330 = vmatpush1.bf16.msra.mxu0 0
    %2331 = vmatprep.subr.bf16.mxu0 0
    %2332 = vmatpush1.bf16.msra.mxu0 0
    %2333 = vmatprep.subr.bf16.mxu0 0
    %2334 = vmatpush1.bf16.msra.mxu0 0
    %2335 = vmatprep.subr.bf16.mxu0 0
    %2336 = vmatpush1.bf16.msra.mxu0 0
    %2337 = vmatprep.subr.bf16.mxu0 0
    %2338 = vmatpush1.bf16.msra.mxu0 0
    %2339 = vmatprep.subr.bf16.mxu0 0
    %2340 = vmatpush1.bf16.msra.mxu0 0
    %2341 = vmatprep.subr.bf16.mxu0 0
    %2342 = vmatpush1.bf16.msra.mxu0 0
    %2343 = vmatprep.subr.bf16.mxu0 0
    %2344 = vmatpush1.bf16.msra.mxu0 0
    %2345 = vmatprep.subr.bf16.mxu0 0
    %2346 = vmatpush1.bf16.msra.mxu0 0
    %2347 = vmatprep.mubr.bf16.mxu0 0
    %2348 = vmatmul.mubr.bf16.gmra.mrb[0].mxu0 %v2292
    %v2349 = vpop.f32.mrb[0].mxu0
    %v2350 = vadd.f32 0.0, %v2349
    %v2351 = vpop.f32.mrb[0].mxu0
    %v2352 = vpop.f32.mrb[0].mxu0
    %v2353 = vadd.f32 0.0, %v2352
    %v2354 = vpop.f32.mrb[0].mxu0
    %2355 = vmatprep.mubr.bf16.mxu0 0
    %2356 = vmatmul.mubr.bf16.gmra.mrb[0].mxu0 %v2295
    %v2357 = vpop.f32.mrb[0].mxu0
    %v2358 = vadd.f32 0.0, %v2357
    %v2359 = vpop.f32.mrb[0].mxu0
    %v2360 = vpop.f32.mrb[0].mxu0
    %v2361 = vadd.f32 0.0, %v2360
    %v2362 = vpop.f32.mrb[0].mxu0
    %2363 = vmatprep.mubr.bf16.mxu0 0
    %2364 = vmatmul.mubr.bf16.gmra.mrb[0].mxu0 %v2298
    %v2365 = vpop.f32.mrb[0].mxu0
    %v2366 = vadd.f32 0.0, %v2365
    %v2367 = vpop.f32.mrb[0].mxu0
    %v2368 = vpop.f32.mrb[0].mxu0
    %v2369 = vadd.f32 0.0, %v2368
    %v2370 = vpop.f32.mrb[0].mxu0
    %2371 = vmatprep.mubr.bf16.mxu0 0
    %2372 = vmatmul.mubr.bf16.gmra.mrb[0].mxu0 %v2301
    %v2373 = vpop.f32.mrb[0].mxu0
    %v2374 = vadd.f32 0.0, %v2373
    %v2375 = vpop.f32.mrb[0].mxu0
    %v2376 = vpop.f32.mrb[0].mxu0
    %v2377 = vadd.f32 0.0, %v2376
    %v2378 = vpop.f32.mrb[0].mxu0
    %2379 = vmatprep.mubr.bf16.mxu0 0
    %2380 = vmatmul.mubr.bf16.gmra.mrb[0].mxu0 %v2304
    %v2381 = vpop.f32.mrb[0].mxu0
    %v2382 = vadd.f32 0.0, %v2381
    %v2383 = vpop.f32.mrb[0].mxu0
    %v2384 = vpop.f32.mrb[0].mxu0
    %v2385 = vadd.f32 0.0, %v2384
    %v2386 = vpop.f32.mrb[0].mxu0
    %2387 = vmatprep.mubr.bf16.mxu0 0
    %2388 = vmatmul.mubr.bf16.gmra.mrb[0].mxu0 %v2307
    %v2389 = vpop.f32.mrb[0].mxu0
    %v2390 = vadd.f32 0.0, %v2389
    %v2391 = vpop.f32.mrb[0].mxu0
    %v2392 = vpop.f32.mrb[0].mxu0
    %v2393 = vadd.f32 0.0, %v2392
    %v2394 = vpop.f32.mrb[0].mxu0
    %2395 = vmatprep.mubr.bf16.mxu0 0
    %2396 = vmatmul.mubr.bf16.gmra.mrb[0].mxu0 %v2310
    %v2397 = vpop.f32.mrb[0].mxu0
    %v2398 = vadd.f32 0.0, %v2397
    %v2399 = vpop.f32.mrb[0].mxu0
    %v2400 = vpop.f32.mrb[0].mxu0
    %v2401 = vadd.f32 0.0, %v2400
    %v2402 = vpop.f32.mrb[0].mxu0
    %2403 = vmatprep.mubr.bf16.mxu0 0
    %2404 = vmatmul.mubr.bf16.gmra.mrb[0].mxu0 %v2313
    %v2405 = vpop.f32.mrb[0].mxu0
    %v2406 = vadd.f32 0.0, %v2405
    %v2407 = vpop.f32.mrb[0].mxu0
    %v2408 = vpop.f32.mrb[0].mxu0
    %v2409 = vadd.f32 0.0, %v2408
    %v2410 = vpop.f32.mrb[0].mxu0
    %2411 = vdwg.mxu0
    %2412 = vrot.lane.b32.xlu0 %v1413, 64
    %v2413 = vpop.permute.xlu0 %2412
    %2414 = vrot.lane.b32.xlu0 %v1414, 64
    %v2415 = vpop.permute.xlu0 %2414
    %2416 = vrot.lane.b32.xlu0 %v1415, 64
    %v2417 = vpop.permute.xlu0 %2416
    %2418 = vrot.lane.b32.xlu0 %v1416, 64
    %v2419 = vpop.permute.xlu0 %2418
    %2420 = vrot.lane.b32.xlu0 %v1453, 64
    %v2421 = vpop.permute.xlu0 %2420
    %2422 = vrot.lane.b32.xlu0 %v1455, 64
    %v2423 = vpop.permute.xlu0 %2422
    %2424 = vrot.lane.b32.xlu0 %v1457, 64
    %v2425 = vpop.permute.xlu0 %2424
    %2426 = vrot.lane.b32.xlu0 %v1459, 64
    %v2427 = vpop.permute.xlu0 %2426
    %2432 = vrot.lane.b32.xlu0 %v1349, 96
    %v2433 = vpop.permute.xlu0 %2432
    %2434 = vrot.lane.b32.xlu0 %v1350, 96
    %v2435 = vpop.permute.xlu0 %2434
    %2436 = vrot.lane.b32.xlu0 %v1351, 96
    %v2437 = vpop.permute.xlu0 %2436
    %2438 = vrot.lane.b32.xlu0 %v1352, 96
    %v2439 = vpop.permute.xlu0 %2438
    %v2441 = vsel %vm1026, %v2413, 0
    %v2444 = vsel %vm1026, %v2415, 0
    %v2447 = vsel %vm1026, %v2417, 0
    %v2450 = vsel %vm1026, %v2419, 0
    %v2453 = vsel %vm1026, %v2421, 0
    %v2456 = vsel %vm1026, %v2423, 0
    %v2459 = vsel %vm1026, %v2425, 0
    %v2462 = vsel %vm1026, %v2427, 0
    %v2465 = vsel %vm1026, %v2433, 0
    %v2468 = vsel %vm1026, %v2435, 0
    %v2471 = vsel %vm1026, %v2437, 0
    %v2474 = vsel %vm1026, %v2439, 0
    %2476 = vmatprep.subr.bf16.mxu0 0
    %2477 = vmatpush1.bf16.xpose.msra.mxu0 %v2465
    %2478 = vmatprep.subr.bf16.mxu0 0
    %2479 = vmatpush1.bf16.xpose.msra.mxu0 %v2468
    %2480 = vmatprep.subr.bf16.mxu0 0
    %2481 = vmatpush1.bf16.xpose.msra.mxu0 %v2471
    %2482 = vmatprep.subr.bf16.mxu0 0
    %2483 = vmatpush1.bf16.xpose.msra.mxu0 %v2474
    %2484 = vmatprep.subr.bf16.mxu0 0
    %2485 = vmatpush1.bf16.xpose.msra.mxu0 0
    %2486 = vmatprep.subr.bf16.mxu0 0
    %2487 = vmatpush1.bf16.xpose.msra.mxu0 0
    %2488 = vmatprep.subr.bf16.mxu0 0
    %2489 = vmatpush1.bf16.xpose.msra.mxu0 0
    %2490 = vmatprep.subr.bf16.mxu0 0
    %2491 = vmatpush1.bf16.xpose.msra.mxu0 0
    %2492 = vmatprep.subr.bf16.mxu0 0
    %2493 = vmatpush1.bf16.xpose.msra.mxu0 0
    %2494 = vmatprep.subr.bf16.mxu0 0
    %2495 = vmatpush1.bf16.xpose.msra.mxu0 0
    %2496 = vmatprep.subr.bf16.mxu0 0
    %2497 = vmatpush1.bf16.xpose.msra.mxu0 0
    %2498 = vmatprep.subr.bf16.mxu0 0
    %2499 = vmatpush1.bf16.xpose.msra.mxu0 0
    %2500 = vmatprep.subr.bf16.mxu0 0
    %2501 = vmatpush1.bf16.xpose.msra.mxu0 0
    %2502 = vmatprep.subr.bf16.mxu0 0
    %2503 = vmatpush1.bf16.xpose.msra.mxu0 0
    %2504 = vmatprep.subr.bf16.mxu0 0
    %2505 = vmatpush1.bf16.xpose.msra.mxu0 0
    %2506 = vmatprep.subr.bf16.mxu0 0
    %2507 = vmatpush1.bf16.xpose.msra.mxu0 0
    %2508 = vmatprep.mubr.bf16.mxu0 0
    %2509 = vmatmul.mubr.bf16.gmra.mrb[0].mxu0 %v2441
    %v2510 = vpop.f32.mrb[0].mxu0
    %v2511 = vadd.f32 0.0, %v2510
    %v2512 = vpop.f32.mrb[0].mxu0
    %v2513 = vpop.f32.mrb[0].mxu0
    %v2514 = vadd.f32 0.0, %v2513
    %v2515 = vpop.f32.mrb[0].mxu0
    %2516 = vmatprep.mubr.bf16.mxu0 0
    %2517 = vmatmul.mubr.bf16.gmra.mrb[0].mxu0 %v2444
    %v2518 = vpop.f32.mrb[0].mxu0
    %v2519 = vadd.f32 0.0, %v2518
    %v2520 = vpop.f32.mrb[0].mxu0
    %v2521 = vpop.f32.mrb[0].mxu0
    %v2522 = vadd.f32 0.0, %v2521
    %v2523 = vpop.f32.mrb[0].mxu0
    %2524 = vmatprep.mubr.bf16.mxu0 0
    %2525 = vmatmul.mubr.bf16.gmra.mrb[0].mxu0 %v2447
    %v2526 = vpop.f32.mrb[0].mxu0
    %v2527 = vadd.f32 0.0, %v2526
    %v2528 = vpop.f32.mrb[0].mxu0
    %v2529 = vpop.f32.mrb[0].mxu0
    %v2530 = vadd.f32 0.0, %v2529
    %v2531 = vpop.f32.mrb[0].mxu0
    %2532 = vmatprep.mubr.bf16.mxu0 0
    %2533 = vmatmul.mubr.bf16.gmra.mrb[0].mxu0 %v2450
    %v2534 = vpop.f32.mrb[0].mxu0
    %v2535 = vadd.f32 0.0, %v2534
    %v2536 = vpop.f32.mrb[0].mxu0
    %v2537 = vpop.f32.mrb[0].mxu0
    %v2538 = vadd.f32 0.0, %v2537
    %v2539 = vpop.f32.mrb[0].mxu0
    %2540 = vmatprep.mubr.bf16.mxu0 0
    %2541 = vmatmul.mubr.bf16.gmra.mrb[0].mxu0 %v2453
    %v2542 = vpop.f32.mrb[0].mxu0
    %v2543 = vadd.f32 0.0, %v2542
    %v2544 = vpop.f32.mrb[0].mxu0
    %v2545 = vpop.f32.mrb[0].mxu0
    %v2546 = vadd.f32 0.0, %v2545
    %v2547 = vpop.f32.mrb[0].mxu0
    %2548 = vmatprep.mubr.bf16.mxu0 0
    %2549 = vmatmul.mubr.bf16.gmra.mrb[0].mxu0 %v2456
    %v2550 = vpop.f32.mrb[0].mxu0
    %v2551 = vadd.f32 0.0, %v2550
    %v2552 = vpop.f32.mrb[0].mxu0
    %v2553 = vpop.f32.mrb[0].mxu0
    %v2554 = vadd.f32 0.0, %v2553
    %v2555 = vpop.f32.mrb[0].mxu0
    %2556 = vmatprep.mubr.bf16.mxu0 0
    %2557 = vmatmul.mubr.bf16.gmra.mrb[0].mxu0 %v2459
    %v2558 = vpop.f32.mrb[0].mxu0
    %v2559 = vadd.f32 0.0, %v2558
    %v2560 = vpop.f32.mrb[0].mxu0
    %v2561 = vpop.f32.mrb[0].mxu0
    %v2562 = vadd.f32 0.0, %v2561
    %v2563 = vpop.f32.mrb[0].mxu0
    %2564 = vmatprep.mubr.bf16.mxu0 0
    %2565 = vmatmul.mubr.bf16.gmra.mrb[0].mxu0 %v2462
    %v2566 = vpop.f32.mrb[0].mxu0
    %v2567 = vadd.f32 0.0, %v2566
    %v2568 = vpop.f32.mrb[0].mxu0
    %v2569 = vpop.f32.mrb[0].mxu0
    %v2570 = vadd.f32 0.0, %v2569
    %v2571 = vpop.f32.mrb[0].mxu0
    %2572 = vdwg.mxu0
    %v2573 = vmul.f32 %v2511, 0.17677669
    %v2574 = vmul.f32 %v2514, 0.17677669
    %v2575 = vmul.f32 %v2519, 0.17677669
    %v2576 = vmul.f32 %v2522, 0.17677669
    %v2577 = vmul.f32 %v2527, 0.17677669
    %v2578 = vmul.f32 %v2530, 0.17677669
    %v2579 = vmul.f32 %v2535, 0.17677669
    %v2580 = vmul.f32 %v2538, 0.17677669
    %v2581 = vmul.f32 %v2543, 0.17677669
    %v2582 = vmul.f32 %v2546, 0.17677669
    %v2583 = vmul.f32 %v2551, 0.17677669
    %v2584 = vmul.f32 %v2554, 0.17677669
    %v2585 = vmul.f32 %v2559, 0.17677669
    %v2586 = vmul.f32 %v2562, 0.17677669
    %v2587 = vmul.f32 %v2567, 0.17677669
    %v2588 = vmul.f32 %v2570, 0.17677669
    %v2589 = vadd.f32 %v2573, %v1440
    %v2590 = vadd.f32 %v2574, %v1441
    %v2591 = vadd.f32 %v2575, %v1442
    %v2592 = vadd.f32 %v2576, %v1443
    %v2593 = vadd.f32 %v2577, %v1444
    %v2594 = vadd.f32 %v2578, %v1445
    %v2595 = vadd.f32 %v2579, %v1446
    %v2596 = vadd.f32 %v2580, %v1447
    %v2597 = vadd.f32 %v2581, %v1440
    %v2598 = vadd.f32 %v2582, %v1441
    %v2599 = vadd.f32 %v2583, %v1442
    %v2600 = vadd.f32 %v2584, %v1443
    %v2601 = vadd.f32 %v2585, %v1444
    %v2602 = vadd.f32 %v2586, %v1445
    %v2603 = vadd.f32 %v2587, %v1446
    %v2604 = vadd.f32 %v2588, %v1447
    %v2605 = vsel %vm1123, %v2589, -inf
    %2606 = vmax.xlane.f32.xlu0 %v2605
    %v2607 = vpop.xlane.xlu0 %2606
    %v2608 = vsel %vm1123, %v2590, -inf
    %2609 = vmax.xlane.f32.xlu0 %v2608
    %v2610 = vpop.xlane.xlu0 %2609
    %v2611 = vsel %vm1123, %v2591, -inf
    %2612 = vmax.xlane.f32.xlu0 %v2611
    %v2613 = vpop.xlane.xlu0 %2612
    %v2614 = vsel %vm1123, %v2592, -inf
    %2615 = vmax.xlane.f32.xlu0 %v2614
    %v2616 = vpop.xlane.xlu0 %2615
    %v2617 = vsel %vm1123, %v2593, -inf
    %2618 = vmax.xlane.f32.xlu0 %v2617
    %v2619 = vpop.xlane.xlu0 %2618
    %v2620 = vsel %vm1123, %v2594, -inf
    %2621 = vmax.xlane.f32.xlu0 %v2620
    %v2622 = vpop.xlane.xlu0 %2621
    %v2623 = vsel %vm1123, %v2595, -inf
    %2624 = vmax.xlane.f32.xlu0 %v2623
    %v2625 = vpop.xlane.xlu0 %2624
    %v2626 = vsel %vm1123, %v2596, -inf
    %2627 = vmax.xlane.f32.xlu0 %v2626
    %v2628 = vpop.xlane.xlu0 %2627
    %v2629 = vsel %vm1123, %v2597, -inf
    %2630 = vmax.xlane.f32.xlu0 %v2629
    %v2631 = vpop.xlane.xlu0 %2630
    %v2632 = vsel %vm1123, %v2598, -inf
    %2633 = vmax.xlane.f32.xlu0 %v2632
    %v2634 = vpop.xlane.xlu0 %2633
    %v2635 = vsel %vm1123, %v2599, -inf
    %2636 = vmax.xlane.f32.xlu0 %v2635
    %v2637 = vpop.xlane.xlu0 %2636
    %v2638 = vsel %vm1123, %v2600, -inf
    %2639 = vmax.xlane.f32.xlu0 %v2638
    %v2640 = vpop.xlane.xlu0 %2639
    %v2641 = vsel %vm1123, %v2601, -inf
    %2642 = vmax.xlane.f32.xlu0 %v2641
    %v2643 = vpop.xlane.xlu0 %2642
    %v2644 = vsel %vm1123, %v2602, -inf
    %2645 = vmax.xlane.f32.xlu0 %v2644
    %v2646 = vpop.xlane.xlu0 %2645
    %v2647 = vsel %vm1123, %v2603, -inf
    %2648 = vmax.xlane.f32.xlu0 %v2647
    %v2649 = vpop.xlane.xlu0 %2648
    %v2650 = vsel %vm1123, %v2604, -inf
    %2651 = vmax.xlane.f32.xlu0 %v2650
    %v2652 = vpop.xlane.xlu0 %2651
    %v2653 = vsub.f32 %v2589, %v2607
    %v2654 = vsub.f32 %v2590, %v2610
    %v2655 = vsub.f32 %v2591, %v2613
    %v2656 = vsub.f32 %v2592, %v2616
    %v2657 = vsub.f32 %v2593, %v2619
    %v2658 = vsub.f32 %v2594, %v2622
    %v2659 = vsub.f32 %v2595, %v2625
    %v2660 = vsub.f32 %v2596, %v2628
    %v2661 = vsub.f32 %v2597, %v2631
    %v2662 = vsub.f32 %v2598, %v2634
    %v2663 = vsub.f32 %v2599, %v2637
    %v2664 = vsub.f32 %v2600, %v2640
    %v2665 = vsub.f32 %v2601, %v2643
    %v2666 = vsub.f32 %v2602, %v2646
    %v2667 = vsub.f32 %v2603, %v2649
    %v2668 = vsub.f32 %v2604, %v2652
    %v2669 = vmul.f32 %v2653, 1.442695
    %v2670 = vpow.pop %v2669
    %v2671 = vmul.f32 %v2654, 1.442695
    %v2672 = vpow.pop %v2671
    %v2673 = vmul.f32 %v2655, 1.442695
    %v2674 = vpow.pop %v2673
    %v2675 = vmul.f32 %v2656, 1.442695
    %v2676 = vpow.pop %v2675
    %v2677 = vmul.f32 %v2657, 1.442695
    %v2678 = vpow.pop %v2677
    %v2679 = vmul.f32 %v2658, 1.442695
    %v2680 = vpow.pop %v2679
    %v2681 = vmul.f32 %v2659, 1.442695
    %v2682 = vpow.pop %v2681
    %v2683 = vmul.f32 %v2660, 1.442695
    %v2684 = vpow.pop %v2683
    %v2685 = vmul.f32 %v2661, 1.442695
    %v2686 = vpow.pop %v2685
    %v2687 = vmul.f32 %v2662, 1.442695
    %v2688 = vpow.pop %v2687
    %v2689 = vmul.f32 %v2663, 1.442695
    %v2690 = vpow.pop %v2689
    %v2691 = vmul.f32 %v2664, 1.442695
    %v2692 = vpow.pop %v2691
    %v2693 = vmul.f32 %v2665, 1.442695
    %v2694 = vpow.pop %v2693
    %v2695 = vmul.f32 %v2666, 1.442695
    %v2696 = vpow.pop %v2695
    %v2697 = vmul.f32 %v2667, 1.442695
    %v2698 = vpow.pop %v2697
    %v2699 = vmul.f32 %v2668, 1.442695
    %v2700 = vpow.pop %v2699
    %v2701 = vsel %vm1123, %v2670, 0.0
    %2702 = vadd.xlane.f32.xlu0 %v2701
    %v2703 = vpop.xlane.xlu0 %2702
    %v2704 = vsel %vm1123, %v2672, 0.0
    %2705 = vadd.xlane.f32.xlu0 %v2704
    %v2706 = vpop.xlane.xlu0 %2705
    %v2707 = vsel %vm1123, %v2674, 0.0
    %2708 = vadd.xlane.f32.xlu0 %v2707
    %v2709 = vpop.xlane.xlu0 %2708
    %v2710 = vsel %vm1123, %v2676, 0.0
    %2711 = vadd.xlane.f32.xlu0 %v2710
    %v2712 = vpop.xlane.xlu0 %2711
    %v2713 = vsel %vm1123, %v2678, 0.0
    %2714 = vadd.xlane.f32.xlu0 %v2713
    %v2715 = vpop.xlane.xlu0 %2714
    %v2716 = vsel %vm1123, %v2680, 0.0
    %2717 = vadd.xlane.f32.xlu0 %v2716
    %v2718 = vpop.xlane.xlu0 %2717
    %v2719 = vsel %vm1123, %v2682, 0.0
    %2720 = vadd.xlane.f32.xlu0 %v2719
    %v2721 = vpop.xlane.xlu0 %2720
    %v2722 = vsel %vm1123, %v2684, 0.0
    %2723 = vadd.xlane.f32.xlu0 %v2722
    %v2724 = vpop.xlane.xlu0 %2723
    %v2725 = vsel %vm1123, %v2686, 0.0
    %2726 = vadd.xlane.f32.xlu0 %v2725
    %v2727 = vpop.xlane.xlu0 %2726
    %v2728 = vsel %vm1123, %v2688, 0.0
    %2729 = vadd.xlane.f32.xlu0 %v2728
    %v2730 = vpop.xlane.xlu0 %2729
    %v2731 = vsel %vm1123, %v2690, 0.0
    %2732 = vadd.xlane.f32.xlu0 %v2731
    %v2733 = vpop.xlane.xlu0 %2732
    %v2734 = vsel %vm1123, %v2692, 0.0
    %2735 = vadd.xlane.f32.xlu0 %v2734
    %v2736 = vpop.xlane.xlu0 %2735
    %v2737 = vsel %vm1123, %v2694, 0.0
    %2738 = vadd.xlane.f32.xlu0 %v2737
    %v2739 = vpop.xlane.xlu0 %2738
    %v2740 = vsel %vm1123, %v2696, 0.0
    %2741 = vadd.xlane.f32.xlu0 %v2740
    %v2742 = vpop.xlane.xlu0 %2741
    %v2743 = vsel %vm1123, %v2698, 0.0
    %2744 = vadd.xlane.f32.xlu0 %v2743
    %v2745 = vpop.xlane.xlu0 %2744
    %v2746 = vsel %vm1123, %v2700, 0.0
    %2747 = vadd.xlane.f32.xlu0 %v2746
    %v2748 = vpop.xlane.xlu0 %2747
    %v2749 = vrcp.pop %v2703
    %v2750 = vrcp.pop %v2706
    %v2751 = vrcp.pop %v2709
    %v2752 = vrcp.pop %v2712
    %v2753 = vrcp.pop %v2715
    %v2754 = vrcp.pop %v2718
    %v2755 = vrcp.pop %v2721
    %v2756 = vrcp.pop %v2724
    %v2757 = vrcp.pop %v2727
    %v2758 = vrcp.pop %v2730
    %v2759 = vrcp.pop %v2733
    %v2760 = vrcp.pop %v2736
    %v2761 = vrcp.pop %v2739
    %v2762 = vrcp.pop %v2742
    %v2763 = vrcp.pop %v2745
    %v2764 = vrcp.pop %v2748
    %v2765 = vmul.f32 %v2670, %v2749
    %v2766 = vmul.f32 %v2672, %v2750
    %v2767 = vmul.f32 %v2674, %v2751
    %v2768 = vmul.f32 %v2676, %v2752
    %v2769 = vmul.f32 %v2678, %v2753
    %v2770 = vmul.f32 %v2680, %v2754
    %v2771 = vmul.f32 %v2682, %v2755
    %v2772 = vmul.f32 %v2684, %v2756
    %v2773 = vmul.f32 %v2686, %v2757
    %v2774 = vmul.f32 %v2688, %v2758
    %v2775 = vmul.f32 %v2690, %v2759
    %v2776 = vmul.f32 %v2692, %v2760
    %v2777 = vmul.f32 %v2694, %v2761
    %v2778 = vmul.f32 %v2696, %v2762
    %v2779 = vmul.f32 %v2698, %v2763
    %v2780 = vmul.f32 %v2700, %v2764
    %v2781 = vpack.c.bf16 %v2766, %v2765
    %v2782 = vpack.c.bf16 %v2768, %v2767
    %v2783 = vpack.c.bf16 %v2770, %v2769
    %v2784 = vpack.c.bf16 %v2772, %v2771
    %v2785 = vpack.c.bf16 %v2774, %v2773
    %v2786 = vpack.c.bf16 %v2776, %v2775
    %v2787 = vpack.c.bf16 %v2778, %v2777
    %v2788 = vpack.c.bf16 %v2780, %v2779
    %2793 = vrot.lane.b32.xlu0 %v1357, 96
    %v2794 = vpop.permute.xlu0 %2793
    %2795 = vrot.lane.b32.xlu0 %v1358, 96
    %v2796 = vpop.permute.xlu0 %2795
    %2797 = vrot.lane.b32.xlu0 %v1359, 96
    %v2798 = vpop.permute.xlu0 %2797
    %2799 = vrot.lane.b32.xlu0 %v1360, 96
    %v2800 = vpop.permute.xlu0 %2799
    %v2806 = vsel %vm1123, %v2781, 0
    %v2809 = vsel %vm1123, %v2782, 0
    %v2812 = vsel %vm1123, %v2783, 0
    %v2815 = vsel %vm1123, %v2784, 0
    %v2818 = vsel %vm1123, %v2785, 0
    %v2821 = vsel %vm1123, %v2786, 0
    %v2824 = vsel %vm1123, %v2787, 0
    %v2827 = vsel %vm1123, %v2788, 0
    %2829 = vmatprep.subr.bf16.mxu0 0
    %2830 = vmatpush1.bf16.msra.mxu0 %v2794
    %2831 = vmatprep.subr.bf16.mxu0 0
    %2832 = vmatpush1.bf16.msra.mxu0 %v2796
    %2833 = vmatprep.subr.bf16.mxu0 0
    %2834 = vmatpush1.bf16.msra.mxu0 %v2798
    %2835 = vmatprep.subr.bf16.mxu0 0
    %2836 = vmatpush1.bf16.msra.mxu0 %v2800
    %2837 = vmatprep.subr.bf16.mxu0 0
    %2838 = vmatpush1.bf16.msra.mxu0 0
    %2839 = vmatprep.subr.bf16.mxu0 0
    %2840 = vmatpush1.bf16.msra.mxu0 0
    %2841 = vmatprep.subr.bf16.mxu0 0
    %2842 = vmatpush1.bf16.msra.mxu0 0
    %2843 = vmatprep.subr.bf16.mxu0 0
    %2844 = vmatpush1.bf16.msra.mxu0 0
    %2845 = vmatprep.subr.bf16.mxu0 0
    %2846 = vmatpush1.bf16.msra.mxu0 0
    %2847 = vmatprep.subr.bf16.mxu0 0
    %2848 = vmatpush1.bf16.msra.mxu0 0
    %2849 = vmatprep.subr.bf16.mxu0 0
    %2850 = vmatpush1.bf16.msra.mxu0 0
    %2851 = vmatprep.subr.bf16.mxu0 0
    %2852 = vmatpush1.bf16.msra.mxu0 0
    %2853 = vmatprep.subr.bf16.mxu0 0
    %2854 = vmatpush1.bf16.msra.mxu0 0
    %2855 = vmatprep.subr.bf16.mxu0 0
    %2856 = vmatpush1.bf16.msra.mxu0 0
    %2857 = vmatprep.subr.bf16.mxu0 0
    %2858 = vmatpush1.bf16.msra.mxu0 0
    %2859 = vmatprep.subr.bf16.mxu0 0
    %2860 = vmatpush1.bf16.msra.mxu0 0
    %2861 = vmatprep.mubr.bf16.mxu0 0
    %2862 = vmatmul.mubr.bf16.gmra.mrb[0].mxu0 %v2806
    %v2863 = vpop.f32.mrb[0].mxu0
    %v2864 = vadd.f32 0.0, %v2863
    %v2865 = vpop.f32.mrb[0].mxu0
    %v2866 = vpop.f32.mrb[0].mxu0
    %v2867 = vadd.f32 0.0, %v2866
    %v2868 = vpop.f32.mrb[0].mxu0
    %2869 = vmatprep.mubr.bf16.mxu0 0
    %2870 = vmatmul.mubr.bf16.gmra.mrb[0].mxu0 %v2809
    %v2871 = vpop.f32.mrb[0].mxu0
    %v2872 = vadd.f32 0.0, %v2871
    %v2873 = vpop.f32.mrb[0].mxu0
    %v2874 = vpop.f32.mrb[0].mxu0
    %v2875 = vadd.f32 0.0, %v2874
    %v2876 = vpop.f32.mrb[0].mxu0
    %2877 = vmatprep.mubr.bf16.mxu0 0
    %2878 = vmatmul.mubr.bf16.gmra.mrb[0].mxu0 %v2812
    %v2879 = vpop.f32.mrb[0].mxu0
    %v2880 = vadd.f32 0.0, %v2879
    %v2881 = vpop.f32.mrb[0].mxu0
    %v2882 = vpop.f32.mrb[0].mxu0
    %v2883 = vadd.f32 0.0, %v2882
    %v2884 = vpop.f32.mrb[0].mxu0
    %2885 = vmatprep.mubr.bf16.mxu0 0
    %2886 = vmatmul.mubr.bf16.gmra.mrb[0].mxu0 %v2815
    %v2887 = vpop.f32.mrb[0].mxu0
    %v2888 = vadd.f32 0.0, %v2887
    %v2889 = vpop.f32.mrb[0].mxu0
    %v2890 = vpop.f32.mrb[0].mxu0
    %v2891 = vadd.f32 0.0, %v2890
    %v2892 = vpop.f32.mrb[0].mxu0
    %2893 = vmatprep.mubr.bf16.mxu0 0
    %2894 = vmatmul.mubr.bf16.gmra.mrb[0].mxu0 %v2818
    %v2895 = vpop.f32.mrb[0].mxu0
    %v2896 = vadd.f32 0.0, %v2895
    %v2897 = vpop.f32.mrb[0].mxu0
    %v2898 = vpop.f32.mrb[0].mxu0
    %v2899 = vadd.f32 0.0, %v2898
    %v2900 = vpop.f32.mrb[0].mxu0
    %2901 = vmatprep.mubr.bf16.mxu0 0
    %2902 = vmatmul.mubr.bf16.gmra.mrb[0].mxu0 %v2821
    %v2903 = vpop.f32.mrb[0].mxu0
    %v2904 = vadd.f32 0.0, %v2903
    %v2905 = vpop.f32.mrb[0].mxu0
    %v2906 = vpop.f32.mrb[0].mxu0
    %v2907 = vadd.f32 0.0, %v2906
    %v2908 = vpop.f32.mrb[0].mxu0
    %2909 = vmatprep.mubr.bf16.mxu0 0
    %2910 = vmatmul.mubr.bf16.gmra.mrb[0].mxu0 %v2824
    %v2911 = vpop.f32.mrb[0].mxu0
    %v2912 = vadd.f32 0.0, %v2911
    %v2913 = vpop.f32.mrb[0].mxu0
    %v2914 = vpop.f32.mrb[0].mxu0
    %v2915 = vadd.f32 0.0, %v2914
    %v2916 = vpop.f32.mrb[0].mxu0
    %2917 = vmatprep.mubr.bf16.mxu0 0
    %2918 = vmatmul.mubr.bf16.gmra.mrb[0].mxu0 %v2827
    %v2919 = vpop.f32.mrb[0].mxu0
    %v2920 = vadd.f32 0.0, %v2919
    %v2921 = vpop.f32.mrb[0].mxu0
    %v2922 = vpop.f32.mrb[0].mxu0
    %v2923 = vadd.f32 0.0, %v2922
    %v2924 = vpop.f32.mrb[0].mxu0
    %2925 = vdwg.mxu0
    %2926 = vrot.lane.b32.xlu0 %v1417, 64
    %v2927 = vpop.permute.xlu0 %2926
    %2928 = vrot.lane.b32.xlu0 %v1418, 64
    %v2929 = vpop.permute.xlu0 %2928
    %2930 = vrot.lane.b32.xlu0 %v1419, 64
    %v2931 = vpop.permute.xlu0 %2930
    %2932 = vrot.lane.b32.xlu0 %v1420, 64
    %v2933 = vpop.permute.xlu0 %2932
    %2934 = vrot.lane.b32.xlu0 %v1935, 64
    %v2935 = vpop.permute.xlu0 %2934
    %2936 = vrot.lane.b32.xlu0 %v1937, 64
    %v2937 = vpop.permute.xlu0 %2936
    %2938 = vrot.lane.b32.xlu0 %v1939, 64
    %v2939 = vpop.permute.xlu0 %2938
    %2940 = vrot.lane.b32.xlu0 %v1941, 64
    %v2941 = vpop.permute.xlu0 %2940
    %2946 = vrot.lane.b32.xlu0 %v1353, 96
    %v2947 = vpop.permute.xlu0 %2946
    %2948 = vrot.lane.b32.xlu0 %v1354, 96
    %v2949 = vpop.permute.xlu0 %2948
    %2950 = vrot.lane.b32.xlu0 %v1355, 96
    %v2951 = vpop.permute.xlu0 %2950
    %2952 = vrot.lane.b32.xlu0 %v1356, 96
    %v2953 = vpop.permute.xlu0 %2952
    %v2955 = vsel %vm1026, %v2927, 0
    %v2958 = vsel %vm1026, %v2929, 0
    %v2961 = vsel %vm1026, %v2931, 0
    %v2964 = vsel %vm1026, %v2933, 0
    %v2967 = vsel %vm1026, %v2935, 0
    %v2970 = vsel %vm1026, %v2937, 0
    %v2973 = vsel %vm1026, %v2939, 0
    %v2976 = vsel %vm1026, %v2941, 0
    %v2979 = vsel %vm1026, %v2947, 0
    %v2982 = vsel %vm1026, %v2949, 0
    %v2985 = vsel %vm1026, %v2951, 0
    %v2988 = vsel %vm1026, %v2953, 0
    %2990 = vmatprep.subr.bf16.mxu0 0
    %2991 = vmatpush1.bf16.xpose.msra.mxu0 %v2979
    %2992 = vmatprep.subr.bf16.mxu0 0
    %2993 = vmatpush1.bf16.xpose.msra.mxu0 %v2982
    %2994 = vmatprep.subr.bf16.mxu0 0
    %2995 = vmatpush1.bf16.xpose.msra.mxu0 %v2985
    %2996 = vmatprep.subr.bf16.mxu0 0
    %2997 = vmatpush1.bf16.xpose.msra.mxu0 %v2988
    %2998 = vmatprep.subr.bf16.mxu0 0
    %2999 = vmatpush1.bf16.xpose.msra.mxu0 0
    %3000 = vmatprep.subr.bf16.mxu0 0
    %3001 = vmatpush1.bf16.xpose.msra.mxu0 0
    %3002 = vmatprep.subr.bf16.mxu0 0
    %3003 = vmatpush1.bf16.xpose.msra.mxu0 0
    %3004 = vmatprep.subr.bf16.mxu0 0
    %3005 = vmatpush1.bf16.xpose.msra.mxu0 0
    %3006 = vmatprep.subr.bf16.mxu0 0
    %3007 = vmatpush1.bf16.xpose.msra.mxu0 0
    %3008 = vmatprep.subr.bf16.mxu0 0
    %3009 = vmatpush1.bf16.xpose.msra.mxu0 0
    %3010 = vmatprep.subr.bf16.mxu0 0
    %3011 = vmatpush1.bf16.xpose.msra.mxu0 0
    %3012 = vmatprep.subr.bf16.mxu0 0
    %3013 = vmatpush1.bf16.xpose.msra.mxu0 0
    %3014 = vmatprep.subr.bf16.mxu0 0
    %3015 = vmatpush1.bf16.xpose.msra.mxu0 0
    %3016 = vmatprep.subr.bf16.mxu0 0
    %3017 = vmatpush1.bf16.xpose.msra.mxu0 0
    %3018 = vmatprep.subr.bf16.mxu0 0
    %3019 = vmatpush1.bf16.xpose.msra.mxu0 0
    %3020 = vmatprep.subr.bf16.mxu0 0
    %3021 = vmatpush1.bf16.xpose.msra.mxu0 0
    %3022 = vmatprep.mubr.bf16.mxu0 0
    %3023 = vmatmul.mubr.bf16.gmra.mrb[0].mxu0 %v2955
    %v3024 = vpop.f32.mrb[0].mxu0
    %v3025 = vadd.f32 0.0, %v3024
    %v3026 = vpop.f32.mrb[0].mxu0
    %v3027 = vpop.f32.mrb[0].mxu0
    %v3028 = vadd.f32 0.0, %v3027
    %v3029 = vpop.f32.mrb[0].mxu0
    %3030 = vmatprep.mubr.bf16.mxu0 0
    %3031 = vmatmul.mubr.bf16.gmra.mrb[0].mxu0 %v2958
    %v3032 = vpop.f32.mrb[0].mxu0
    %v3033 = vadd.f32 0.0, %v3032
    %v3034 = vpop.f32.mrb[0].mxu0
    %v3035 = vpop.f32.mrb[0].mxu0
    %v3036 = vadd.f32 0.0, %v3035
    %v3037 = vpop.f32.mrb[0].mxu0
    %3038 = vmatprep.mubr.bf16.mxu0 0
    %3039 = vmatmul.mubr.bf16.gmra.mrb[0].mxu0 %v2961
    %v3040 = vpop.f32.mrb[0].mxu0
    %v3041 = vadd.f32 0.0, %v3040
    %v3042 = vpop.f32.mrb[0].mxu0
    %v3043 = vpop.f32.mrb[0].mxu0
    %v3044 = vadd.f32 0.0, %v3043
    %v3045 = vpop.f32.mrb[0].mxu0
    %3046 = vmatprep.mubr.bf16.mxu0 0
    %3047 = vmatmul.mubr.bf16.gmra.mrb[0].mxu0 %v2964
    %v3048 = vpop.f32.mrb[0].mxu0
    %v3049 = vadd.f32 0.0, %v3048
    %v3050 = vpop.f32.mrb[0].mxu0
    %v3051 = vpop.f32.mrb[0].mxu0
    %v3052 = vadd.f32 0.0, %v3051
    %v3053 = vpop.f32.mrb[0].mxu0
    %3054 = vmatprep.mubr.bf16.mxu0 0
    %3055 = vmatmul.mubr.bf16.gmra.mrb[0].mxu0 %v2967
    %v3056 = vpop.f32.mrb[0].mxu0
    %v3057 = vadd.f32 0.0, %v3056
    %v3058 = vpop.f32.mrb[0].mxu0
    %v3059 = vpop.f32.mrb[0].mxu0
    %v3060 = vadd.f32 0.0, %v3059
    %v3061 = vpop.f32.mrb[0].mxu0
    %3062 = vmatprep.mubr.bf16.mxu0 0
    %3063 = vmatmul.mubr.bf16.gmra.mrb[0].mxu0 %v2970
    %v3064 = vpop.f32.mrb[0].mxu0
    %v3065 = vadd.f32 0.0, %v3064
    %v3066 = vpop.f32.mrb[0].mxu0
    %v3067 = vpop.f32.mrb[0].mxu0
    %v3068 = vadd.f32 0.0, %v3067
    %v3069 = vpop.f32.mrb[0].mxu0
    %3070 = vmatprep.mubr.bf16.mxu0 0
    %3071 = vmatmul.mubr.bf16.gmra.mrb[0].mxu0 %v2973
    %v3072 = vpop.f32.mrb[0].mxu0
    %v3073 = vadd.f32 0.0, %v3072
    %v3074 = vpop.f32.mrb[0].mxu0
    %v3075 = vpop.f32.mrb[0].mxu0
    %v3076 = vadd.f32 0.0, %v3075
    %v3077 = vpop.f32.mrb[0].mxu0
    %3078 = vmatprep.mubr.bf16.mxu0 0
    %3079 = vmatmul.mubr.bf16.gmra.mrb[0].mxu0 %v2976
    %v3080 = vpop.f32.mrb[0].mxu0
    %v3081 = vadd.f32 0.0, %v3080
    %v3082 = vpop.f32.mrb[0].mxu0
    %v3083 = vpop.f32.mrb[0].mxu0
    %v3084 = vadd.f32 0.0, %v3083
    %v3085 = vpop.f32.mrb[0].mxu0
    %3086 = vdwg.mxu0
    %v3087 = vmul.f32 %v3025, 0.17677669
    %v3088 = vmul.f32 %v3028, 0.17677669
    %v3089 = vmul.f32 %v3033, 0.17677669
    %v3090 = vmul.f32 %v3036, 0.17677669
    %v3091 = vmul.f32 %v3041, 0.17677669
    %v3092 = vmul.f32 %v3044, 0.17677669
    %v3093 = vmul.f32 %v3049, 0.17677669
    %v3094 = vmul.f32 %v3052, 0.17677669
    %v3095 = vmul.f32 %v3057, 0.17677669
    %v3096 = vmul.f32 %v3060, 0.17677669
    %v3097 = vmul.f32 %v3065, 0.17677669
    %v3098 = vmul.f32 %v3068, 0.17677669
    %v3099 = vmul.f32 %v3073, 0.17677669
    %v3100 = vmul.f32 %v3076, 0.17677669
    %v3101 = vmul.f32 %v3081, 0.17677669
    %v3102 = vmul.f32 %v3084, 0.17677669
    %v3103 = vadd.f32 %v3087, %v1440
    %v3104 = vadd.f32 %v3088, %v1441
    %v3105 = vadd.f32 %v3089, %v1442
    %v3106 = vadd.f32 %v3090, %v1443
    %v3107 = vadd.f32 %v3091, %v1444
    %v3108 = vadd.f32 %v3092, %v1445
    %v3109 = vadd.f32 %v3093, %v1446
    %v3110 = vadd.f32 %v3094, %v1447
    %v3111 = vadd.f32 %v3095, %v1440
    %v3112 = vadd.f32 %v3096, %v1441
    %v3113 = vadd.f32 %v3097, %v1442
    %v3114 = vadd.f32 %v3098, %v1443
    %v3115 = vadd.f32 %v3099, %v1444
    %v3116 = vadd.f32 %v3100, %v1445
    %v3117 = vadd.f32 %v3101, %v1446
    %v3118 = vadd.f32 %v3102, %v1447
    %v3119 = vsel %vm1123, %v3103, -inf
    %3120 = vmax.xlane.f32.xlu0 %v3119
    %v3121 = vpop.xlane.xlu0 %3120
    %v3122 = vsel %vm1123, %v3104, -inf
    %3123 = vmax.xlane.f32.xlu0 %v3122
    %v3124 = vpop.xlane.xlu0 %3123
    %v3125 = vsel %vm1123, %v3105, -inf
    %3126 = vmax.xlane.f32.xlu0 %v3125
    %v3127 = vpop.xlane.xlu0 %3126
    %v3128 = vsel %vm1123, %v3106, -inf
    %3129 = vmax.xlane.f32.xlu0 %v3128
    %v3130 = vpop.xlane.xlu0 %3129
    %v3131 = vsel %vm1123, %v3107, -inf
    %3132 = vmax.xlane.f32.xlu0 %v3131
    %v3133 = vpop.xlane.xlu0 %3132
    %v3134 = vsel %vm1123, %v3108, -inf
    %3135 = vmax.xlane.f32.xlu0 %v3134
    %v3136 = vpop.xlane.xlu0 %3135
    %v3137 = vsel %vm1123, %v3109, -inf
    %3138 = vmax.xlane.f32.xlu0 %v3137
    %v3139 = vpop.xlane.xlu0 %3138
    %v3140 = vsel %vm1123, %v3110, -inf
    %3141 = vmax.xlane.f32.xlu0 %v3140
    %v3142 = vpop.xlane.xlu0 %3141
    %v3143 = vsel %vm1123, %v3111, -inf
    %3144 = vmax.xlane.f32.xlu0 %v3143
    %v3145 = vpop.xlane.xlu0 %3144
    %v3146 = vsel %vm1123, %v3112, -inf
    %3147 = vmax.xlane.f32.xlu0 %v3146
    %v3148 = vpop.xlane.xlu0 %3147
    %v3149 = vsel %vm1123, %v3113, -inf
    %3150 = vmax.xlane.f32.xlu0 %v3149
    %v3151 = vpop.xlane.xlu0 %3150
    %v3152 = vsel %vm1123, %v3114, -inf
    %3153 = vmax.xlane.f32.xlu0 %v3152
    %v3154 = vpop.xlane.xlu0 %3153
    %v3155 = vsel %vm1123, %v3115, -inf
    %3156 = vmax.xlane.f32.xlu0 %v3155
    %v3157 = vpop.xlane.xlu0 %3156
    %v3158 = vsel %vm1123, %v3116, -inf
    %3159 = vmax.xlane.f32.xlu0 %v3158
    %v3160 = vpop.xlane.xlu0 %3159
    %v3161 = vsel %vm1123, %v3117, -inf
    %3162 = vmax.xlane.f32.xlu0 %v3161
    %v3163 = vpop.xlane.xlu0 %3162
    %v3164 = vsel %vm1123, %v3118, -inf
    %3165 = vmax.xlane.f32.xlu0 %v3164
    %v3166 = vpop.xlane.xlu0 %3165
    %v3167 = vsub.f32 %v3103, %v3121
    %v3168 = vsub.f32 %v3104, %v3124
    %v3169 = vsub.f32 %v3105, %v3127
    %v3170 = vsub.f32 %v3106, %v3130
    %v3171 = vsub.f32 %v3107, %v3133
    %v3172 = vsub.f32 %v3108, %v3136
    %v3173 = vsub.f32 %v3109, %v3139
    %v3174 = vsub.f32 %v3110, %v3142
    %v3175 = vsub.f32 %v3111, %v3145
    %v3176 = vsub.f32 %v3112, %v3148
    %v3177 = vsub.f32 %v3113, %v3151
    %v3178 = vsub.f32 %v3114, %v3154
    %v3179 = vsub.f32 %v3115, %v3157
    %v3180 = vsub.f32 %v3116, %v3160
    %v3181 = vsub.f32 %v3117, %v3163
    %v3182 = vsub.f32 %v3118, %v3166
    %v3183 = vmul.f32 %v3167, 1.442695
    %v3184 = vpow.pop %v3183
    %v3185 = vmul.f32 %v3168, 1.442695
    %v3186 = vpow.pop %v3185
    %v3187 = vmul.f32 %v3169, 1.442695
    %v3188 = vpow.pop %v3187
    %v3189 = vmul.f32 %v3170, 1.442695
    %v3190 = vpow.pop %v3189
    %v3191 = vmul.f32 %v3171, 1.442695
    %v3192 = vpow.pop %v3191
    %v3193 = vmul.f32 %v3172, 1.442695
    %v3194 = vpow.pop %v3193
    %v3195 = vmul.f32 %v3173, 1.442695
    %v3196 = vpow.pop %v3195
    %v3197 = vmul.f32 %v3174, 1.442695
    %v3198 = vpow.pop %v3197
    %v3199 = vmul.f32 %v3175, 1.442695
    %v3200 = vpow.pop %v3199
    %v3201 = vmul.f32 %v3176, 1.442695
    %v3202 = vpow.pop %v3201
    %v3203 = vmul.f32 %v3177, 1.442695
    %v3204 = vpow.pop %v3203
    %v3205 = vmul.f32 %v3178, 1.442695
    %v3206 = vpow.pop %v3205
    %v3207 = vmul.f32 %v3179, 1.442695
    %v3208 = vpow.pop %v3207
    %v3209 = vmul.f32 %v3180, 1.442695
    %v3210 = vpow.pop %v3209
    %v3211 = vmul.f32 %v3181, 1.442695
    %v3212 = vpow.pop %v3211
    %v3213 = vmul.f32 %v3182, 1.442695
    %v3214 = vpow.pop %v3213
    %v3215 = vsel %vm1123, %v3184, 0.0
    %3216 = vadd.xlane.f32.xlu0 %v3215
    %v3217 = vpop.xlane.xlu0 %3216
    %v3218 = vsel %vm1123, %v3186, 0.0
    %3219 = vadd.xlane.f32.xlu0 %v3218
    %v3220 = vpop.xlane.xlu0 %3219
    %v3221 = vsel %vm1123, %v3188, 0.0
    %3222 = vadd.xlane.f32.xlu0 %v3221
    %v3223 = vpop.xlane.xlu0 %3222
    %v3224 = vsel %vm1123, %v3190, 0.0
    %3225 = vadd.xlane.f32.xlu0 %v3224
    %v3226 = vpop.xlane.xlu0 %3225
    %v3227 = vsel %vm1123, %v3192, 0.0
    %3228 = vadd.xlane.f32.xlu0 %v3227
    %v3229 = vpop.xlane.xlu0 %3228
    %v3230 = vsel %vm1123, %v3194, 0.0
    %3231 = vadd.xlane.f32.xlu0 %v3230
    %v3232 = vpop.xlane.xlu0 %3231
    %v3233 = vsel %vm1123, %v3196, 0.0
    %3234 = vadd.xlane.f32.xlu0 %v3233
    %v3235 = vpop.xlane.xlu0 %3234
    %v3236 = vsel %vm1123, %v3198, 0.0
    %3237 = vadd.xlane.f32.xlu0 %v3236
    %v3238 = vpop.xlane.xlu0 %3237
    %v3239 = vsel %vm1123, %v3200, 0.0
    %3240 = vadd.xlane.f32.xlu0 %v3239
    %v3241 = vpop.xlane.xlu0 %3240
    %v3242 = vsel %vm1123, %v3202, 0.0
    %3243 = vadd.xlane.f32.xlu0 %v3242
    %v3244 = vpop.xlane.xlu0 %3243
    %v3245 = vsel %vm1123, %v3204, 0.0
    %3246 = vadd.xlane.f32.xlu0 %v3245
    %v3247 = vpop.xlane.xlu0 %3246
    %v3248 = vsel %vm1123, %v3206, 0.0
    %3249 = vadd.xlane.f32.xlu0 %v3248
    %v3250 = vpop.xlane.xlu0 %3249
    %v3251 = vsel %vm1123, %v3208, 0.0
    %3252 = vadd.xlane.f32.xlu0 %v3251
    %v3253 = vpop.xlane.xlu0 %3252
    %v3254 = vsel %vm1123, %v3210, 0.0
    %3255 = vadd.xlane.f32.xlu0 %v3254
    %v3256 = vpop.xlane.xlu0 %3255
    %v3257 = vsel %vm1123, %v3212, 0.0
    %3258 = vadd.xlane.f32.xlu0 %v3257
    %v3259 = vpop.xlane.xlu0 %3258
    %v3260 = vsel %vm1123, %v3214, 0.0
    %3261 = vadd.xlane.f32.xlu0 %v3260
    %v3262 = vpop.xlane.xlu0 %3261
    %v3263 = vrcp.pop %v3217
    %v3264 = vrcp.pop %v3220
    %v3265 = vrcp.pop %v3223
    %v3266 = vrcp.pop %v3226
    %v3267 = vrcp.pop %v3229
    %v3268 = vrcp.pop %v3232
    %v3269 = vrcp.pop %v3235
    %v3270 = vrcp.pop %v3238
    %v3271 = vrcp.pop %v3241
    %v3272 = vrcp.pop %v3244
    %v3273 = vrcp.pop %v3247
    %v3274 = vrcp.pop %v3250
    %v3275 = vrcp.pop %v3253
    %v3276 = vrcp.pop %v3256
    %v3277 = vrcp.pop %v3259
    %v3278 = vrcp.pop %v3262
    %v3279 = vmul.f32 %v3184, %v3263
    %v3280 = vmul.f32 %v3186, %v3264
    %v3281 = vmul.f32 %v3188, %v3265
    %v3282 = vmul.f32 %v3190, %v3266
    %v3283 = vmul.f32 %v3192, %v3267
    %v3284 = vmul.f32 %v3194, %v3268
    %v3285 = vmul.f32 %v3196, %v3269
    %v3286 = vmul.f32 %v3198, %v3270
    %v3287 = vmul.f32 %v3200, %v3271
    %v3288 = vmul.f32 %v3202, %v3272
    %v3289 = vmul.f32 %v3204, %v3273
    %v3290 = vmul.f32 %v3206, %v3274
    %v3291 = vmul.f32 %v3208, %v3275
    %v3292 = vmul.f32 %v3210, %v3276
    %v3293 = vmul.f32 %v3212, %v3277
    %v3294 = vmul.f32 %v3214, %v3278
    %v3295 = vpack.c.bf16 %v3280, %v3279
    %v3296 = vpack.c.bf16 %v3282, %v3281
    %v3297 = vpack.c.bf16 %v3284, %v3283
    %v3298 = vpack.c.bf16 %v3286, %v3285
    %v3299 = vpack.c.bf16 %v3288, %v3287
    %v3300 = vpack.c.bf16 %v3290, %v3289
    %v3301 = vpack.c.bf16 %v3292, %v3291
    %v3302 = vpack.c.bf16 %v3294, %v3293
    %3307 = vrot.lane.b32.xlu0 %v1361, 96
    %v3308 = vpop.permute.xlu0 %3307
    %3309 = vrot.lane.b32.xlu0 %v1362, 96
    %v3310 = vpop.permute.xlu0 %3309
    %3311 = vrot.lane.b32.xlu0 %v1363, 96
    %v3312 = vpop.permute.xlu0 %3311
    %3313 = vrot.lane.b32.xlu0 %v1364, 96
    %v3314 = vpop.permute.xlu0 %3313
    %v3320 = vsel %vm1123, %v3295, 0
    %v3323 = vsel %vm1123, %v3296, 0
    %v3326 = vsel %vm1123, %v3297, 0
    %v3329 = vsel %vm1123, %v3298, 0
    %v3332 = vsel %vm1123, %v3299, 0
    %v3335 = vsel %vm1123, %v3300, 0
    %v3338 = vsel %vm1123, %v3301, 0
    %v3341 = vsel %vm1123, %v3302, 0
    %3343 = vmatprep.subr.bf16.mxu0 0
    %3344 = vmatpush1.bf16.msra.mxu0 %v3308
    %3345 = vmatprep.subr.bf16.mxu0 0
    %3346 = vmatpush1.bf16.msra.mxu0 %v3310
    %3347 = vmatprep.subr.bf16.mxu0 0
    %3348 = vmatpush1.bf16.msra.mxu0 %v3312
    %3349 = vmatprep.subr.bf16.mxu0 0
    %3350 = vmatpush1.bf16.msra.mxu0 %v3314
    %3351 = vmatprep.subr.bf16.mxu0 0
    %3352 = vmatpush1.bf16.msra.mxu0 0
    %3353 = vmatprep.subr.bf16.mxu0 0
    %3354 = vmatpush1.bf16.msra.mxu0 0
    %3355 = vmatprep.subr.bf16.mxu0 0
    %3356 = vmatpush1.bf16.msra.mxu0 0
    %3357 = vmatprep.subr.bf16.mxu0 0
    %3358 = vmatpush1.bf16.msra.mxu0 0
    %3359 = vmatprep.subr.bf16.mxu0 0
    %3360 = vmatpush1.bf16.msra.mxu0 0
    %3361 = vmatprep.subr.bf16.mxu0 0
    %3362 = vmatpush1.bf16.msra.mxu0 0
    %3363 = vmatprep.subr.bf16.mxu0 0
    %3364 = vmatpush1.bf16.msra.mxu0 0
    %3365 = vmatprep.subr.bf16.mxu0 0
    %3366 = vmatpush1.bf16.msra.mxu0 0
    %3367 = vmatprep.subr.bf16.mxu0 0
    %3368 = vmatpush1.bf16.msra.mxu0 0
    %3369 = vmatprep.subr.bf16.mxu0 0
    %3370 = vmatpush1.bf16.msra.mxu0 0
    %3371 = vmatprep.subr.bf16.mxu0 0
    %3372 = vmatpush1.bf16.msra.mxu0 0
    %3373 = vmatprep.subr.bf16.mxu0 0
    %3374 = vmatpush1.bf16.msra.mxu0 0
    %3375 = vmatprep.mubr.bf16.mxu0 0
    %3376 = vmatmul.mubr.bf16.gmra.mrb[0].mxu0 %v3320
    %v3377 = vpop.f32.mrb[0].mxu0
    %v3378 = vadd.f32 0.0, %v3377
    %v3379 = vpop.f32.mrb[0].mxu0
    %v3380 = vpop.f32.mrb[0].mxu0
    %v3381 = vadd.f32 0.0, %v3380
    %v3382 = vpop.f32.mrb[0].mxu0
    %3383 = vmatprep.mubr.bf16.mxu0 0
    %3384 = vmatmul.mubr.bf16.gmra.mrb[0].mxu0 %v3323
    %v3385 = vpop.f32.mrb[0].mxu0
    %v3386 = vadd.f32 0.0, %v3385
    %v3387 = vpop.f32.mrb[0].mxu0
    %v3388 = vpop.f32.mrb[0].mxu0
    %v3389 = vadd.f32 0.0, %v3388
    %v3390 = vpop.f32.mrb[0].mxu0
    %3391 = vmatprep.mubr.bf16.mxu0 0
    %3392 = vmatmul.mubr.bf16.gmra.mrb[0].mxu0 %v3326
    %v3393 = vpop.f32.mrb[0].mxu0
    %v3394 = vadd.f32 0.0, %v3393
    %v3395 = vpop.f32.mrb[0].mxu0
    %v3396 = vpop.f32.mrb[0].mxu0
    %v3397 = vadd.f32 0.0, %v3396
    %v3398 = vpop.f32.mrb[0].mxu0
    %3399 = vmatprep.mubr.bf16.mxu0 0
    %3400 = vmatmul.mubr.bf16.gmra.mrb[0].mxu0 %v3329
    %v3401 = vpop.f32.mrb[0].mxu0
    %v3402 = vadd.f32 0.0, %v3401
    %v3403 = vpop.f32.mrb[0].mxu0
    %v3404 = vpop.f32.mrb[0].mxu0
    %v3405 = vadd.f32 0.0, %v3404
    %v3406 = vpop.f32.mrb[0].mxu0
    %3407 = vmatprep.mubr.bf16.mxu0 0
    %3408 = vmatmul.mubr.bf16.gmra.mrb[0].mxu0 %v3332
    %v3409 = vpop.f32.mrb[0].mxu0
    %v3410 = vadd.f32 0.0, %v3409
    %v3411 = vpop.f32.mrb[0].mxu0
    %v3412 = vpop.f32.mrb[0].mxu0
    %v3413 = vadd.f32 0.0, %v3412
    %v3414 = vpop.f32.mrb[0].mxu0
    %3415 = vmatprep.mubr.bf16.mxu0 0
    %3416 = vmatmul.mubr.bf16.gmra.mrb[0].mxu0 %v3335
    %v3417 = vpop.f32.mrb[0].mxu0
    %v3418 = vadd.f32 0.0, %v3417
    %v3419 = vpop.f32.mrb[0].mxu0
    %v3420 = vpop.f32.mrb[0].mxu0
    %v3421 = vadd.f32 0.0, %v3420
    %v3422 = vpop.f32.mrb[0].mxu0
    %3423 = vmatprep.mubr.bf16.mxu0 0
    %3424 = vmatmul.mubr.bf16.gmra.mrb[0].mxu0 %v3338
    %v3425 = vpop.f32.mrb[0].mxu0
    %v3426 = vadd.f32 0.0, %v3425
    %v3427 = vpop.f32.mrb[0].mxu0
    %v3428 = vpop.f32.mrb[0].mxu0
    %v3429 = vadd.f32 0.0, %v3428
    %v3430 = vpop.f32.mrb[0].mxu0
    %3431 = vmatprep.mubr.bf16.mxu0 0
    %3432 = vmatmul.mubr.bf16.gmra.mrb[0].mxu0 %v3341
    %v3433 = vpop.f32.mrb[0].mxu0
    %v3434 = vadd.f32 0.0, %v3433
    %v3435 = vpop.f32.mrb[0].mxu0
    %v3436 = vpop.f32.mrb[0].mxu0
    %v3437 = vadd.f32 0.0, %v3436
    %v3438 = vpop.f32.mrb[0].mxu0
    %3439 = vdwg.mxu0
    %3448 = vrot.lane.b32.xlu0 %v1900, 32
    %v3449 = vpop.permute.xlu0 %3448
    %3450 = vrot.lane.b32.xlu0 %v1903, 32
    %v3451 = vpop.permute.xlu0 %3450
    %3452 = vrot.lane.b32.xlu0 %v1908, 32
    %v3453 = vpop.permute.xlu0 %3452
    %3454 = vrot.lane.b32.xlu0 %v1911, 32
    %v3455 = vpop.permute.xlu0 %3454
    %3456 = vrot.lane.b32.xlu0 %v1916, 32
    %v3457 = vpop.permute.xlu0 %3456
    %3458 = vrot.lane.b32.xlu0 %v1919, 32
    %v3459 = vpop.permute.xlu0 %3458
    %3460 = vrot.lane.b32.xlu0 %v1924, 32
    %v3461 = vpop.permute.xlu0 %3460
    %3462 = vrot.lane.b32.xlu0 %v1927, 32
    %v3463 = vpop.permute.xlu0 %3462
    %3480 = vrot.lane.b32.xlu0 %v2864, 64
    %v3481 = vpop.permute.xlu0 %3480
    %3482 = vrot.lane.b32.xlu0 %v2867, 64
    %v3483 = vpop.permute.xlu0 %3482
    %3484 = vrot.lane.b32.xlu0 %v2872, 64
    %v3485 = vpop.permute.xlu0 %3484
    %3486 = vrot.lane.b32.xlu0 %v2875, 64
    %v3487 = vpop.permute.xlu0 %3486
    %3488 = vrot.lane.b32.xlu0 %v2880, 64
    %v3489 = vpop.permute.xlu0 %3488
    %3490 = vrot.lane.b32.xlu0 %v2883, 64
    %v3491 = vpop.permute.xlu0 %3490
    %3492 = vrot.lane.b32.xlu0 %v2888, 64
    %v3493 = vpop.permute.xlu0 %3492
    %3494 = vrot.lane.b32.xlu0 %v2891, 64
    %v3495 = vpop.permute.xlu0 %3494
    %3512 = vrot.lane.b32.xlu0 %v2896, 96
    %v3513 = vpop.permute.xlu0 %3512
    %3514 = vrot.lane.b32.xlu0 %v2899, 96
    %v3515 = vpop.permute.xlu0 %3514
    %3516 = vrot.lane.b32.xlu0 %v2904, 96
    %v3517 = vpop.permute.xlu0 %3516
    %3518 = vrot.lane.b32.xlu0 %v2907, 96
    %v3519 = vpop.permute.xlu0 %3518
    %3520 = vrot.lane.b32.xlu0 %v2912, 96
    %v3521 = vpop.permute.xlu0 %3520
    %3522 = vrot.lane.b32.xlu0 %v2915, 96
    %v3523 = vpop.permute.xlu0 %3522
    %3524 = vrot.lane.b32.xlu0 %v2920, 96
    %v3525 = vpop.permute.xlu0 %3524
    %3526 = vrot.lane.b32.xlu0 %v2923, 96
    %v3527 = vpop.permute.xlu0 %3526
    %v3536 = vsel %vm1026, %v1868, %v3449
    %v3537 = vsel %vm1026, %v1871, %v3451
    %v3538 = vsel %vm1026, %v1876, %v3453
    %v3539 = vsel %vm1026, %v1879, %v3455
    %v3540 = vsel %vm1026, %v1884, %v3457
    %v3541 = vsel %vm1026, %v1887, %v3459
    %v3542 = vsel %vm1026, %v1892, %v3461
    %v3543 = vsel %vm1026, %v1895, %v3463
    %v3544 = vsel %vm1123, %v3536, %v3481
    %v3545 = vsel %vm1123, %v3537, %v3483
    %v3546 = vsel %vm1123, %v3538, %v3485
    %v3547 = vsel %vm1123, %v3539, %v3487
    %v3548 = vsel %vm1123, %v3540, %v3489
    %v3549 = vsel %vm1123, %v3541, %v3491
    %v3550 = vsel %vm1123, %v3542, %v3493
    %v3551 = vsel %vm1123, %v3543, %v3495
    %v3552 = vsel %vm1132, %v3544, %v3513
    %v3553 = vsel %vm1132, %v3545, %v3515
    %v3554 = vsel %vm1132, %v3546, %v3517
    %v3555 = vsel %vm1132, %v3547, %v3519
    %v3556 = vsel %vm1132, %v3548, %v3521
    %v3557 = vsel %vm1132, %v3549, %v3523
    %v3558 = vsel %vm1132, %v3550, %v3525
    %v3559 = vsel %vm1132, %v3551, %v3527
    %3568 = vrot.lane.b32.xlu0 %v2382, 32
    %v3569 = vpop.permute.xlu0 %3568
    %3570 = vrot.lane.b32.xlu0 %v2385, 32
    %v3571 = vpop.permute.xlu0 %3570
    %3572 = vrot.lane.b32.xlu0 %v2390, 32
    %v3573 = vpop.permute.xlu0 %3572
    %3574 = vrot.lane.b32.xlu0 %v2393, 32
    %v3575 = vpop.permute.xlu0 %3574
    %3576 = vrot.lane.b32.xlu0 %v2398, 32
    %v3577 = vpop.permute.xlu0 %3576
    %3578 = vrot.lane.b32.xlu0 %v2401, 32
    %v3579 = vpop.permute.xlu0 %3578
    %3580 = vrot.lane.b32.xlu0 %v2406, 32
    %v3581 = vpop.permute.xlu0 %3580
    %3582 = vrot.lane.b32.xlu0 %v2409, 32
    %v3583 = vpop.permute.xlu0 %3582
    %3600 = vrot.lane.b32.xlu0 %v3378, 64
    %v3601 = vpop.permute.xlu0 %3600
    %3602 = vrot.lane.b32.xlu0 %v3381, 64
    %v3603 = vpop.permute.xlu0 %3602
    %3604 = vrot.lane.b32.xlu0 %v3386, 64
    %v3605 = vpop.permute.xlu0 %3604
    %3606 = vrot.lane.b32.xlu0 %v3389, 64
    %v3607 = vpop.permute.xlu0 %3606
    %3608 = vrot.lane.b32.xlu0 %v3394, 64
    %v3609 = vpop.permute.xlu0 %3608
    %3610 = vrot.lane.b32.xlu0 %v3397, 64
    %v3611 = vpop.permute.xlu0 %3610
    %3612 = vrot.lane.b32.xlu0 %v3402, 64
    %v3613 = vpop.permute.xlu0 %3612
    %3614 = vrot.lane.b32.xlu0 %v3405, 64
    %v3615 = vpop.permute.xlu0 %3614
    %3632 = vrot.lane.b32.xlu0 %v3410, 96
    %v3633 = vpop.permute.xlu0 %3632
    %3634 = vrot.lane.b32.xlu0 %v3413, 96
    %v3635 = vpop.permute.xlu0 %3634
    %3636 = vrot.lane.b32.xlu0 %v3418, 96
    %v3637 = vpop.permute.xlu0 %3636
    %3638 = vrot.lane.b32.xlu0 %v3421, 96
    %v3639 = vpop.permute.xlu0 %3638
    %3640 = vrot.lane.b32.xlu0 %v3426, 96
    %v3641 = vpop.permute.xlu0 %3640
    %3642 = vrot.lane.b32.xlu0 %v3429, 96
    %v3643 = vpop.permute.xlu0 %3642
    %3644 = vrot.lane.b32.xlu0 %v3434, 96
    %v3645 = vpop.permute.xlu0 %3644
    %3646 = vrot.lane.b32.xlu0 %v3437, 96
    %v3647 = vpop.permute.xlu0 %3646
    %v3656 = vsel %vm1026, %v2350, %v3569
    %v3657 = vsel %vm1026, %v2353, %v3571
    %v3658 = vsel %vm1026, %v2358, %v3573
    %v3659 = vsel %vm1026, %v2361, %v3575
    %v3660 = vsel %vm1026, %v2366, %v3577
    %v3661 = vsel %vm1026, %v2369, %v3579
    %v3662 = vsel %vm1026, %v2374, %v3581
    %v3663 = vsel %vm1026, %v2377, %v3583
    %v3664 = vsel %vm1123, %v3656, %v3601
    %v3665 = vsel %vm1123, %v3657, %v3603
    %v3666 = vsel %vm1123, %v3658, %v3605
    %v3667 = vsel %vm1123, %v3659, %v3607
    %v3668 = vsel %vm1123, %v3660, %v3609
    %v3669 = vsel %vm1123, %v3661, %v3611
    %v3670 = vsel %vm1123, %v3662, %v3613
    %v3671 = vsel %vm1123, %v3663, %v3615
    %v3672 = vsel %vm1132, %v3664, %v3633
    %v3673 = vsel %vm1132, %v3665, %v3635
    %v3674 = vsel %vm1132, %v3666, %v3637
    %v3675 = vsel %vm1132, %v3667, %v3639
    %v3676 = vsel %vm1132, %v3668, %v3641
    %v3677 = vsel %vm1132, %v3669, %v3643
    %v3678 = vsel %vm1132, %v3670, %v3645
    %v3679 = vsel %vm1132, %v3671, %v3647
    %v3680 = vpack.c.bf16 %v3553, %v3552
    %v3681 = vpack.c.bf16 %v3555, %v3554
    %v3682 = vpack.c.bf16 %v3557, %v3556
    %v3683 = vpack.c.bf16 %v3559, %v3558
    %v3684 = vpack.c.bf16 %v3673, %v3672
    %v3685 = vpack.c.bf16 %v3675, %v3674
    %v3686 = vpack.c.bf16 %v3677, %v3676
    %v3687 = vpack.c.bf16 %v3679, %v3678
    %v3688 = vld [vmem:[%s4] sm:$0xf]
    %v3689 = vld [vmem:[%s4 + $0x4] sm:$0xf]
    %v3690 = vld [vmem:[%s4 + $0x8] sm:$0xf]
    %v3691 = vld [vmem:[%s4 + $0xc] sm:$0xf]
    %v3692 = vld [vmem:[%s4 + $0x10] sm:$0xf]
    %v3693 = vld [vmem:[%s4 + $0x14] sm:$0xf]
    %v3694 = vld [vmem:[%s4 + $0x18] sm:$0xf]
    %v3695 = vld [vmem:[%s4 + $0x1c] sm:$0xf]
    %v3696 = vld [vmem:[%s4 + $0x20] sm:$0xf]
    %v3697 = vld [vmem:[%s4 + $0x24] sm:$0xf]
    %v3698 = vld [vmem:[%s4 + $0x28] sm:$0xf]
    %v3699 = vld [vmem:[%s4 + $0x2c] sm:$0xf]
    %v3700 = vld [vmem:[%s4 + $0x30] sm:$0xf]
    %v3701 = vld [vmem:[%s4 + $0x34] sm:$0xf]
    %v3702 = vld [vmem:[%s4 + $0x38] sm:$0xf]
    %v3703 = vld [vmem:[%s4 + $0x3c] sm:$0xf]
    %v3720 = vunpack.c.l.b16 %v3688
    %v3721 = vunpack.c.l.b16 %v3689
    %v3722 = vunpack.c.l.b16 %v3690
    %v3723 = vunpack.c.l.b16 %v3691
    %v3724 = vunpack.c.l.b16 %v3692
    %v3725 = vunpack.c.l.b16 %v3693
    %v3726 = vunpack.c.l.b16 %v3694
    %v3727 = vunpack.c.l.b16 %v3695
    %v3728 = vunpack.c.l.b16 %v3696
    %v3729 = vunpack.c.l.b16 %v3697
    %v3730 = vunpack.c.l.b16 %v3698
    %v3731 = vunpack.c.l.b16 %v3699
    %v3732 = vunpack.c.l.b16 %v3700
    %v3733 = vunpack.c.l.b16 %v3701
    %v3734 = vunpack.c.l.b16 %v3702
    %v3735 = vunpack.c.l.b16 %v3703
    %v3736 = vpack.c.b16 %v3721, %v3720
    %v3737 = vpack.c.b16 %v3723, %v3722
    %v3738 = vpack.c.b16 %v3725, %v3724
    %v3739 = vpack.c.b16 %v3727, %v3726
    %v3740 = vpack.c.b16 %v3729, %v3728
    %v3741 = vpack.c.b16 %v3731, %v3730
    %v3742 = vpack.c.b16 %v3733, %v3732
    %v3743 = vpack.c.b16 %v3735, %v3734
    %3752 = vmatprep.subr.bf16.mxu0 0
    %3753 = vmatpush1.bf16.msra.mxu0 %v3736
    %3754 = vmatprep.subr.bf16.mxu0 0
    %3755 = vmatpush1.bf16.msra.mxu0 %v3737
    %3756 = vmatprep.subr.bf16.mxu0 0
    %3757 = vmatpush1.bf16.msra.mxu0 %v3738
    %3758 = vmatprep.subr.bf16.mxu0 0
    %3759 = vmatpush1.bf16.msra.mxu0 %v3739
    %3760 = vmatprep.subr.bf16.mxu0 0
    %3761 = vmatpush1.bf16.msra.mxu0 %v3740
    %3762 = vmatprep.subr.bf16.mxu0 0
    %3763 = vmatpush1.bf16.msra.mxu0 %v3741
    %3764 = vmatprep.subr.bf16.mxu0 0
    %3765 = vmatpush1.bf16.msra.mxu0 %v3742
    %3766 = vmatprep.subr.bf16.mxu0 0
    %3767 = vmatpush1.bf16.msra.mxu0 %v3743
    %3768 = vmatprep.subr.bf16.mxu0 0
    %3769 = vmatpush1.bf16.msra.mxu0 0
    %3770 = vmatprep.subr.bf16.mxu0 0
    %3771 = vmatpush1.bf16.msra.mxu0 0
    %3772 = vmatprep.subr.bf16.mxu0 0
    %3773 = vmatpush1.bf16.msra.mxu0 0
    %3774 = vmatprep.subr.bf16.mxu0 0
    %3775 = vmatpush1.bf16.msra.mxu0 0
    %3776 = vmatprep.subr.bf16.mxu0 0
    %3777 = vmatpush1.bf16.msra.mxu0 0
    %3778 = vmatprep.subr.bf16.mxu0 0
    %3779 = vmatpush1.bf16.msra.mxu0 0
    %3780 = vmatprep.subr.bf16.mxu0 0
    %3781 = vmatpush1.bf16.msra.mxu0 0
    %3782 = vmatprep.subr.bf16.mxu0 0
    %3783 = vmatpush1.bf16.msra.mxu0 0
    %3784 = vmatprep.mubr.bf16.mxu0 0
    %3785 = vmatmul.mubr.bf16.gmra.mrb[0].mxu0 %v3680
    %v3786 = vpop.f32.mrb[0].mxu0
    %v3787 = vadd.f32 0.0, %v3786
    %v3788 = vpop.f32.mrb[0].mxu0
    %v3789 = vpop.f32.mrb[0].mxu0
    %v3790 = vadd.f32 0.0, %v3789
    %v3791 = vpop.f32.mrb[0].mxu0
    %3792 = vmatprep.mubr.bf16.mxu0 0
    %3793 = vmatmul.mubr.bf16.gmra.mrb[0].mxu0 %v3681
    %v3794 = vpop.f32.mrb[0].mxu0
    %v3795 = vadd.f32 0.0, %v3794
    %v3796 = vpop.f32.mrb[0].mxu0
    %v3797 = vpop.f32.mrb[0].mxu0
    %v3798 = vadd.f32 0.0, %v3797
    %v3799 = vpop.f32.mrb[0].mxu0
    %3800 = vmatprep.mubr.bf16.mxu0 0
    %3801 = vmatmul.mubr.bf16.gmra.mrb[0].mxu0 %v3682
    %v3802 = vpop.f32.mrb[0].mxu0
    %v3803 = vadd.f32 0.0, %v3802
    %v3804 = vpop.f32.mrb[0].mxu0
    %v3805 = vpop.f32.mrb[0].mxu0
    %v3806 = vadd.f32 0.0, %v3805
    %v3807 = vpop.f32.mrb[0].mxu0
    %3808 = vmatprep.mubr.bf16.mxu0 0
    %3809 = vmatmul.mubr.bf16.gmra.mrb[0].mxu0 %v3683
    %v3810 = vpop.f32.mrb[0].mxu0
    %v3811 = vadd.f32 0.0, %v3810
    %v3812 = vpop.f32.mrb[0].mxu0
    %v3813 = vpop.f32.mrb[0].mxu0
    %v3814 = vadd.f32 0.0, %v3813
    %v3815 = vpop.f32.mrb[0].mxu0
    %3816 = vmatprep.mubr.bf16.mxu0 0
    %3817 = vmatmul.mubr.bf16.gmra.mrb[0].mxu0 %v3684
    %v3818 = vpop.f32.mrb[0].mxu0
    %v3819 = vadd.f32 0.0, %v3818
    %v3820 = vpop.f32.mrb[0].mxu0
    %v3821 = vpop.f32.mrb[0].mxu0
    %v3822 = vadd.f32 0.0, %v3821
    %v3823 = vpop.f32.mrb[0].mxu0
    %3824 = vmatprep.mubr.bf16.mxu0 0
    %3825 = vmatmul.mubr.bf16.gmra.mrb[0].mxu0 %v3685
    %v3826 = vpop.f32.mrb[0].mxu0
    %v3827 = vadd.f32 0.0, %v3826
    %v3828 = vpop.f32.mrb[0].mxu0
    %v3829 = vpop.f32.mrb[0].mxu0
    %v3830 = vadd.f32 0.0, %v3829
    %v3831 = vpop.f32.mrb[0].mxu0
    %3832 = vmatprep.mubr.bf16.mxu0 0
    %3833 = vmatmul.mubr.bf16.gmra.mrb[0].mxu0 %v3686
    %v3834 = vpop.f32.mrb[0].mxu0
    %v3835 = vadd.f32 0.0, %v3834
    %v3836 = vpop.f32.mrb[0].mxu0
    %v3837 = vpop.f32.mrb[0].mxu0
    %v3838 = vadd.f32 0.0, %v3837
    %v3839 = vpop.f32.mrb[0].mxu0
    %3840 = vmatprep.mubr.bf16.mxu0 0
    %3841 = vmatmul.mubr.bf16.gmra.mrb[0].mxu0 %v3687
    %v3842 = vpop.f32.mrb[0].mxu0
    %v3843 = vadd.f32 0.0, %v3842
    %v3844 = vpop.f32.mrb[0].mxu0
    %v3845 = vpop.f32.mrb[0].mxu0
    %v3846 = vadd.f32 0.0, %v3845
    %v3847 = vpop.f32.mrb[0].mxu0
    %3848 = vdwg.mxu0
    %v3849 = vadd.f32 %v401, %v3787
    %v3850 = vadd.f32 %v402, %v3790
    %v3851 = vadd.f32 %v403, %v3795
    %v3852 = vadd.f32 %v404, %v3798
    %v3853 = vadd.f32 %v405, %v3803
    %v3854 = vadd.f32 %v406, %v3806
    %v3855 = vadd.f32 %v407, %v3811
    %v3856 = vadd.f32 %v408, %v3814
    %v3857 = vadd.f32 %v409, %v3819
    %v3858 = vadd.f32 %v410, %v3822
    %v3859 = vadd.f32 %v411, %v3827
    %v3860 = vadd.f32 %v412, %v3830
    %v3861 = vadd.f32 %v413, %v3835
    %v3862 = vadd.f32 %v414, %v3838
    %v3863 = vadd.f32 %v415, %v3843
    %v3864 = vadd.f32 %v416, %v3846
    %v3865 = vmul.f32 %v3849, %v3849
    %v3866 = vmul.f32 %v3850, %v3850
    %v3867 = vmul.f32 %v3851, %v3851
    %v3868 = vmul.f32 %v3852, %v3852
    %v3869 = vmul.f32 %v3853, %v3853
    %v3870 = vmul.f32 %v3854, %v3854
    %v3871 = vmul.f32 %v3855, %v3855
    %v3872 = vmul.f32 %v3856, %v3856
    %v3873 = vmul.f32 %v3857, %v3857
    %v3874 = vmul.f32 %v3858, %v3858
    %v3875 = vmul.f32 %v3859, %v3859
    %v3876 = vmul.f32 %v3860, %v3860
    %v3877 = vmul.f32 %v3861, %v3861
    %v3878 = vmul.f32 %v3862, %v3862
    %v3879 = vmul.f32 %v3863, %v3863
    %v3880 = vmul.f32 %v3864, %v3864
    %3881 = vadd.xlane.f32.xlu0 %v3865
    %v3882 = vpop.xlane.xlu0 %3881
    %3883 = vadd.xlane.f32.xlu0 %v3866
    %v3884 = vpop.xlane.xlu0 %3883
    %3885 = vadd.xlane.f32.xlu0 %v3867
    %v3886 = vpop.xlane.xlu0 %3885
    %3887 = vadd.xlane.f32.xlu0 %v3868
    %v3888 = vpop.xlane.xlu0 %3887
    %3889 = vadd.xlane.f32.xlu0 %v3869
    %v3890 = vpop.xlane.xlu0 %3889
    %3891 = vadd.xlane.f32.xlu0 %v3870
    %v3892 = vpop.xlane.xlu0 %3891
    %3893 = vadd.xlane.f32.xlu0 %v3871
    %v3894 = vpop.xlane.xlu0 %3893
    %3895 = vadd.xlane.f32.xlu0 %v3872
    %v3896 = vpop.xlane.xlu0 %3895
    %3897 = vadd.xlane.f32.xlu0 %v3873
    %v3898 = vpop.xlane.xlu0 %3897
    %3899 = vadd.xlane.f32.xlu0 %v3874
    %v3900 = vpop.xlane.xlu0 %3899
    %3901 = vadd.xlane.f32.xlu0 %v3875
    %v3902 = vpop.xlane.xlu0 %3901
    %3903 = vadd.xlane.f32.xlu0 %v3876
    %v3904 = vpop.xlane.xlu0 %3903
    %3905 = vadd.xlane.f32.xlu0 %v3877
    %v3906 = vpop.xlane.xlu0 %3905
    %3907 = vadd.xlane.f32.xlu0 %v3878
    %v3908 = vpop.xlane.xlu0 %3907
    %3909 = vadd.xlane.f32.xlu0 %v3879
    %v3910 = vpop.xlane.xlu0 %3909
    %3911 = vadd.xlane.f32.xlu0 %v3880
    %v3912 = vpop.xlane.xlu0 %3911
    %v3913 = vmul.f32 %v3882, %v465
    %v3914 = vmul.f32 %v3884, %v465
    %v3915 = vmul.f32 %v3886, %v465
    %v3916 = vmul.f32 %v3888, %v465
    %v3917 = vmul.f32 %v3890, %v465
    %v3918 = vmul.f32 %v3892, %v465
    %v3919 = vmul.f32 %v3894, %v465
    %v3920 = vmul.f32 %v3896, %v465
    %v3921 = vmul.f32 %v3898, %v465
    %v3922 = vmul.f32 %v3900, %v465
    %v3923 = vmul.f32 %v3902, %v465
    %v3924 = vmul.f32 %v3904, %v465
    %v3925 = vmul.f32 %v3906, %v465
    %v3926 = vmul.f32 %v3908, %v465
    %v3927 = vmul.f32 %v3910, %v465
    %v3928 = vmul.f32 %v3912, %v465
    %v3929 = vadd.f32 %v3913, 1e-06
    %v3930 = vadd.f32 %v3914, 1e-06
    %v3931 = vadd.f32 %v3915, 1e-06
    %v3932 = vadd.f32 %v3916, 1e-06
    %v3933 = vadd.f32 %v3917, 1e-06
    %v3934 = vadd.f32 %v3918, 1e-06
    %v3935 = vadd.f32 %v3919, 1e-06
    %v3936 = vadd.f32 %v3920, 1e-06
    %v3937 = vadd.f32 %v3921, 1e-06
    %v3938 = vadd.f32 %v3922, 1e-06
    %v3939 = vadd.f32 %v3923, 1e-06
    %v3940 = vadd.f32 %v3924, 1e-06
    %v3941 = vadd.f32 %v3925, 1e-06
    %v3942 = vadd.f32 %v3926, 1e-06
    %v3943 = vadd.f32 %v3927, 1e-06
    %v3944 = vadd.f32 %v3928, 1e-06
    %v3945 = vrsqrt.pop %v3929
    %v3946 = vrsqrt.pop %v3930
    %v3947 = vrsqrt.pop %v3931
    %v3948 = vrsqrt.pop %v3932
    %v3949 = vrsqrt.pop %v3933
    %v3950 = vrsqrt.pop %v3934
    %v3951 = vrsqrt.pop %v3935
    %v3952 = vrsqrt.pop %v3936
    %v3953 = vrsqrt.pop %v3937
    %v3954 = vrsqrt.pop %v3938
    %v3955 = vrsqrt.pop %v3939
    %v3956 = vrsqrt.pop %v3940
    %v3957 = vrsqrt.pop %v3941
    %v3958 = vrsqrt.pop %v3942
    %v3959 = vrsqrt.pop %v3943
    %v3960 = vrsqrt.pop %v3944
    %v3961 = vmul.f32 %v3849, %v3945
    %v3962 = vmul.f32 %v3850, %v3946
    %v3963 = vmul.f32 %v3851, %v3947
    %v3964 = vmul.f32 %v3852, %v3948
    %v3965 = vmul.f32 %v3853, %v3949
    %v3966 = vmul.f32 %v3854, %v3950
    %v3967 = vmul.f32 %v3855, %v3951
    %v3968 = vmul.f32 %v3856, %v3952
    %v3969 = vmul.f32 %v3857, %v3953
    %v3970 = vmul.f32 %v3858, %v3954
    %v3971 = vmul.f32 %v3859, %v3955
    %v3972 = vmul.f32 %v3860, %v3956
    %v3973 = vmul.f32 %v3861, %v3957
    %v3974 = vmul.f32 %v3862, %v3958
    %v3975 = vmul.f32 %v3863, %v3959
    %v3976 = vmul.f32 %v3864, %v3960
    %v3977 = vld [vmem:[%s2 + $0x1] sm:$0x1]
    %v3978 = vlaneseq
    %v3979 = vshrl.u32 %v3978, 7
    %v3980 = vsub.s32 0, %v3979
    %v3981 = vrot.slane %v3977, %v3980
    %v3982 = vmul.f32 %v3961, %v3981
    %v3983 = vmul.f32 %v3962, %v3981
    %v3984 = vmul.f32 %v3963, %v3981
    %v3985 = vmul.f32 %v3964, %v3981
    %v3986 = vmul.f32 %v3965, %v3981
    %v3987 = vmul.f32 %v3966, %v3981
    %v3988 = vmul.f32 %v3967, %v3981
    %v3989 = vmul.f32 %v3968, %v3981
    %v3990 = vmul.f32 %v3969, %v3981
    %v3991 = vmul.f32 %v3970, %v3981
    %v3992 = vmul.f32 %v3971, %v3981
    %v3993 = vmul.f32 %v3972, %v3981
    %v3994 = vmul.f32 %v3973, %v3981
    %v3995 = vmul.f32 %v3974, %v3981
    %v3996 = vmul.f32 %v3975, %v3981
    %v3997 = vmul.f32 %v3976, %v3981
    %s3998 = smul.u32 4, 16
    %s3999 = smul.u32 %s3998, 4
    %s4000 = sshll.u32 %s3999, 4
    %4001 = dma.done [#allocation4], %s4000
    %v4002 = vpack.c.bf16 %v3983, %v3982
    %v4003 = vpack.c.bf16 %v3985, %v3984
    %v4004 = vpack.c.bf16 %v3987, %v3986
    %v4005 = vpack.c.bf16 %v3989, %v3988
    %v4006 = vpack.c.bf16 %v3991, %v3990
    %v4007 = vpack.c.bf16 %v3993, %v3992
    %v4008 = vpack.c.bf16 %v3995, %v3994
    %v4009 = vpack.c.bf16 %v3997, %v3996
    %v4010 = vld [vmem:[#allocation2] sm:$0xff]
    %v4011 = vld [vmem:[#allocation2 + $0x8] sm:$0xff]
    %v4012 = vld [vmem:[#allocation2 + $0x10] sm:$0xff]
    %v4013 = vld [vmem:[#allocation2 + $0x18] sm:$0xff]
    %v4014 = vld [vmem:[#allocation2 + $0x20] sm:$0xff]
    %v4015 = vld [vmem:[#allocation2 + $0x28] sm:$0xff]
    %v4016 = vld [vmem:[#allocation2 + $0x30] sm:$0xff]
    %v4017 = vld [vmem:[#allocation2 + $0x38] sm:$0xff]
    %v4018 = vld [vmem:[#allocation2 + $0x40] sm:$0xff]
    %v4019 = vld [vmem:[#allocation2 + $0x48] sm:$0xff]
    %v4020 = vld [vmem:[#allocation2 + $0x50] sm:$0xff]
    %v4021 = vld [vmem:[#allocation2 + $0x58] sm:$0xff]
    %v4022 = vld [vmem:[#allocation2 + $0x60] sm:$0xff]
    %v4023 = vld [vmem:[#allocation2 + $0x68] sm:$0xff]
    %v4024 = vld [vmem:[#allocation2 + $0x70] sm:$0xff]
    %v4025 = vld [vmem:[#allocation2 + $0x78] sm:$0xff]
    %v4026 = vld [vmem:[#allocation2 + $0x80] sm:$0xff]
    %v4027 = vld [vmem:[#allocation2 + $0x88] sm:$0xff]
    %v4028 = vld [vmem:[#allocation2 + $0x90] sm:$0xff]
    %v4029 = vld [vmem:[#allocation2 + $0x98] sm:$0xff]
    %v4030 = vld [vmem:[#allocation2 + $0xa0] sm:$0xff]
    %v4031 = vld [vmem:[#allocation2 + $0xa8] sm:$0xff]
    %v4032 = vld [vmem:[#allocation2 + $0xb0] sm:$0xff]
    %v4033 = vld [vmem:[#allocation2 + $0xb8] sm:$0xff]
    %v4034 = vld [vmem:[#allocation2 + $0xc0] sm:$0xff]
    %v4035 = vld [vmem:[#allocation2 + $0xc8] sm:$0xff]
    %v4036 = vld [vmem:[#allocation2 + $0xd0] sm:$0xff]
    %v4037 = vld [vmem:[#allocation2 + $0xd8] sm:$0xff]
    %v4038 = vld [vmem:[#allocation2 + $0xe0] sm:$0xff]
    %v4039 = vld [vmem:[#allocation2 + $0xe8] sm:$0xff]
    %v4040 = vld [vmem:[#allocation2 + $0xf0] sm:$0xff]
    %v4041 = vld [vmem:[#allocation2 + $0xf8] sm:$0xff]
    %4042 = vmatprep.subr.bf16.mxu0 %v4011
    %4043 = vmatpush1.bf16.msra.mxu0 %v4010
    %4044 = vmatprep.subr.bf16.mxu0 %v4015
    %4045 = vmatpush1.bf16.msra.mxu0 %v4014
    %4046 = vmatprep.subr.bf16.mxu0 %v4019
    %4047 = vmatpush1.bf16.msra.mxu0 %v4018
    %4048 = vmatprep.subr.bf16.mxu0 %v4023
    %4049 = vmatpush1.bf16.msra.mxu0 %v4022
    %4050 = vmatprep.subr.bf16.mxu0 %v4027
    %4051 = vmatpush1.bf16.msra.mxu0 %v4026
    %4052 = vmatprep.subr.bf16.mxu0 %v4031
    %4053 = vmatpush1.bf16.msra.mxu0 %v4030
    %4054 = vmatprep.subr.bf16.mxu0 %v4035
    %4055 = vmatpush1.bf16.msra.mxu0 %v4034
    %4056 = vmatprep.subr.bf16.mxu0 %v4039
    %4057 = vmatpush1.bf16.msra.mxu0 %v4038
    %4058 = vmatprep.subr.bf16.mxu0 0
    %4059 = vmatpush1.bf16.msra.mxu0 0
    %4060 = vmatprep.subr.bf16.mxu0 0
    %4061 = vmatpush1.bf16.msra.mxu0 0
    %4062 = vmatprep.subr.bf16.mxu0 0
    %4063 = vmatpush1.bf16.msra.mxu0 0
    %4064 = vmatprep.subr.bf16.mxu0 0
    %4065 = vmatpush1.bf16.msra.mxu0 0
    %4066 = vmatprep.subr.bf16.mxu0 0
    %4067 = vmatpush1.bf16.msra.mxu0 0
    %4068 = vmatprep.subr.bf16.mxu0 0
    %4069 = vmatpush1.bf16.msra.mxu0 0
    %4070 = vmatprep.subr.bf16.mxu0 0
    %4071 = vmatpush1.bf16.msra.mxu0 0
    %4072 = vmatprep.subr.bf16.mxu0 0
    %4073 = vmatpush1.bf16.msra.mxu0 0
    %4074 = vmatprep.mubr.bf16.mxu0 0
    %4075 = vmatmul.mubr.bf16.gmra.mrb[0].mxu0 %v4002
    %v4076 = vpop.f32.mrb[0].mxu0
    %v4077 = vadd.f32 0.0, %v4076
    %v4078 = vpop.f32.mrb[0].mxu0
    %v4079 = vadd.f32 0.0, %v4078
    %v4080 = vpop.f32.mrb[0].mxu0
    %v4081 = vadd.f32 0.0, %v4080
    %v4082 = vpop.f32.mrb[0].mxu0
    %v4083 = vadd.f32 0.0, %v4082
    %4084 = vmatprep.mubr.bf16.mxu0 0
    %4085 = vmatmul.mubr.bf16.gmra.mrb[0].mxu0 %v4003
    %v4086 = vpop.f32.mrb[0].mxu0
    %v4087 = vadd.f32 0.0, %v4086
    %v4088 = vpop.f32.mrb[0].mxu0
    %v4089 = vadd.f32 0.0, %v4088
    %v4090 = vpop.f32.mrb[0].mxu0
    %v4091 = vadd.f32 0.0, %v4090
    %v4092 = vpop.f32.mrb[0].mxu0
    %v4093 = vadd.f32 0.0, %v4092
    %4094 = vmatprep.mubr.bf16.mxu0 0
    %4095 = vmatmul.mubr.bf16.gmra.mrb[0].mxu0 %v4004
    %v4096 = vpop.f32.mrb[0].mxu0
    %v4097 = vadd.f32 0.0, %v4096
    %v4098 = vpop.f32.mrb[0].mxu0
    %v4099 = vadd.f32 0.0, %v4098
    %v4100 = vpop.f32.mrb[0].mxu0
    %v4101 = vadd.f32 0.0, %v4100
    %v4102 = vpop.f32.mrb[0].mxu0
    %v4103 = vadd.f32 0.0, %v4102
    %4104 = vmatprep.mubr.bf16.mxu0 0
    %4105 = vmatmul.mubr.bf16.gmra.mrb[0].mxu0 %v4005
    %v4106 = vpop.f32.mrb[0].mxu0
    %v4107 = vadd.f32 0.0, %v4106
    %v4108 = vpop.f32.mrb[0].mxu0
    %v4109 = vadd.f32 0.0, %v4108
    %v4110 = vpop.f32.mrb[0].mxu0
    %v4111 = vadd.f32 0.0, %v4110
    %v4112 = vpop.f32.mrb[0].mxu0
    %v4113 = vadd.f32 0.0, %v4112
    %4114 = vmatprep.mubr.bf16.mxu0 0
    %4115 = vmatmul.mubr.bf16.gmra.mrb[0].mxu0 %v4006
    %v4116 = vpop.f32.mrb[0].mxu0
    %v4117 = vadd.f32 0.0, %v4116
    %v4118 = vpop.f32.mrb[0].mxu0
    %v4119 = vadd.f32 0.0, %v4118
    %v4120 = vpop.f32.mrb[0].mxu0
    %v4121 = vadd.f32 0.0, %v4120
    %v4122 = vpop.f32.mrb[0].mxu0
    %v4123 = vadd.f32 0.0, %v4122
    %4124 = vmatprep.mubr.bf16.mxu0 0
    %4125 = vmatmul.mubr.bf16.gmra.mrb[0].mxu0 %v4007
    %v4126 = vpop.f32.mrb[0].mxu0
    %v4127 = vadd.f32 0.0, %v4126
    %v4128 = vpop.f32.mrb[0].mxu0
    %v4129 = vadd.f32 0.0, %v4128
    %v4130 = vpop.f32.mrb[0].mxu0
    %v4131 = vadd.f32 0.0, %v4130
    %v4132 = vpop.f32.mrb[0].mxu0
    %v4133 = vadd.f32 0.0, %v4132
    %4134 = vmatprep.mubr.bf16.mxu0 0
    %4135 = vmatmul.mubr.bf16.gmra.mrb[0].mxu0 %v4008
    %v4136 = vpop.f32.mrb[0].mxu0
    %v4137 = vadd.f32 0.0, %v4136
    %v4138 = vpop.f32.mrb[0].mxu0
    %v4139 = vadd.f32 0.0, %v4138
    %v4140 = vpop.f32.mrb[0].mxu0
    %v4141 = vadd.f32 0.0, %v4140
    %v4142 = vpop.f32.mrb[0].mxu0
    %v4143 = vadd.f32 0.0, %v4142
    %4144 = vmatprep.mubr.bf16.mxu0 0
    %4145 = vmatmul.mubr.bf16.gmra.mrb[0].mxu0 %v4009
    %v4146 = vpop.f32.mrb[0].mxu0
    %v4147 = vadd.f32 0.0, %v4146
    %v4148 = vpop.f32.mrb[0].mxu0
    %v4149 = vadd.f32 0.0, %v4148
    %v4150 = vpop.f32.mrb[0].mxu0
    %v4151 = vadd.f32 0.0, %v4150
    %v4152 = vpop.f32.mrb[0].mxu0
    %v4153 = vadd.f32 0.0, %v4152
    %4154 = vdwg.mxu0
    %4155 = vmatprep.subr.bf16.mxu0 %v4013
    %4156 = vmatpush1.bf16.msra.mxu0 %v4012
    %4157 = vmatprep.subr.bf16.mxu0 %v4017
    %4158 = vmatpush1.bf16.msra.mxu0 %v4016
    %4159 = vmatprep.subr.bf16.mxu0 %v4021
    %4160 = vmatpush1.bf16.msra.mxu0 %v4020
    %4161 = vmatprep.subr.bf16.mxu0 %v4025
    %4162 = vmatpush1.bf16.msra.mxu0 %v4024
    %4163 = vmatprep.subr.bf16.mxu0 %v4029
    %4164 = vmatpush1.bf16.msra.mxu0 %v4028
    %4165 = vmatprep.subr.bf16.mxu0 %v4033
    %4166 = vmatpush1.bf16.msra.mxu0 %v4032
    %4167 = vmatprep.subr.bf16.mxu0 %v4037
    %4168 = vmatpush1.bf16.msra.mxu0 %v4036
    %4169 = vmatprep.subr.bf16.mxu0 %v4041
    %4170 = vmatpush1.bf16.msra.mxu0 %v4040
    %4171 = vmatprep.subr.bf16.mxu0 0
    %4172 = vmatpush1.bf16.msra.mxu0 0
    %4173 = vmatprep.subr.bf16.mxu0 0
    %4174 = vmatpush1.bf16.msra.mxu0 0
    %4175 = vmatprep.subr.bf16.mxu0 0
    %4176 = vmatpush1.bf16.msra.mxu0 0
    %4177 = vmatprep.subr.bf16.mxu0 0
    %4178 = vmatpush1.bf16.msra.mxu0 0
    %4179 = vmatprep.subr.bf16.mxu0 0
    %4180 = vmatpush1.bf16.msra.mxu0 0
    %4181 = vmatprep.subr.bf16.mxu0 0
    %4182 = vmatpush1.bf16.msra.mxu0 0
    %4183 = vmatprep.subr.bf16.mxu0 0
    %4184 = vmatpush1.bf16.msra.mxu0 0
    %4185 = vmatprep.subr.bf16.mxu0 0
    %4186 = vmatpush1.bf16.msra.mxu0 0
    %4187 = vmatprep.mubr.bf16.mxu0 0
    %4188 = vmatmul.mubr.bf16.gmra.mrb[0].mxu0 %v4002
    %v4189 = vpop.f32.mrb[0].mxu0
    %v4190 = vadd.f32 0.0, %v4189
    %v4191 = vpop.f32.mrb[0].mxu0
    %v4192 = vadd.f32 0.0, %v4191
    %v4193 = vpop.f32.mrb[0].mxu0
    %v4194 = vadd.f32 0.0, %v4193
    %v4195 = vpop.f32.mrb[0].mxu0
    %v4196 = vadd.f32 0.0, %v4195
    %4197 = vmatprep.mubr.bf16.mxu0 0
    %4198 = vmatmul.mubr.bf16.gmra.mrb[0].mxu0 %v4003
    %v4199 = vpop.f32.mrb[0].mxu0
    %v4200 = vadd.f32 0.0, %v4199
    %v4201 = vpop.f32.mrb[0].mxu0
    %v4202 = vadd.f32 0.0, %v4201
    %v4203 = vpop.f32.mrb[0].mxu0
    %v4204 = vadd.f32 0.0, %v4203
    %v4205 = vpop.f32.mrb[0].mxu0
    %v4206 = vadd.f32 0.0, %v4205
    %4207 = vmatprep.mubr.bf16.mxu0 0
    %4208 = vmatmul.mubr.bf16.gmra.mrb[0].mxu0 %v4004
    %v4209 = vpop.f32.mrb[0].mxu0
    %v4210 = vadd.f32 0.0, %v4209
    %v4211 = vpop.f32.mrb[0].mxu0
    %v4212 = vadd.f32 0.0, %v4211
    %v4213 = vpop.f32.mrb[0].mxu0
    %v4214 = vadd.f32 0.0, %v4213
    %v4215 = vpop.f32.mrb[0].mxu0
    %v4216 = vadd.f32 0.0, %v4215
    %4217 = vmatprep.mubr.bf16.mxu0 0
    %4218 = vmatmul.mubr.bf16.gmra.mrb[0].mxu0 %v4005
    %v4219 = vpop.f32.mrb[0].mxu0
    %v4220 = vadd.f32 0.0, %v4219
    %v4221 = vpop.f32.mrb[0].mxu0
    %v4222 = vadd.f32 0.0, %v4221
    %v4223 = vpop.f32.mrb[0].mxu0
    %v4224 = vadd.f32 0.0, %v4223
    %v4225 = vpop.f32.mrb[0].mxu0
    %v4226 = vadd.f32 0.0, %v4225
    %4227 = vmatprep.mubr.bf16.mxu0 0
    %4228 = vmatmul.mubr.bf16.gmra.mrb[0].mxu0 %v4006
    %v4229 = vpop.f32.mrb[0].mxu0
    %v4230 = vadd.f32 0.0, %v4229
    %v4231 = vpop.f32.mrb[0].mxu0
    %v4232 = vadd.f32 0.0, %v4231
    %v4233 = vpop.f32.mrb[0].mxu0
    %v4234 = vadd.f32 0.0, %v4233
    %v4235 = vpop.f32.mrb[0].mxu0
    %v4236 = vadd.f32 0.0, %v4235
    %4237 = vmatprep.mubr.bf16.mxu0 0
    %4238 = vmatmul.mubr.bf16.gmra.mrb[0].mxu0 %v4007
    %v4239 = vpop.f32.mrb[0].mxu0
    %v4240 = vadd.f32 0.0, %v4239
    %v4241 = vpop.f32.mrb[0].mxu0
    %v4242 = vadd.f32 0.0, %v4241
    %v4243 = vpop.f32.mrb[0].mxu0
    %v4244 = vadd.f32 0.0, %v4243
    %v4245 = vpop.f32.mrb[0].mxu0
    %v4246 = vadd.f32 0.0, %v4245
    %4247 = vmatprep.mubr.bf16.mxu0 0
    %4248 = vmatmul.mubr.bf16.gmra.mrb[0].mxu0 %v4008
    %v4249 = vpop.f32.mrb[0].mxu0
    %v4250 = vadd.f32 0.0, %v4249
    %v4251 = vpop.f32.mrb[0].mxu0
    %v4252 = vadd.f32 0.0, %v4251
    %v4253 = vpop.f32.mrb[0].mxu0
    %v4254 = vadd.f32 0.0, %v4253
    %v4255 = vpop.f32.mrb[0].mxu0
    %v4256 = vadd.f32 0.0, %v4255
    %4257 = vmatprep.mubr.bf16.mxu0 0
    %4258 = vmatmul.mubr.bf16.gmra.mrb[0].mxu0 %v4009
    %v4259 = vpop.f32.mrb[0].mxu0
    %v4260 = vadd.f32 0.0, %v4259
    %v4261 = vpop.f32.mrb[0].mxu0
    %v4262 = vadd.f32 0.0, %v4261
    %v4263 = vpop.f32.mrb[0].mxu0
    %v4264 = vadd.f32 0.0, %v4263
    %v4265 = vpop.f32.mrb[0].mxu0
    %v4266 = vadd.f32 0.0, %v4265
    %4267 = vdwg.mxu0
    %v4268 = vxor.u32 %v4077, 2147483648
    %v4269 = vxor.u32 %v4079, 2147483648
    %v4270 = vxor.u32 %v4081, 2147483648
    %v4271 = vxor.u32 %v4083, 2147483648
    %v4272 = vxor.u32 %v4087, 2147483648
    %v4273 = vxor.u32 %v4089, 2147483648
    %v4274 = vxor.u32 %v4091, 2147483648
    %v4275 = vxor.u32 %v4093, 2147483648
    %v4276 = vxor.u32 %v4097, 2147483648
    %v4277 = vxor.u32 %v4099, 2147483648
    %v4278 = vxor.u32 %v4101, 2147483648
    %v4279 = vxor.u32 %v4103, 2147483648
    %v4280 = vxor.u32 %v4107, 2147483648
    %v4281 = vxor.u32 %v4109, 2147483648
    %v4282 = vxor.u32 %v4111, 2147483648
    %v4283 = vxor.u32 %v4113, 2147483648
    %v4284 = vxor.u32 %v4117, 2147483648
    %v4285 = vxor.u32 %v4119, 2147483648
    %v4286 = vxor.u32 %v4121, 2147483648
    %v4287 = vxor.u32 %v4123, 2147483648
    %v4288 = vxor.u32 %v4127, 2147483648
    %v4289 = vxor.u32 %v4129, 2147483648
    %v4290 = vxor.u32 %v4131, 2147483648
    %v4291 = vxor.u32 %v4133, 2147483648
    %v4292 = vxor.u32 %v4137, 2147483648
    %v4293 = vxor.u32 %v4139, 2147483648
    %v4294 = vxor.u32 %v4141, 2147483648
    %v4295 = vxor.u32 %v4143, 2147483648
    %v4296 = vxor.u32 %v4147, 2147483648
    %v4297 = vxor.u32 %v4149, 2147483648
    %v4298 = vxor.u32 %v4151, 2147483648
    %v4299 = vxor.u32 %v4153, 2147483648
    %v4300 = vmul.f32 %v4268, 1.442695
    %v4301 = vpow.pop %v4300
    %v4302 = vmul.f32 %v4269, 1.442695
    %v4303 = vpow.pop %v4302
    %v4304 = vmul.f32 %v4270, 1.442695
    %v4305 = vpow.pop %v4304
    %v4306 = vmul.f32 %v4271, 1.442695
    %v4307 = vpow.pop %v4306
    %v4308 = vmul.f32 %v4272, 1.442695
    %v4309 = vpow.pop %v4308
    %v4310 = vmul.f32 %v4273, 1.442695
    %v4311 = vpow.pop %v4310
    %v4312 = vmul.f32 %v4274, 1.442695
    %v4313 = vpow.pop %v4312
    %v4314 = vmul.f32 %v4275, 1.442695
    %v4315 = vpow.pop %v4314
    %v4316 = vmul.f32 %v4276, 1.442695
    %v4317 = vpow.pop %v4316
    %v4318 = vmul.f32 %v4277, 1.442695
    %v4319 = vpow.pop %v4318
    %v4320 = vmul.f32 %v4278, 1.442695
    %v4321 = vpow.pop %v4320
    %v4322 = vmul.f32 %v4279, 1.442695
    %v4323 = vpow.pop %v4322
    %v4324 = vmul.f32 %v4280, 1.442695
    %v4325 = vpow.pop %v4324
    %v4326 = vmul.f32 %v4281, 1.442695
    %v4327 = vpow.pop %v4326
    %v4328 = vmul.f32 %v4282, 1.442695
    %v4329 = vpow.pop %v4328
    %v4330 = vmul.f32 %v4283, 1.442695
    %v4331 = vpow.pop %v4330
    %v4332 = vmul.f32 %v4284, 1.442695
    %v4333 = vpow.pop %v4332
    %v4334 = vmul.f32 %v4285, 1.442695
    %v4335 = vpow.pop %v4334
    %v4336 = vmul.f32 %v4286, 1.442695
    %v4337 = vpow.pop %v4336
    %v4338 = vmul.f32 %v4287, 1.442695
    %v4339 = vpow.pop %v4338
    %v4340 = vmul.f32 %v4288, 1.442695
    %v4341 = vpow.pop %v4340
    %v4342 = vmul.f32 %v4289, 1.442695
    %v4343 = vpow.pop %v4342
    %v4344 = vmul.f32 %v4290, 1.442695
    %v4345 = vpow.pop %v4344
    %v4346 = vmul.f32 %v4291, 1.442695
    %v4347 = vpow.pop %v4346
    %v4348 = vmul.f32 %v4292, 1.442695
    %v4349 = vpow.pop %v4348
    %v4350 = vmul.f32 %v4293, 1.442695
    %v4351 = vpow.pop %v4350
    %v4352 = vmul.f32 %v4294, 1.442695
    %v4353 = vpow.pop %v4352
    %v4354 = vmul.f32 %v4295, 1.442695
    %v4355 = vpow.pop %v4354
    %v4356 = vmul.f32 %v4296, 1.442695
    %v4357 = vpow.pop %v4356
    %v4358 = vmul.f32 %v4297, 1.442695
    %v4359 = vpow.pop %v4358
    %v4360 = vmul.f32 %v4298, 1.442695
    %v4361 = vpow.pop %v4360
    %v4362 = vmul.f32 %v4299, 1.442695
    %v4363 = vpow.pop %v4362
    %v4364 = vadd.f32 %v4301, 1.0
    %v4365 = vadd.f32 %v4303, 1.0
    %v4366 = vadd.f32 %v4305, 1.0
    %v4367 = vadd.f32 %v4307, 1.0
    %v4368 = vadd.f32 %v4309, 1.0
    %v4369 = vadd.f32 %v4311, 1.0
    %v4370 = vadd.f32 %v4313, 1.0
    %v4371 = vadd.f32 %v4315, 1.0
    %v4372 = vadd.f32 %v4317, 1.0
    %v4373 = vadd.f32 %v4319, 1.0
    %v4374 = vadd.f32 %v4321, 1.0
    %v4375 = vadd.f32 %v4323, 1.0
    %v4376 = vadd.f32 %v4325, 1.0
    %v4377 = vadd.f32 %v4327, 1.0
    %v4378 = vadd.f32 %v4329, 1.0
    %v4379 = vadd.f32 %v4331, 1.0
    %v4380 = vadd.f32 %v4333, 1.0
    %v4381 = vadd.f32 %v4335, 1.0
    %v4382 = vadd.f32 %v4337, 1.0
    %v4383 = vadd.f32 %v4339, 1.0
    %v4384 = vadd.f32 %v4341, 1.0
    %v4385 = vadd.f32 %v4343, 1.0
    %v4386 = vadd.f32 %v4345, 1.0
    %v4387 = vadd.f32 %v4347, 1.0
    %v4388 = vadd.f32 %v4349, 1.0
    %v4389 = vadd.f32 %v4351, 1.0
    %v4390 = vadd.f32 %v4353, 1.0
    %v4391 = vadd.f32 %v4355, 1.0
    %v4392 = vadd.f32 %v4357, 1.0
    %v4393 = vadd.f32 %v4359, 1.0
    %v4394 = vadd.f32 %v4361, 1.0
    %v4395 = vadd.f32 %v4363, 1.0
    %v4396 = vrcp.pop %v4364
    %v4397 = vmul.f32 1.0, %v4396
    %v4398 = vrcp.pop %v4365
    %v4399 = vmul.f32 1.0, %v4398
    %v4400 = vrcp.pop %v4366
    %v4401 = vmul.f32 1.0, %v4400
    %v4402 = vrcp.pop %v4367
    %v4403 = vmul.f32 1.0, %v4402
    %v4404 = vrcp.pop %v4368
    %v4405 = vmul.f32 1.0, %v4404
    %v4406 = vrcp.pop %v4369
    %v4407 = vmul.f32 1.0, %v4406
    %v4408 = vrcp.pop %v4370
    %v4409 = vmul.f32 1.0, %v4408
    %v4410 = vrcp.pop %v4371
    %v4411 = vmul.f32 1.0, %v4410
    %v4412 = vrcp.pop %v4372
    %v4413 = vmul.f32 1.0, %v4412
    %v4414 = vrcp.pop %v4373
    %v4415 = vmul.f32 1.0, %v4414
    %v4416 = vrcp.pop %v4374
    %v4417 = vmul.f32 1.0, %v4416
    %v4418 = vrcp.pop %v4375
    %v4419 = vmul.f32 1.0, %v4418
    %v4420 = vrcp.pop %v4376
    %v4421 = vmul.f32 1.0, %v4420
    %v4422 = vrcp.pop %v4377
    %v4423 = vmul.f32 1.0, %v4422
    %v4424 = vrcp.pop %v4378
    %v4425 = vmul.f32 1.0, %v4424
    %v4426 = vrcp.pop %v4379
    %v4427 = vmul.f32 1.0, %v4426
    %v4428 = vrcp.pop %v4380
    %v4429 = vmul.f32 1.0, %v4428
    %v4430 = vrcp.pop %v4381
    %v4431 = vmul.f32 1.0, %v4430
    %v4432 = vrcp.pop %v4382
    %v4433 = vmul.f32 1.0, %v4432
    %v4434 = vrcp.pop %v4383
    %v4435 = vmul.f32 1.0, %v4434
    %v4436 = vrcp.pop %v4384
    %v4437 = vmul.f32 1.0, %v4436
    %v4438 = vrcp.pop %v4385
    %v4439 = vmul.f32 1.0, %v4438
    %v4440 = vrcp.pop %v4386
    %v4441 = vmul.f32 1.0, %v4440
    %v4442 = vrcp.pop %v4387
    %v4443 = vmul.f32 1.0, %v4442
    %v4444 = vrcp.pop %v4388
    %v4445 = vmul.f32 1.0, %v4444
    %v4446 = vrcp.pop %v4389
    %v4447 = vmul.f32 1.0, %v4446
    %v4448 = vrcp.pop %v4390
    %v4449 = vmul.f32 1.0, %v4448
    %v4450 = vrcp.pop %v4391
    %v4451 = vmul.f32 1.0, %v4450
    %v4452 = vrcp.pop %v4392
    %v4453 = vmul.f32 1.0, %v4452
    %v4454 = vrcp.pop %v4393
    %v4455 = vmul.f32 1.0, %v4454
    %v4456 = vrcp.pop %v4394
    %v4457 = vmul.f32 1.0, %v4456
    %v4458 = vrcp.pop %v4395
    %v4459 = vmul.f32 1.0, %v4458
    %v4460 = vmul.f32 %v4077, %v4397
    %v4461 = vmul.f32 %v4079, %v4399
    %v4462 = vmul.f32 %v4081, %v4401
    %v4463 = vmul.f32 %v4083, %v4403
    %v4464 = vmul.f32 %v4087, %v4405
    %v4465 = vmul.f32 %v4089, %v4407
    %v4466 = vmul.f32 %v4091, %v4409
    %v4467 = vmul.f32 %v4093, %v4411
    %v4468 = vmul.f32 %v4097, %v4413
    %v4469 = vmul.f32 %v4099, %v4415
    %v4470 = vmul.f32 %v4101, %v4417
    %v4471 = vmul.f32 %v4103, %v4419
    %v4472 = vmul.f32 %v4107, %v4421
    %v4473 = vmul.f32 %v4109, %v4423
    %v4474 = vmul.f32 %v4111, %v4425
    %v4475 = vmul.f32 %v4113, %v4427
    %v4476 = vmul.f32 %v4117, %v4429
    %v4477 = vmul.f32 %v4119, %v4431
    %v4478 = vmul.f32 %v4121, %v4433
    %v4479 = vmul.f32 %v4123, %v4435
    %v4480 = vmul.f32 %v4127, %v4437
    %v4481 = vmul.f32 %v4129, %v4439
    %v4482 = vmul.f32 %v4131, %v4441
    %v4483 = vmul.f32 %v4133, %v4443
    %v4484 = vmul.f32 %v4137, %v4445
    %v4485 = vmul.f32 %v4139, %v4447
    %v4486 = vmul.f32 %v4141, %v4449
    %v4487 = vmul.f32 %v4143, %v4451
    %v4488 = vmul.f32 %v4147, %v4453
    %v4489 = vmul.f32 %v4149, %v4455
    %v4490 = vmul.f32 %v4151, %v4457
    %v4491 = vmul.f32 %v4153, %v4459
    %v4492 = vmul.f32 %v4460, %v4190
    %v4493 = vmul.f32 %v4461, %v4192
    %v4494 = vmul.f32 %v4462, %v4194
    %v4495 = vmul.f32 %v4463, %v4196
    %v4496 = vmul.f32 %v4464, %v4200
    %v4497 = vmul.f32 %v4465, %v4202
    %v4498 = vmul.f32 %v4466, %v4204
    %v4499 = vmul.f32 %v4467, %v4206
    %v4500 = vmul.f32 %v4468, %v4210
    %v4501 = vmul.f32 %v4469, %v4212
    %v4502 = vmul.f32 %v4470, %v4214
    %v4503 = vmul.f32 %v4471, %v4216
    %v4504 = vmul.f32 %v4472, %v4220
    %v4505 = vmul.f32 %v4473, %v4222
    %v4506 = vmul.f32 %v4474, %v4224
    %v4507 = vmul.f32 %v4475, %v4226
    %v4508 = vmul.f32 %v4476, %v4230
    %v4509 = vmul.f32 %v4477, %v4232
    %v4510 = vmul.f32 %v4478, %v4234
    %v4511 = vmul.f32 %v4479, %v4236
    %v4512 = vmul.f32 %v4480, %v4240
    %v4513 = vmul.f32 %v4481, %v4242
    %v4514 = vmul.f32 %v4482, %v4244
    %v4515 = vmul.f32 %v4483, %v4246
    %v4516 = vmul.f32 %v4484, %v4250
    %v4517 = vmul.f32 %v4485, %v4252
    %v4518 = vmul.f32 %v4486, %v4254
    %v4519 = vmul.f32 %v4487, %v4256
    %v4520 = vmul.f32 %v4488, %v4260
    %v4521 = vmul.f32 %v4489, %v4262
    %v4522 = vmul.f32 %v4490, %v4264
    %v4523 = vmul.f32 %v4491, %v4266
    %s4524 = smul.u32 4, 32
    %s4525 = smul.u32 %s4524, 1
    %s4526 = sshll.u32 %s4525, 4
    %4527 = dma.done %s328, %s4526
    %v4528 = vpack.c.bf16 %v4494, %v4492
    %v4529 = vpack.c.bf16 %v4495, %v4493
    %v4530 = vpack.c.bf16 %v4498, %v4496
    %v4531 = vpack.c.bf16 %v4499, %v4497
    %v4532 = vpack.c.bf16 %v4502, %v4500
    %v4533 = vpack.c.bf16 %v4503, %v4501
    %v4534 = vpack.c.bf16 %v4506, %v4504
    %v4535 = vpack.c.bf16 %v4507, %v4505
    %v4536 = vpack.c.bf16 %v4510, %v4508
    %v4537 = vpack.c.bf16 %v4511, %v4509
    %v4538 = vpack.c.bf16 %v4514, %v4512
    %v4539 = vpack.c.bf16 %v4515, %v4513
    %v4540 = vpack.c.bf16 %v4518, %v4516
    %v4541 = vpack.c.bf16 %v4519, %v4517
    %v4542 = vpack.c.bf16 %v4522, %v4520
    %v4543 = vpack.c.bf16 %v4523, %v4521
    %v4544 = vld [vmem:[#allocation3] sm:$0xff]
    %v4545 = vld [vmem:[#allocation3 + $0x8] sm:$0xff]
    %v4546 = vld [vmem:[#allocation3 + $0x10] sm:$0xff]
    %v4547 = vld [vmem:[#allocation3 + $0x18] sm:$0xff]
    %v4548 = vld [vmem:[#allocation3 + $0x20] sm:$0xff]
    %v4549 = vld [vmem:[#allocation3 + $0x28] sm:$0xff]
    %v4550 = vld [vmem:[#allocation3 + $0x30] sm:$0xff]
    %v4551 = vld [vmem:[#allocation3 + $0x38] sm:$0xff]
    %v4552 = vld [vmem:[#allocation3 + $0x40] sm:$0xff]
    %v4553 = vld [vmem:[#allocation3 + $0x48] sm:$0xff]
    %v4554 = vld [vmem:[#allocation3 + $0x50] sm:$0xff]
    %v4555 = vld [vmem:[#allocation3 + $0x58] sm:$0xff]
    %v4556 = vld [vmem:[#allocation3 + $0x60] sm:$0xff]
    %v4557 = vld [vmem:[#allocation3 + $0x68] sm:$0xff]
    %v4558 = vld [vmem:[#allocation3 + $0x70] sm:$0xff]
    %v4559 = vld [vmem:[#allocation3 + $0x78] sm:$0xff]
    %4560 = vmatprep.subr.bf16.mxu0 0
    %4561 = vmatpush1.bf16.msra.mxu0 %v4544
    %4562 = vmatprep.subr.bf16.mxu0 0
    %4563 = vmatpush1.bf16.msra.mxu0 %v4545
    %4564 = vmatprep.subr.bf16.mxu0 0
    %4565 = vmatpush1.bf16.msra.mxu0 %v4546
    %4566 = vmatprep.subr.bf16.mxu0 0
    %4567 = vmatpush1.bf16.msra.mxu0 %v4547
    %4568 = vmatprep.subr.bf16.mxu0 0
    %4569 = vmatpush1.bf16.msra.mxu0 %v4548
    %4570 = vmatprep.subr.bf16.mxu0 0
    %4571 = vmatpush1.bf16.msra.mxu0 %v4549
    %4572 = vmatprep.subr.bf16.mxu0 0
    %4573 = vmatpush1.bf16.msra.mxu0 %v4550
    %4574 = vmatprep.subr.bf16.mxu0 0
    %4575 = vmatpush1.bf16.msra.mxu0 %v4551
    %4576 = vmatprep.subr.bf16.mxu0 0
    %4577 = vmatpush1.bf16.msra.mxu0 %v4552
    %4578 = vmatprep.subr.bf16.mxu0 0
    %4579 = vmatpush1.bf16.msra.mxu0 %v4553
    %4580 = vmatprep.subr.bf16.mxu0 0
    %4581 = vmatpush1.bf16.msra.mxu0 %v4554
    %4582 = vmatprep.subr.bf16.mxu0 0
    %4583 = vmatpush1.bf16.msra.mxu0 %v4555
    %4584 = vmatprep.subr.bf16.mxu0 0
    %4585 = vmatpush1.bf16.msra.mxu0 %v4556
    %4586 = vmatprep.subr.bf16.mxu0 0
    %4587 = vmatpush1.bf16.msra.mxu0 %v4557
    %4588 = vmatprep.subr.bf16.mxu0 0
    %4589 = vmatpush1.bf16.msra.mxu0 %v4558
    %4590 = vmatprep.subr.bf16.mxu0 0
    %4591 = vmatpush1.bf16.msra.mxu0 %v4559
    %4592 = vmatprep.mubr.bf16.mxu0 %v4529
    %4593 = vmatmul.mubr.bf16.gmra.mrb[0].mxu0 %v4528
    %v4594 = vpop.f32.mrb[0].mxu0
    %v4595 = vadd.f32 0.0, %v4594
    %v4596 = vpop.f32.mrb[0].mxu0
    %v4597 = vpop.f32.mrb[0].mxu0
    %v4598 = vadd.f32 0.0, %v4597
    %v4599 = vpop.f32.mrb[0].mxu0
    %4600 = vmatprep.mubr.bf16.mxu0 %v4531
    %4601 = vmatmul.mubr.bf16.gmra.mrb[0].mxu0 %v4530
    %v4602 = vpop.f32.mrb[0].mxu0
    %v4603 = vadd.f32 0.0, %v4602
    %v4604 = vpop.f32.mrb[0].mxu0
    %v4605 = vpop.f32.mrb[0].mxu0
    %v4606 = vadd.f32 0.0, %v4605
    %v4607 = vpop.f32.mrb[0].mxu0
    %4608 = vmatprep.mubr.bf16.mxu0 %v4533
    %4609 = vmatmul.mubr.bf16.gmra.mrb[0].mxu0 %v4532
    %v4610 = vpop.f32.mrb[0].mxu0
    %v4611 = vadd.f32 0.0, %v4610
    %v4612 = vpop.f32.mrb[0].mxu0
    %v4613 = vpop.f32.mrb[0].mxu0
    %v4614 = vadd.f32 0.0, %v4613
    %v4615 = vpop.f32.mrb[0].mxu0
    %4616 = vmatprep.mubr.bf16.mxu0 %v4535
    %4617 = vmatmul.mubr.bf16.gmra.mrb[0].mxu0 %v4534
    %v4618 = vpop.f32.mrb[0].mxu0
    %v4619 = vadd.f32 0.0, %v4618
    %v4620 = vpop.f32.mrb[0].mxu0
    %v4621 = vpop.f32.mrb[0].mxu0
    %v4622 = vadd.f32 0.0, %v4621
    %v4623 = vpop.f32.mrb[0].mxu0
    %4624 = vmatprep.mubr.bf16.mxu0 %v4537
    %4625 = vmatmul.mubr.bf16.gmra.mrb[0].mxu0 %v4536
    %v4626 = vpop.f32.mrb[0].mxu0
    %v4627 = vadd.f32 0.0, %v4626
    %v4628 = vpop.f32.mrb[0].mxu0
    %v4629 = vpop.f32.mrb[0].mxu0
    %v4630 = vadd.f32 0.0, %v4629
    %v4631 = vpop.f32.mrb[0].mxu0
    %4632 = vmatprep.mubr.bf16.mxu0 %v4539
    %4633 = vmatmul.mubr.bf16.gmra.mrb[0].mxu0 %v4538
    %v4634 = vpop.f32.mrb[0].mxu0
    %v4635 = vadd.f32 0.0, %v4634
    %v4636 = vpop.f32.mrb[0].mxu0
    %v4637 = vpop.f32.mrb[0].mxu0
    %v4638 = vadd.f32 0.0, %v4637
    %v4639 = vpop.f32.mrb[0].mxu0
    %4640 = vmatprep.mubr.bf16.mxu0 %v4541
    %4641 = vmatmul.mubr.bf16.gmra.mrb[0].mxu0 %v4540
    %v4642 = vpop.f32.mrb[0].mxu0
    %v4643 = vadd.f32 0.0, %v4642
    %v4644 = vpop.f32.mrb[0].mxu0
    %v4645 = vpop.f32.mrb[0].mxu0
    %v4646 = vadd.f32 0.0, %v4645
    %v4647 = vpop.f32.mrb[0].mxu0
    %4648 = vmatprep.mubr.bf16.mxu0 %v4543
    %4649 = vmatmul.mubr.bf16.gmra.mrb[0].mxu0 %v4542
    %v4650 = vpop.f32.mrb[0].mxu0
    %v4651 = vadd.f32 0.0, %v4650
    %v4652 = vpop.f32.mrb[0].mxu0
    %v4653 = vpop.f32.mrb[0].mxu0
    %v4654 = vadd.f32 0.0, %v4653
    %v4655 = vpop.f32.mrb[0].mxu0
    %4656 = vdwg.mxu0
    %v4657 = vadd.f32 %v3849, %v4595
    %v4658 = vadd.f32 %v3850, %v4598
    %v4659 = vadd.f32 %v3851, %v4603
    %v4660 = vadd.f32 %v3852, %v4606
    %v4661 = vadd.f32 %v3853, %v4611
    %v4662 = vadd.f32 %v3854, %v4614
    %v4663 = vadd.f32 %v3855, %v4619
    %v4664 = vadd.f32 %v3856, %v4622
    %v4665 = vadd.f32 %v3857, %v4627
    %v4666 = vadd.f32 %v3858, %v4630
    %v4667 = vadd.f32 %v3859, %v4635
    %v4668 = vadd.f32 %v3860, %v4638
    %v4669 = vadd.f32 %v3861, %v4643
    %v4670 = vadd.f32 %v3862, %v4646
    %v4671 = vadd.f32 %v3863, %v4651
    %v4672 = vadd.f32 %v3864, %v4654
    %4673 = vst [vmem:[#allocation5] sm:$0xff] %v4657
    %4674 = vst [vmem:[#allocation5 + $0x8] sm:$0xff] %v4658
    %4675 = vst [vmem:[#allocation5 + $0x10] sm:$0xff] %v4659
    %4676 = vst [vmem:[#allocation5 + $0x18] sm:$0xff] %v4660
    %4677 = vst [vmem:[#allocation5 + $0x20] sm:$0xff] %v4661
    %4678 = vst [vmem:[#allocation5 + $0x28] sm:$0xff] %v4662
    %4679 = vst [vmem:[#allocation5 + $0x30] sm:$0xff] %v4663
    %4680 = vst [vmem:[#allocation5 + $0x38] sm:$0xff] %v4664
    %4681 = vst [vmem:[#allocation5 + $0x40] sm:$0xff] %v4665
    %4682 = vst [vmem:[#allocation5 + $0x48] sm:$0xff] %v4666
    %4683 = vst [vmem:[#allocation5 + $0x50] sm:$0xff] %v4667
    %4684 = vst [vmem:[#allocation5 + $0x58] sm:$0xff] %v4668
    %4685 = vst [vmem:[#allocation5 + $0x60] sm:$0xff] %v4669
    %4686 = vst [vmem:[#allocation5 + $0x68] sm:$0xff] %v4670
    %4687 = vst [vmem:[#allocation5 + $0x70] sm:$0xff] %v4671
    %4688 = vst [vmem:[#allocation5 + $0x78] sm:$0xff] %v4672
    // Predicated region
    $region93: #{llama_decoder_layer.1} parent=1 // pred_check
      _
    $region94: #{llama_decoder_layer.1} parent=1 // pred_check_branch
      %4690 = sbr.rel (0) target = $region96
    $region95: #{llama_decoder_layer.1} parent=1 // pred_region
      %s4692 = ssub.s32 2048, 2048
      %4693 = vsyncadd [#allocation6], %s4692
      %s4694 = sshll.u32 [#allocation5], 4
      %s4695 = int_to_ptr.vmem [resolvable:$true] %s4694
      %4700 = dma.vmem_to_hbm [thread:$0]  %s4695, 2048, %s7, [#allocation6], 128, 128, 8
    $region96: #{llama_decoder_layer.1} parent=1 // pred_fallthru
      _
    // Predicated region
    $region97: #{llama_decoder_layer.1} parent=1 // pred_check
      _
    $region98: #{llama_decoder_layer.1} parent=1 // pred_check_branch
      %4702 = sbr.rel (0) target = $region100
    $region99: #{llama_decoder_layer.1} parent=1 // pred_region
      %4703 = dma.done [#allocation6], 2048
    $region100: #{llama_decoder_layer.1} parent=1 // pred_fallthru
      _
    %4704 = vsyncpa [#allocation6], 1
  %4705 = vsyncmov [#allocation4]
  %s4706 = vpop.sfrf %4705
  %p4707 = scmp.eq.s32.totalorder %s4706, 0
  %p4708 = pneg %p4707
  %4710 = shalt.err (%p4708)
  %s4711 = scalar_lea.sflag [#allocation4], 1
  %4712 = vsyncmov %s4711
  %s4713 = vpop.sfrf %4712
  %p4714 = scmp.eq.s32.totalorder %s4713, 0
  %p4715 = pneg %p4714
  %4717 = shalt.err (%p4715)

</llo_original>
